<compile_context>
chip_gen: v7x
topology: tpu7x:2x2x1
jax: 0.10.0
libtpu: 0.0.40
codegen_flags: <defaults>
</compile_context>

<pallas_src>
import functools

import jax
import jax.numpy as jnp
from jax import lax
from jax.experimental import pallas as pl
from jax.experimental.pallas import tpu as pltpu

DIM = 384                       # hardcoded by the module (LayerNorm3d(384), MLPBlock(384, 1536))
NUM_HEADS = 8
HEAD_DIM = DIM // NUM_HEADS     # 48
HPAD = 128                      # per-head lane-padded width (one vreg lane-width)
CPAD = NUM_HEADS * HPAD         # 1024 — head-padded channel width
MLP_DIM = 4 * DIM               # 1536
EPS = 1e-6
SCALE = HEAD_DIM ** (-0.5)

VMEM_LIMIT = 32 * 1024 * 1024   # safe scoped-VMEM limit on v5e/v6e/v7x


def _pick_tile(n, candidates):
    """Largest candidate tile dividing n, else n itself (small/ragged inputs)."""
    for t in candidates:
        if n % t == 0:
            return t
    return n


def _pinned(shape):
    """BlockSpec for an operand held resident across the whole grid (weights/biases)."""
    return pl.BlockSpec(shape, lambda *_: (0,) * len(shape))


def _attn_exp_dtype():
    """bf16 exp on v6e/v7x (EUP bf16 path); f32 everywhere else (incl. v5e)."""
    try:
        kind = jax.devices()[0].device_kind.lower()
    except Exception:
        return jnp.float32
    if "v6" in kind or "v7" in kind or "7x" in kind:
        return jnp.bfloat16
    return jnp.float32


# -----------------------------------------------------------------------------
# Weight preparation (hoisted out of the forward path; run once, reuse)
# -----------------------------------------------------------------------------
def _pad_head_cols(a):
    """(..., 3*DIM) -> (..., 3*NUM_HEADS*HPAD): pad each head's 48 cols to 128."""
    lead = a.shape[:-1]
    a = a.reshape(lead + (3, NUM_HEADS, HEAD_DIM))
    a = jnp.pad(a, [(0, 0)] * (a.ndim - 1) + [(0, HPAD - HEAD_DIM)])
    return a.reshape(lead + (3 * CPAD,))


def _pad_head_rows(w):
    """(DIM, DIM) -> (NUM_HEADS*HPAD, DIM): zero-pad proj rows to the padded head layout."""
    w = w.reshape(NUM_HEADS, HEAD_DIM, DIM)
    w = jnp.pad(w, [(0, 0), (0, HPAD - HEAD_DIM), (0, 0)])
    return w.reshape(CPAD, DIM)


def prepare_params(params):
    """One-time prep: fold attention scale into q, head-pad qkv/proj, cast to bf16."""
    qscale = jnp.concatenate([jnp.full((DIM,), SCALE, jnp.float32),
                              jnp.ones((2 * DIM,), jnp.float32)])
    qkv_w = params["qkv_w"] * qscale[None, :]
    qkv_b = params["qkv_b"] * qscale
    return {
        "norm1_w": params["norm1_w"].reshape(1, DIM),
        "norm1_b": params["norm1_b"].reshape(1, DIM),
        "qkv_w": _pad_head_cols(qkv_w).astype(jnp.bfloat16),        # (DIM, 3*CPAD)
        "qkv_b": _pad_head_cols(qkv_b).reshape(1, 3 * CPAD),        # f32
        "proj_w": _pad_head_rows(params["proj_w"]).astype(jnp.bfloat16),  # (CPAD, DIM)
        "proj_b": params["proj_b"].reshape(1, DIM),
        "norm2_w": params["norm2_w"].reshape(1, DIM),
        "norm2_b": params["norm2_b"].reshape(1, DIM),
        "lin1_w": params["lin1_w"].astype(jnp.bfloat16),
        "lin1_b": params["lin1_b"].reshape(1, MLP_DIM),
        "lin2_w": params["lin2_w"].astype(jnp.bfloat16),
        "lin2_b": params["lin2_b"].reshape(1, DIM),
    }


# -----------------------------------------------------------------------------
# Kernel 1: LayerNorm3d(norm1) + qkv projection (head-padded output layout)
# -----------------------------------------------------------------------------
def _ln_qkv_kernel(x_ref, g_ref, b_ref, w_ref, qb_ref, o_ref):
    x = x_ref[...].astype(jnp.float32)                          # (TT, C)
    u = jnp.mean(x, axis=-1, keepdims=True)
    xc = x - u
    var = jnp.mean(xc * xc, axis=-1, keepdims=True)
    xn = xc * lax.rsqrt(var + EPS)
    xn = xn * g_ref[...] + b_ref[...]                           # f32 LN output
    y = jnp.dot(xn.astype(jnp.bfloat16), w_ref[...],
                preferred_element_type=jnp.float32)             # (TT, 3*CPAD) f32 acc
    o_ref[...] = (y + qb_ref[...]).astype(o_ref.dtype)


def ln_qkv(x2d, gamma1, beta1, w_pad_bf16, bias_pad):
    T, C = x2d.shape
    C3P = w_pad_bf16.shape[1]
    tt = _pick_tile(T, (512, 256, 128, 64, 32, 16, 8))
    return pl.pallas_call(
        _ln_qkv_kernel,
        out_shape=jax.ShapeDtypeStruct((T, C3P), jnp.bfloat16),
        grid=(T // tt,),
        in_specs=[
            pl.BlockSpec((tt, C), lambda i: (i, 0)),
            _pinned((1, C)), _pinned((1, C)),
            _pinned((C, C3P)), _pinned((1, C3P)),
        ],
        out_specs=pl.BlockSpec((tt, C3P), lambda i: (i, 0)),
        compiler_params=pltpu.CompilerParams(
            dimension_semantics=("parallel",), vmem_limit_bytes=VMEM_LIMIT),
    )(x2d, gamma1, beta1, w_pad_bf16, bias_pad)


# -----------------------------------------------------------------------------
# Kernel 2: multi-head attention, all heads of one batch element per grid step
# -----------------------------------------------------------------------------
def _attn_kernel(qkv_ref, o_ref, *, exp_dtype):
    # qkv_ref: (1, N, 3*CPAD) bf16 — head-padded, resident across q tiles
    # o_ref:   (1, tq, CPAD)  bf16 — head-padded lane-dense output slab
    tq = o_ref.shape[1]
    q_start = pl.multiple_of(pl.program_id(1) * tq, tq)

    for h in range(NUM_HEADS):                                  # static, fully unrolled
        c0 = h * HPAD                                           # 128-lane aligned offsets
        q_h = qkv_ref[0, pl.ds(q_start, tq), c0:c0 + HPAD]      # (tq, 128) bf16 (scale folded)
        k_h = qkv_ref[0, :, CPAD + c0:CPAD + c0 + HPAD]         # (N,  128) bf16
        v_h = qkv_ref[0, :, 2 * CPAD + c0:2 * CPAD + c0 + HPAD] # (N,  128) bf16
        # scores = q_h @ k_h^T (pad columns are zero in both -> identical result)
        s = lax.dot_general(q_h, k_h, (((1,), (1,)), ((), ())),
                            preferred_element_type=jnp.float32)  # (tq, N) f32
        m = jnp.max(s, axis=-1, keepdims=True)
        p = jnp.exp((s - m).astype(exp_dtype))                   # unnormalized probs
        row_sum = jnp.sum(p.astype(jnp.float32), axis=-1, keepdims=True)
        o_un = jnp.dot(p.astype(jnp.bfloat16), v_h,
                       preferred_element_type=jnp.float32)       # (tq, 128) f32
        # Normalize AFTER the PV matmul (tq x 128 multiply instead of tq x N),
        # then store this head's 128-lane slot directly (no concat, short live range).
        o_ref[0, :, c0:c0 + HPAD] = (
            o_un * pl.reciprocal(row_sum, approx=True)).astype(o_ref.dtype)


def attention(qkv_bnc, exp_dtype):
    B, N, C3P = qkv_bnc.shape
    tq = _pick_tile(N, (256, 128, 64, 32, 16, 8))
    kern = functools.partial(_attn_kernel, exp_dtype=exp_dtype)
    return pl.pallas_call(
        kern,
        out_shape=jax.ShapeDtypeStruct((B, N, CPAD), jnp.bfloat16),
        grid=(B, N // tq),
        in_specs=[pl.BlockSpec((1, N, C3P), lambda b, qi: (b, 0, 0))],
        out_specs=pl.BlockSpec((1, tq, CPAD), lambda b, qi: (b, qi, 0)),
        # Shard the batch axis across v7x's two TensorCores (q-tile axis kept
        # "arbitrary" so both cores never duplicate the same resident qkv block).
        compiler_params=pltpu.CompilerParams(
            dimension_semantics=("parallel", "arbitrary"),
            vmem_limit_bytes=VMEM_LIMIT),
    )(qkv_bnc)


# -----------------------------------------------------------------------------
# Kernel 3: proj (head-padded rows) + residual + LayerNorm3d(norm2) + MLP
# -----------------------------------------------------------------------------
def _proj_res_ln_mlp_kernel(o_ref, sc_ref, pw_ref, pb_ref, g2_ref, be2_ref,
                            w1_ref, b1_ref, w2_ref, b2_ref, out_ref):
    # output projection (contraction over the head-padded CPAD dim) + residual (f32)
    x2 = jnp.dot(o_ref[...], pw_ref[...], preferred_element_type=jnp.float32)
    x2 = x2 + pb_ref[...] + sc_ref[...].astype(jnp.float32)     # (TT, C) f32
    # LayerNorm3d(norm2) over channels
    u = jnp.mean(x2, axis=-1, keepdims=True)
    xc = x2 - u
    var = jnp.mean(xc * xc, axis=-1, keepdims=True)
    x3 = xc * lax.rsqrt(var + EPS)
    x3 = x3 * g2_ref[...] + be2_ref[...]
    # MLP: lin2(GELU(lin1(x3))) — module returns the MLP output directly
    h = jnp.dot(x3.astype(jnp.bfloat16), w1_ref[...],
                preferred_element_type=jnp.float32) + b1_ref[...]
    h = jax.nn.gelu(h, approximate=False)                       # exact GELU (nn.GELU default)
    y = jnp.dot(h.astype(jnp.bfloat16), w2_ref[...],
                preferred_element_type=jnp.float32)
    out_ref[...] = (y + b2_ref[...]).astype(out_ref.dtype)


def proj_res_ln_mlp(o2d, shortcut2d, pw, pb, g2, be2, w1, b1, w2, b2):
    T, C = shortcut2d.shape
    CP = pw.shape[0]
    Hn = w1.shape[1]
    tt = _pick_tile(T, (256, 128, 64, 32, 16, 8))   # 256 cap keeps v5e's scoped VMEM happy
    return pl.pallas_call(
        _proj_res_ln_mlp_kernel,
        out_shape=jax.ShapeDtypeStruct((T, C), shortcut2d.dtype),
        grid=(T // tt,),
        in_specs=[
            pl.BlockSpec((tt, CP), lambda i: (i, 0)),   # attention output (bf16, head-padded)
            pl.BlockSpec((tt, C), lambda i: (i, 0)),    # shortcut (f32)
            _pinned((CP, C)), _pinned((1, C)),          # proj (zero-padded rows)
            _pinned((1, C)), _pinned((1, C)),           # norm2
            _pinned((C, Hn)), _pinned((1, Hn)),         # lin1
            _pinned((Hn, C)), _pinned((1, C)),          # lin2
        ],
        out_specs=pl.BlockSpec((tt, C), lambda i: (i, 0)),
        compiler_params=pltpu.CompilerParams(
            dimension_semantics=("parallel",), vmem_limit_bytes=VMEM_LIMIT),
    )(o2d, shortcut2d, pw, pb, g2, be2, w1, b1, w2, b2)


# -----------------------------------------------------------------------------
# Full forward pass (channels-last 5D input, matching the module's working layout)
# -----------------------------------------------------------------------------
def attention_block_forward(x, prep):
    B, D, H, W, C = x.shape
    assert C == DIM
    N = D * H * W
    T = B * N
    x2d = x.reshape(T, C)                                   # tokens (also the shortcut)

    # 1) norm1 + qkv projection (head-padded lane-dense (T, 3*CPAD) bf16 output)
    qkv = ln_qkv(x2d, prep["norm1_w"], prep["norm1_b"], prep["qkv_w"], prep["qkv_b"])

    # 2) attention, all heads per batch element, head-padded (B, N, CPAD) output
    o = attention(qkv.reshape(B, N, 3 * CPAD), _attn_exp_dtype())

    # 3) proj (padded rows) + residual + norm2 + MLP
    out = proj_res_ln_mlp(
        o.reshape(T, CPAD), x2d,
        prep["proj_w"], prep["proj_b"],
        prep["norm2_w"], prep["norm2_b"],
        prep["lin1_w"], prep["lin1_b"], prep["lin2_w"], prep["lin2_b"])
    return out.reshape(B, D, H, W, C)


# -----------------------------------------------------------------------------
# Pure-JAX f32 reference for validation
# -----------------------------------------------------------------------------
def _ref_ln(x2d, w, b):
    u = jnp.mean(x2d, axis=-1, keepdims=True)
    xc = x2d - u
    s = jnp.mean(xc * xc, axis=-1, keepdims=True)
    return (xc / jnp.sqrt(s + EPS)) * w + b


def reference_forward(x, params):
    B, D, H, W, C = x.shape
    N = D * H * W
    T = B * N
    shortcut = x.reshape(T, C)
    xn = _ref_ln(shortcut, params["norm1_w"], params["norm1_b"])
    qkv = xn @ params["qkv_w"] + params["qkv_b"]
    qkv = qkv.reshape(B, N, 3, NUM_HEADS, HEAD_DIM)
    qkv = jnp.transpose(qkv, (2, 0, 3, 1, 4)).reshape(3, B * NUM_HEADS, N, HEAD_DIM)
    q, k, v = qkv[0], qkv[1], qkv[2]
    attn = jnp.einsum("hqd,hkd->hqk", q * SCALE, k)
    attn = jax.nn.softmax(attn, axis=-1)
    o = jnp.einsum("hqk,hkd->hqd", attn, v)
    o = o.reshape(B, NUM_HEADS, N, HEAD_DIM).transpose(0, 2, 1, 3).reshape(T, C)
    x2 = o @ params["proj_w"] + params["proj_b"] + shortcut
    x3 = _ref_ln(x2, params["norm2_w"], params["norm2_b"])
    h = jax.nn.gelu(x3 @ params["lin1_w"] + params["lin1_b"], approximate=False)
    out = h @ params["lin2_w"] + params["lin2_b"]
    return out.reshape(B, D, H, W, C)


def init_params(key):
    ks = jax.random.split(key, 8)
    s = 0.02
    return {
        "norm1_w": jnp.ones((DIM,), jnp.float32),
        "norm1_b": jnp.zeros((DIM,), jnp.float32),
        "norm2_w": jnp.ones((DIM,), jnp.float32),
        "norm2_b": jnp.zeros((DIM,), jnp.float32),
        "qkv_w": s * jax.random.normal(ks[0], (DIM, 3 * DIM), jnp.float32),
        "qkv_b": s * jax.random.normal(ks[1], (3 * DIM,), jnp.float32),
        "proj_w": s * jax.random.normal(ks[2], (DIM, DIM), jnp.float32),
        "proj_b": s * jax.random.normal(ks[3], (DIM,), jnp.float32),
        "lin1_w": s * jax.random.normal(ks[4], (DIM, MLP_DIM), jnp.float32),
        "lin1_b": s * jax.random.normal(ks[5], (MLP_DIM,), jnp.float32),
        "lin2_w": s * jax.random.normal(ks[6], (MLP_DIM, DIM), jnp.float32),
        "lin2_b": s * jax.random.normal(ks[7], (DIM,), jnp.float32),
    }


if __name__ == "__main__":
    key = jax.random.PRNGKey(0)
    k_p, k_x1, k_x2 = jax.random.split(key, 3)
    params = init_params(k_p)
    prep = prepare_params(params)        # one-time weight prep (hoisted out of forward)

    # Small test: B=2, D=H=W=2 (N=8 tokens/sample), C=384 (required by module).
    x = jax.random.normal(k_x1, (2, 2, 2, 2, DIM), jnp.float32)
    out = jax.block_until_ready(attention_block_forward(x, prep))
    ref = reference_forward(x, params)
    assert out.shape == x.shape
    # bf16 MXU operands / bf16 exp / approx reciprocal vs pure-f32 reference: relaxed tolerance.
    assert jnp.allclose(out, ref, rtol=2e-2, atol=2e-2), "mismatch vs reference (small)"

    # Tiled-path test: B=2, D=H=W=8 -> N=512 (2 q-tiles of 256), T=1024 (4 token tiles).
    x2 = jax.random.normal(k_x2, (2, 8, 8, 8, DIM), jnp.float32)
    out2 = jax.block_until_ready(attention_block_forward(x2, prep))
    ref2 = reference_forward(x2, params)
    assert out2.shape == x2.shape
    assert jnp.allclose(out2, ref2, rtol=2e-2, atol=2e-2), "mismatch vs reference (tiled)"

    print("KERNEL_OK")
</pallas_src>

<mosaic_0001>
module attributes {stable_mosaic.version = 11 : i64} {
  func.func @_ln_qkv_kernel(%arg0: i32, %arg1: memref<16x384xf32, #tpu.memory_space<vmem>>, %arg2: memref<1x384xf32, #tpu.memory_space<vmem>>, %arg3: memref<1x384xf32, #tpu.memory_space<vmem>>, %arg4: memref<384x3072xbf16, #tpu.memory_space<vmem>>, %arg5: memref<1x3072xf32, #tpu.memory_space<vmem>>, %arg6: memref<16x3072xbf16, #tpu.memory_space<vmem>>) attributes {dimension_semantics = [#tpu.dimension_semantics<parallel>], iteration_bounds = array<i64: 1>, scalar_prefetch = 0 : i64, scratch_operands = 0 : i64, tpu.core_type = #tpu.core_type<tc>, window_params = [{transform_indices = @transform_0, window_bounds = array<i64: 16, 384>}, {pipeline_mode = #tpu.pipeline_mode<synchronous>, transform_indices = @transform_1, window_bounds = array<i64: 1, 384>}, {pipeline_mode = #tpu.pipeline_mode<synchronous>, transform_indices = @transform_2, window_bounds = array<i64: 1, 384>}, {pipeline_mode = #tpu.pipeline_mode<synchronous>, transform_indices = @transform_3, window_bounds = array<i64: 384, 3072>}, {pipeline_mode = #tpu.pipeline_mode<synchronous>, transform_indices = @transform_4, window_bounds = array<i64: 1, 3072>}, {transform_indices = @transform_5, window_bounds = array<i64: 16, 3072>}]} {
    %c0 = arith.constant 0 : index
    %c0_0 = arith.constant 0 : index
    %0 = vector.load %arg1[%c0, %c0_0] : memref<16x384xf32, #tpu.memory_space<vmem>>, vector<16x384xf32>
    %cst = arith.constant dense<0.000000e+00> : vector<16xf32>
    %1 = vector.multi_reduction <add>, %0, %cst [1] : vector<16x384xf32> to vector<16xf32>
    %2 = vector.shape_cast %1 : vector<16xf32> to vector<16x1xf32>
    %cst_1 = arith.constant 3.840000e+02 : f32
    %3 = vector.broadcast %cst_1 : f32 to vector<16x1xf32>
    %4 = arith.divf %2, %3 : vector<16x1xf32>
    %5 = vector.broadcast %4 : vector<16x1xf32> to vector<16x384xf32>
    %6 = arith.subf %0, %5 : vector<16x384xf32>
    %7 = arith.mulf %6, %6 : vector<16x384xf32>
    %cst_2 = arith.constant dense<0.000000e+00> : vector<16xf32>
    %8 = vector.multi_reduction <add>, %7, %cst_2 [1] : vector<16x384xf32> to vector<16xf32>
    %9 = vector.shape_cast %8 : vector<16xf32> to vector<16x1xf32>
    %cst_3 = arith.constant 3.840000e+02 : f32
    %10 = vector.broadcast %cst_3 : f32 to vector<16x1xf32>
    %11 = arith.divf %9, %10 : vector<16x1xf32>
    %cst_4 = arith.constant 9.99999997E-7 : f32
    %12 = vector.broadcast %cst_4 : f32 to vector<16x1xf32>
    %13 = arith.addf %11, %12 : vector<16x1xf32>
    %14 = math.rsqrt %13 : vector<16x1xf32>
    %15 = vector.broadcast %14 : vector<16x1xf32> to vector<16x384xf32>
    %16 = arith.mulf %6, %15 : vector<16x384xf32>
    %c0_5 = arith.constant 0 : index
    %c0_6 = arith.constant 0 : index
    %17 = vector.load %arg2[%c0_5, %c0_6] : memref<1x384xf32, #tpu.memory_space<vmem>>, vector<1x384xf32>
    %18 = vector.broadcast %17 : vector<1x384xf32> to vector<16x384xf32>
    %19 = arith.mulf %16, %18 : vector<16x384xf32>
    %c0_7 = arith.constant 0 : index
    %c0_8 = arith.constant 0 : index
    %20 = vector.load %arg3[%c0_7, %c0_8] : memref<1x384xf32, #tpu.memory_space<vmem>>, vector<1x384xf32>
    %21 = vector.broadcast %20 : vector<1x384xf32> to vector<16x384xf32>
    %22 = arith.addf %19, %21 : vector<16x384xf32>
    %23 = arith.truncf %22 : vector<16x384xf32> to vector<16x384xbf16>
    %c0_9 = arith.constant 0 : index
    %c0_10 = arith.constant 0 : index
    %24 = vector.load %arg4[%c0_9, %c0_10] : memref<384x3072xbf16, #tpu.memory_space<vmem>>, vector<384x3072xbf16>
    %cst_11 = arith.constant dense<0.000000e+00> : vector<16x3072xf32>
    %25 = tpu.matmul %23, %24, %cst_11 {dimension_numbers = #tpu.dot_dimension_numbers<[1], [0], [0], [1], [0, 0, 1, 1], [], []>} : vector<16x384xbf16>, vector<384x3072xbf16>, vector<16x3072xf32> -> vector<16x3072xf32>
    %c0_12 = arith.constant 0 : index
    %c0_13 = arith.constant 0 : index
    %26 = vector.load %arg5[%c0_12, %c0_13] : memref<1x3072xf32, #tpu.memory_space<vmem>>, vector<1x3072xf32>
    %27 = vector.broadcast %26 : vector<1x3072xf32> to vector<16x3072xf32>
    %28 = arith.addf %25, %27 : vector<16x3072xf32>
    %29 = arith.truncf %28 : vector<16x3072xf32> to vector<16x3072xbf16>
    %c0_14 = arith.constant 0 : index
    %c0_15 = arith.constant 0 : index
    %30 = vector.load %arg6[%c0_14, %c0_15] : memref<16x3072xbf16, #tpu.memory_space<vmem>>, vector<16x3072xbf16>
    tpu.vector_store %arg6[%c0_14, %c0_15], %29 {strides = array<i32>} : memref<16x3072xbf16, #tpu.memory_space<vmem>>, vector<16x3072xbf16>,
    return
  }
  func.func @transform_0(%arg0: i32) -> (i32, i32) {
    %c0_i32 = arith.constant 0 : i32
    %c0_i32_0 = arith.constant 0 : i32
    return %arg0, %c0_i32 : i32, i32
  }
  func.func @transform_1(%arg0: i32) -> (i32, i32) {
    %c0_i32 = arith.constant 0 : i32
    %c0_i32_0 = arith.constant 0 : i32
    %c0_i32_1 = arith.constant 0 : i32
    return %c0_i32, %c0_i32_0 : i32, i32
  }
  func.func @transform_2(%arg0: i32) -> (i32, i32) {
    %c0_i32 = arith.constant 0 : i32
    %c0_i32_0 = arith.constant 0 : i32
    %c0_i32_1 = arith.constant 0 : i32
    return %c0_i32, %c0_i32_0 : i32, i32
  }
  func.func @transform_3(%arg0: i32) -> (i32, i32) {
    %c0_i32 = arith.constant 0 : i32
    %c0_i32_0 = arith.constant 0 : i32
    %c0_i32_1 = arith.constant 0 : i32
    return %c0_i32, %c0_i32_0 : i32, i32
  }
  func.func @transform_4(%arg0: i32) -> (i32, i32) {
    %c0_i32 = arith.constant 0 : i32
    %c0_i32_0 = arith.constant 0 : i32
    %c0_i32_1 = arith.constant 0 : i32
    return %c0_i32, %c0_i32_0 : i32, i32
  }
  func.func @transform_5(%arg0: i32) -> (i32, i32) {
    %c0_i32 = arith.constant 0 : i32
    %c0_i32_0 = arith.constant 0 : i32
    return %arg0, %c0_i32 : i32, i32
  }
}

</mosaic_0001>

<llo_original>
// kernel: tpu_custom_call.1
$region0: #{tpu_custom_call.1}
  #allocation0 [shape = 'u32[]', space=smem, size = 0x4, offset = 0x4, fixed_abs, tag = 'smem constant byte address 0x4 - core index']
  #allocation1 [shape = 'u32[144,128]{1,0:T(1,128)}', space=vmem, size = 0x12000, scoped, tag = 'internal scratch']
  %s0 = inlined_call_operand.hbm [shape: f32[16,384], index: 0, kind: input, shape index: {}]
  %s1 = inlined_call_operand.hbm [shape: f32[1,384], index: 1, kind: input, shape index: {}]
  %s2 = inlined_call_operand.hbm [shape: f32[1,384], index: 2, kind: input, shape index: {}]
  %s3 = inlined_call_operand.hbm [shape: bf16[384,3072], index: 3, kind: input, shape index: {}]
  %s4 = inlined_call_operand.hbm [shape: f32[1,3072], index: 4, kind: input, shape index: {}]
  %s5 = inlined_call_operand.hbm [shape: bf16[16,3072], index: 5, kind: output, shape index: {}]
  %s6 = sld [smem:[#allocation0]]
  $region50: #{tpu_custom_call.1} parent=0
    _
  %s8 = ssub.s32 1, %s6
  %s9 = scalar_select 0, %s8, %s6
  $region1: #{tpu_custom_call.1} parent=0
    #allocation2 [shape = 'u8[24576]{0}', space=vmem, size = 0x6000, scoped, tag = 'input window, operand 0, single buffered']
    #allocation3 [shape = 's32[1]{0}', space=sflag, size = 0x4, scoped, tag = 'scoped memory for tpu_custom_call.1']
    #allocation4 [shape = 's32[1]{0}', space=sflag, size = 0x4, scoped, tag = 'scoped memory for tpu_custom_call.1']
    #allocation5 [shape = 'u8[1536]{0}', space=vmem, size = 0x800, scoped, tag = 'input window, operand 1, single buffered']
    #allocation6 [shape = 's32[1]{0}', space=sflag, size = 0x4, scoped, tag = 'scoped memory for tpu_custom_call.1']
    #allocation7 [shape = 'u8[1536]{0}', space=vmem, size = 0x800, scoped, tag = 'input window, operand 2, single buffered']
    #allocation8 [shape = 'u8[2359296]{0}', space=vmem, size = 0x240000, scoped, tag = 'input window, operand 3, single buffered']
    #allocation9 [shape = 's32[1]{0}', space=sflag, size = 0x4, scoped, tag = 'scoped memory for tpu_custom_call.1']
    #allocation10 [shape = 'u8[12288]{0}', space=vmem, size = 0x3000, scoped, tag = 'input window, operand 4, single buffered']
    #allocation11 [shape = 'u8[98304]{0}', space=vmem, size = 0x18000, scoped, tag = 'output window, operand 0, single buffered']
    %10 = vsyncpa [#allocation3], 0
    %11 = vsyncpa [#allocation6], 0
    %12 = vsyncpa [#allocation9], 0
    %13 = vsyncpa [#allocation4], 0
    // Predicated region
    $region2: #{tpu_custom_call.1} parent=1 // pred_check
      _
    $region3: #{tpu_custom_call.1} parent=1 // pred_check_branch
      %15 = sbr.rel (0) target = $region5
    $region4: #{tpu_custom_call.1} parent=1 // pred_region
      %s17 = ssub.s32 768, 768
      %18 = vsyncadd [#allocation3], %s17
      %s19 = sshll.u32 [#allocation2], 4
      %s20 = int_to_ptr.vmem [resolvable:$true] %s19
      %25 = dma.hbm_to_vmem [thread:$0]  %s0, 768, %s20, [#allocation3], 384, 384, 24
    $region5: #{tpu_custom_call.1} parent=1 // pred_fallthru
      _
    // Predicated region
    $region6: #{tpu_custom_call.1} parent=1 // pred_check
      _
    $region7: #{tpu_custom_call.1} parent=1 // pred_check_branch
      %27 = sbr.rel (0) target = $region9
    $region8: #{tpu_custom_call.1} parent=1 // pred_region
      %s29 = ssub.s32 48, 48
      %30 = vsyncadd [#allocation6], %s29
      %s32 = sshll.u32 [#allocation5], 4
      %s33 = int_to_ptr.vmem [resolvable:$true] %s32
      %35 = dma.hbm_to_vmem [thread:$0]  %s1, 48, %s33, [#allocation6]
    $region9: #{tpu_custom_call.1} parent=1 // pred_fallthru
      _
    // Predicated region
    $region10: #{tpu_custom_call.1} parent=1 // pred_check
      _
    $region11: #{tpu_custom_call.1} parent=1 // pred_check_branch
      %37 = sbr.rel (0) target = $region13
    $region12: #{tpu_custom_call.1} parent=1 // pred_region
      %s39 = ssub.s32 48, 48
      %40 = vsyncadd [#allocation6], %s39
      %s42 = sshll.u32 [#allocation7], 4
      %s43 = int_to_ptr.vmem [resolvable:$true] %s42
      %45 = dma.hbm_to_vmem [thread:$0]  %s2, 48, %s43, [#allocation6]
    $region13: #{tpu_custom_call.1} parent=1 // pred_fallthru
      _
    // Predicated region
    $region14: #{tpu_custom_call.1} parent=1 // pred_check
      _
    $region15: #{tpu_custom_call.1} parent=1 // pred_check_branch
      %47 = sbr.rel (0) target = $region17
    $region16: #{tpu_custom_call.1} parent=1 // pred_region
      %s49 = ssub.s32 73728, 73728
      %50 = vsyncadd [#allocation9], %s49
      %s51 = sshll.u32 [#allocation8], 4
      %s52 = int_to_ptr.vmem [resolvable:$true] %s51
      %57 = dma.hbm_to_vmem [thread:$0]  %s3, 73728, %s52, [#allocation9], 1536, 1536, 96
    $region17: #{tpu_custom_call.1} parent=1 // pred_fallthru
      _
    // Predicated region
    $region18: #{tpu_custom_call.1} parent=1 // pred_check
      _
    $region19: #{tpu_custom_call.1} parent=1 // pred_check_branch
      %59 = sbr.rel (0) target = $region21
    $region20: #{tpu_custom_call.1} parent=1 // pred_region
      %s61 = ssub.s32 384, 384
      %62 = vsyncadd [#allocation9], %s61
      %s64 = sshll.u32 [#allocation10], 4
      %s65 = int_to_ptr.vmem [resolvable:$true] %s64
      %67 = dma.hbm_to_vmem [thread:$0]  %s4, 384, %s65, [#allocation9]
    $region21: #{tpu_custom_call.1} parent=1 // pred_fallthru
      _
    // Predicated region
    $region22: #{tpu_custom_call.1} parent=1 // pred_check
      _
    $region23: #{tpu_custom_call.1} parent=1 // pred_check_branch
      %69 = sbr.rel (0) target = $region25
    $region24: #{tpu_custom_call.1} parent=1 // pred_region
      %70 = dma.done [#allocation3], 768
    $region25: #{tpu_custom_call.1} parent=1 // pred_fallthru
      _
    // Predicated region
    $region26: #{tpu_custom_call.1} parent=1 // pred_check
      _
    $region27: #{tpu_custom_call.1} parent=1 // pred_check_branch
      %72 = sbr.rel (0) target = $region29
    $region28: #{tpu_custom_call.1} parent=1 // pred_region
      %73 = dma.done [#allocation6], 48
    $region29: #{tpu_custom_call.1} parent=1 // pred_fallthru
      _
    // Predicated region
    $region30: #{tpu_custom_call.1} parent=1 // pred_check
      _
    $region31: #{tpu_custom_call.1} parent=1 // pred_check_branch
      %75 = sbr.rel (0) target = $region33
    $region32: #{tpu_custom_call.1} parent=1 // pred_region
      %76 = dma.done [#allocation6], 48
    $region33: #{tpu_custom_call.1} parent=1 // pred_fallthru
      _
    // Predicated region
    $region34: #{tpu_custom_call.1} parent=1 // pred_check
      _
    $region35: #{tpu_custom_call.1} parent=1 // pred_check_branch
      %78 = sbr.rel (0) target = $region37
    $region36: #{tpu_custom_call.1} parent=1 // pred_region
      %79 = dma.done [#allocation9], 73728
    $region37: #{tpu_custom_call.1} parent=1 // pred_fallthru
      _
    // Predicated region
    $region38: #{tpu_custom_call.1} parent=1 // pred_check
      _
    $region39: #{tpu_custom_call.1} parent=1 // pred_check_branch
      %81 = sbr.rel (0) target = $region41
    $region40: #{tpu_custom_call.1} parent=1 // pred_region
      %82 = dma.done [#allocation9], 384
    $region41: #{tpu_custom_call.1} parent=1 // pred_fallthru
      _
    %v84 = vld [vmem:[#allocation2] sm:$0xff]
    %v85 = vld [vmem:[#allocation2 + $0x8] sm:$0xff]
    %v86 = vld [vmem:[#allocation2 + $0x10] sm:$0xff]
    %v87 = vld [vmem:[#allocation2 + $0x18] sm:$0xff]
    %v88 = vld [vmem:[#allocation2 + $0x20] sm:$0xff]
    %v89 = vld [vmem:[#allocation2 + $0x28] sm:$0xff]
    %v90 = vadd.f32 %v84, %v85
    %v91 = vadd.f32 %v90, %v86
    %92 = vadd.xlane.f32.xlu0 %v91
    %v93 = vpop.xlane.xlu0 %92
    %v94 = vadd.f32 %v87, %v88
    %v95 = vadd.f32 %v94, %v89
    %96 = vadd.xlane.f32.xlu0 %v95
    %v97 = vpop.xlane.xlu0 %96
    %v98 = vrcp.pop 384.0
    %v99 = vmul.f32 %v93, %v98
    %v100 = vmul.f32 %v97, %v98
    %v101 = vsub.f32 %v84, %v99
    %v102 = vsub.f32 %v85, %v99
    %v103 = vsub.f32 %v86, %v99
    %v104 = vsub.f32 %v87, %v100
    %v105 = vsub.f32 %v88, %v100
    %v106 = vsub.f32 %v89, %v100
    %v107 = vmul.f32 %v101, %v101
    %v108 = vmul.f32 %v102, %v102
    %v109 = vmul.f32 %v103, %v103
    %v110 = vmul.f32 %v104, %v104
    %v111 = vmul.f32 %v105, %v105
    %v112 = vmul.f32 %v106, %v106
    %v113 = vadd.f32 %v107, %v108
    %v114 = vadd.f32 %v113, %v109
    %115 = vadd.xlane.f32.xlu0 %v114
    %v116 = vpop.xlane.xlu0 %115
    %v117 = vadd.f32 %v110, %v111
    %v118 = vadd.f32 %v117, %v112
    %119 = vadd.xlane.f32.xlu0 %v118
    %v120 = vpop.xlane.xlu0 %119
    %v121 = vmul.f32 %v116, %v98
    %v122 = vmul.f32 %v120, %v98
    %v123 = vadd.f32 %v121, 1e-06
    %v124 = vadd.f32 %v122, 1e-06
    %v125 = vrsqrt.pop %v123
    %v126 = vrsqrt.pop %v124
    %v127 = vmul.f32 %v101, %v125
    %v128 = vmul.f32 %v102, %v125
    %v129 = vmul.f32 %v103, %v125
    %v130 = vmul.f32 %v104, %v126
    %v131 = vmul.f32 %v105, %v126
    %v132 = vmul.f32 %v106, %v126
    %v133 = vld [vmem:[#allocation5] sm:$0x7]
    %v135 = vlaneseq
    %v136 = vshrl.u32 %v135, 7
    %v137 = vsub.s32 0, %v136
    %v138 = vrot.slane %v133, %v137
    %v139 = vlaneseq
    %v140 = vshrl.u32 %v139, 7
    %v141 = vsub.s32 1, %v140
    %v142 = vrot.slane %v133, %v141
    %v143 = vlaneseq
    %v144 = vshrl.u32 %v143, 7
    %v145 = vsub.s32 2, %v144
    %v146 = vrot.slane %v133, %v145
    %v150 = vmul.f32 %v127, %v138
    %v151 = vmul.f32 %v128, %v142
    %v152 = vmul.f32 %v129, %v146
    %v153 = vmul.f32 %v130, %v138
    %v154 = vmul.f32 %v131, %v142
    %v155 = vmul.f32 %v132, %v146
    %v156 = vld [vmem:[#allocation7] sm:$0x7]
    %v158 = vlaneseq
    %v159 = vshrl.u32 %v158, 7
    %v160 = vsub.s32 0, %v159
    %v161 = vrot.slane %v156, %v160
    %v162 = vlaneseq
    %v163 = vshrl.u32 %v162, 7
    %v164 = vsub.s32 1, %v163
    %v165 = vrot.slane %v156, %v164
    %v166 = vlaneseq
    %v167 = vshrl.u32 %v166, 7
    %v168 = vsub.s32 2, %v167
    %v169 = vrot.slane %v156, %v168
    %v173 = vadd.f32 %v150, %v161
    %v174 = vadd.f32 %v151, %v165
    %v175 = vadd.f32 %v152, %v169
    %v176 = vadd.f32 %v153, %v161
    %v177 = vadd.f32 %v154, %v165
    %v178 = vadd.f32 %v155, %v169
    %v179 = vpack.c.bf16 %v176, %v173
    %v180 = vpack.c.bf16 %v177, %v174
    %v181 = vpack.c.bf16 %v178, %v175
    %v182 = vld [vmem:[#allocation8] sm:$0xff]
    %v183 = vld [vmem:[#allocation8 + $0x8] sm:$0xff]
    %v184 = vld [vmem:[#allocation8 + $0x10] sm:$0xff]
    %v185 = vld [vmem:[#allocation8 + $0x18] sm:$0xff]
    %v186 = vld [vmem:[#allocation8 + $0x20] sm:$0xff]
    %v187 = vld [vmem:[#allocation8 + $0x28] sm:$0xff]
    %v188 = vld [vmem:[#allocation8 + $0x30] sm:$0xff]
    %v189 = vld [vmem:[#allocation8 + $0x38] sm:$0xff]
    %v190 = vld [vmem:[#allocation8 + $0x40] sm:$0xff]
    %v191 = vld [vmem:[#allocation8 + $0x48] sm:$0xff]
    %v192 = vld [vmem:[#allocation8 + $0x50] sm:$0xff]
    %v193 = vld [vmem:[#allocation8 + $0x58] sm:$0xff]
    %v194 = vld [vmem:[#allocation8 + $0x60] sm:$0xff]
    %v195 = vld [vmem:[#allocation8 + $0x68] sm:$0xff]
    %v196 = vld [vmem:[#allocation8 + $0x70] sm:$0xff]
    %v197 = vld [vmem:[#allocation8 + $0x78] sm:$0xff]
    %v198 = vld [vmem:[#allocation8 + $0x80] sm:$0xff]
    %v199 = vld [vmem:[#allocation8 + $0x88] sm:$0xff]
    %v200 = vld [vmem:[#allocation8 + $0x90] sm:$0xff]
    %v201 = vld [vmem:[#allocation8 + $0x98] sm:$0xff]
    %v202 = vld [vmem:[#allocation8 + $0xa0] sm:$0xff]
    %v203 = vld [vmem:[#allocation8 + $0xa8] sm:$0xff]
    %v204 = vld [vmem:[#allocation8 + $0xb0] sm:$0xff]
    %v205 = vld [vmem:[#allocation8 + $0xb8] sm:$0xff]
    %v206 = vld [vmem:[#allocation8 + $0xc0] sm:$0xff]
    %v207 = vld [vmem:[#allocation8 + $0xc8] sm:$0xff]
    %v208 = vld [vmem:[#allocation8 + $0xd0] sm:$0xff]
    %v209 = vld [vmem:[#allocation8 + $0xd8] sm:$0xff]
    %v210 = vld [vmem:[#allocation8 + $0xe0] sm:$0xff]
    %v211 = vld [vmem:[#allocation8 + $0xe8] sm:$0xff]
    %v212 = vld [vmem:[#allocation8 + $0xf0] sm:$0xff]
    %v213 = vld [vmem:[#allocation8 + $0xf8] sm:$0xff]
    %v214 = vld [vmem:[#allocation8 + $0x100] sm:$0xff]
    %v215 = vld [vmem:[#allocation8 + $0x108] sm:$0xff]
    %v216 = vld [vmem:[#allocation8 + $0x110] sm:$0xff]
    %v217 = vld [vmem:[#allocation8 + $0x118] sm:$0xff]
    %v218 = vld [vmem:[#allocation8 + $0x120] sm:$0xff]
    %v219 = vld [vmem:[#allocation8 + $0x128] sm:$0xff]
    %v220 = vld [vmem:[#allocation8 + $0x130] sm:$0xff]
    %v221 = vld [vmem:[#allocation8 + $0x138] sm:$0xff]
    %v222 = vld [vmem:[#allocation8 + $0x140] sm:$0xff]
    %v223 = vld [vmem:[#allocation8 + $0x148] sm:$0xff]
    %v224 = vld [vmem:[#allocation8 + $0x150] sm:$0xff]
    %v225 = vld [vmem:[#allocation8 + $0x158] sm:$0xff]
    %v226 = vld [vmem:[#allocation8 + $0x160] sm:$0xff]
    %v227 = vld [vmem:[#allocation8 + $0x168] sm:$0xff]
    %v228 = vld [vmem:[#allocation8 + $0x170] sm:$0xff]
    %v229 = vld [vmem:[#allocation8 + $0x178] sm:$0xff]
    %v230 = vld [vmem:[#allocation8 + $0x180] sm:$0xff]
    %v231 = vld [vmem:[#allocation8 + $0x188] sm:$0xff]
    %v232 = vld [vmem:[#allocation8 + $0x190] sm:$0xff]
    %v233 = vld [vmem:[#allocation8 + $0x198] sm:$0xff]
    %v234 = vld [vmem:[#allocation8 + $0x1a0] sm:$0xff]
    %v235 = vld [vmem:[#allocation8 + $0x1a8] sm:$0xff]
    %v236 = vld [vmem:[#allocation8 + $0x1b0] sm:$0xff]
    %v237 = vld [vmem:[#allocation8 + $0x1b8] sm:$0xff]
    %v238 = vld [vmem:[#allocation8 + $0x1c0] sm:$0xff]
    %v239 = vld [vmem:[#allocation8 + $0x1c8] sm:$0xff]
    %v240 = vld [vmem:[#allocation8 + $0x1d0] sm:$0xff]
    %v241 = vld [vmem:[#allocation8 + $0x1d8] sm:$0xff]
    %v242 = vld [vmem:[#allocation8 + $0x1e0] sm:$0xff]
    %v243 = vld [vmem:[#allocation8 + $0x1e8] sm:$0xff]
    %v244 = vld [vmem:[#allocation8 + $0x1f0] sm:$0xff]
    %v245 = vld [vmem:[#allocation8 + $0x1f8] sm:$0xff]
    %v246 = vld [vmem:[#allocation8 + $0x200] sm:$0xff]
    %v247 = vld [vmem:[#allocation8 + $0x208] sm:$0xff]
    %v248 = vld [vmem:[#allocation8 + $0x210] sm:$0xff]
    %v249 = vld [vmem:[#allocation8 + $0x218] sm:$0xff]
    %v250 = vld [vmem:[#allocation8 + $0x220] sm:$0xff]
    %v251 = vld [vmem:[#allocation8 + $0x228] sm:$0xff]
    %v252 = vld [vmem:[#allocation8 + $0x230] sm:$0xff]
    %v253 = vld [vmem:[#allocation8 + $0x238] sm:$0xff]
    %v254 = vld [vmem:[#allocation8 + $0x240] sm:$0xff]
    %v255 = vld [vmem:[#allocation8 + $0x248] sm:$0xff]
    %v256 = vld [vmem:[#allocation8 + $0x250] sm:$0xff]
    %v257 = vld [vmem:[#allocation8 + $0x258] sm:$0xff]
    %v258 = vld [vmem:[#allocation8 + $0x260] sm:$0xff]
    %v259 = vld [vmem:[#allocation8 + $0x268] sm:$0xff]
    %v260 = vld [vmem:[#allocation8 + $0x270] sm:$0xff]
    %v261 = vld [vmem:[#allocation8 + $0x278] sm:$0xff]
    %v262 = vld [vmem:[#allocation8 + $0x280] sm:$0xff]
    %v263 = vld [vmem:[#allocation8 + $0x288] sm:$0xff]
    %v264 = vld [vmem:[#allocation8 + $0x290] sm:$0xff]
    %v265 = vld [vmem:[#allocation8 + $0x298] sm:$0xff]
    %v266 = vld [vmem:[#allocation8 + $0x2a0] sm:$0xff]
    %v267 = vld [vmem:[#allocation8 + $0x2a8] sm:$0xff]
    %v268 = vld [vmem:[#allocation8 + $0x2b0] sm:$0xff]
    %v269 = vld [vmem:[#allocation8 + $0x2b8] sm:$0xff]
    %v270 = vld [vmem:[#allocation8 + $0x2c0] sm:$0xff]
    %v271 = vld [vmem:[#allocation8 + $0x2c8] sm:$0xff]
    %v272 = vld [vmem:[#allocation8 + $0x2d0] sm:$0xff]
    %v273 = vld [vmem:[#allocation8 + $0x2d8] sm:$0xff]
    %v274 = vld [vmem:[#allocation8 + $0x2e0] sm:$0xff]
    %v275 = vld [vmem:[#allocation8 + $0x2e8] sm:$0xff]
    %v276 = vld [vmem:[#allocation8 + $0x2f0] sm:$0xff]
    %v277 = vld [vmem:[#allocation8 + $0x2f8] sm:$0xff]
    %v278 = vld [vmem:[#allocation8 + $0x300] sm:$0xff]
    %v279 = vld [vmem:[#allocation8 + $0x308] sm:$0xff]
    %v280 = vld [vmem:[#allocation8 + $0x310] sm:$0xff]
    %v281 = vld [vmem:[#allocation8 + $0x318] sm:$0xff]
    %v282 = vld [vmem:[#allocation8 + $0x320] sm:$0xff]
    %v283 = vld [vmem:[#allocation8 + $0x328] sm:$0xff]
    %v284 = vld [vmem:[#allocation8 + $0x330] sm:$0xff]
    %v285 = vld [vmem:[#allocation8 + $0x338] sm:$0xff]
    %v286 = vld [vmem:[#allocation8 + $0x340] sm:$0xff]
    %v287 = vld [vmem:[#allocation8 + $0x348] sm:$0xff]
    %v288 = vld [vmem:[#allocation8 + $0x350] sm:$0xff]
    %v289 = vld [vmem:[#allocation8 + $0x358] sm:$0xff]
    %v290 = vld [vmem:[#allocation8 + $0x360] sm:$0xff]
    %v291 = vld [vmem:[#allocation8 + $0x368] sm:$0xff]
    %v292 = vld [vmem:[#allocation8 + $0x370] sm:$0xff]
    %v293 = vld [vmem:[#allocation8 + $0x378] sm:$0xff]
    %v294 = vld [vmem:[#allocation8 + $0x380] sm:$0xff]
    %v295 = vld [vmem:[#allocation8 + $0x388] sm:$0xff]
    %v296 = vld [vmem:[#allocation8 + $0x390] sm:$0xff]
    %v297 = vld [vmem:[#allocation8 + $0x398] sm:$0xff]
    %v298 = vld [vmem:[#allocation8 + $0x3a0] sm:$0xff]
    %v299 = vld [vmem:[#allocation8 + $0x3a8] sm:$0xff]
    %v300 = vld [vmem:[#allocation8 + $0x3b0] sm:$0xff]
    %v301 = vld [vmem:[#allocation8 + $0x3b8] sm:$0xff]
    %v302 = vld [vmem:[#allocation8 + $0x3c0] sm:$0xff]
    %v303 = vld [vmem:[#allocation8 + $0x3c8] sm:$0xff]
    %v304 = vld [vmem:[#allocation8 + $0x3d0] sm:$0xff]
    %v305 = vld [vmem:[#allocation8 + $0x3d8] sm:$0xff]
    %v306 = vld [vmem:[#allocation8 + $0x3e0] sm:$0xff]
    %v307 = vld [vmem:[#allocation8 + $0x3e8] sm:$0xff]
    %v308 = vld [vmem:[#allocation8 + $0x3f0] sm:$0xff]
    %v309 = vld [vmem:[#allocation8 + $0x3f8] sm:$0xff]
    %v310 = vld [vmem:[#allocation8 + $0x400] sm:$0xff]
    %v311 = vld [vmem:[#allocation8 + $0x408] sm:$0xff]
    %v312 = vld [vmem:[#allocation8 + $0x410] sm:$0xff]
    %v313 = vld [vmem:[#allocation8 + $0x418] sm:$0xff]
    %v314 = vld [vmem:[#allocation8 + $0x420] sm:$0xff]
    %v315 = vld [vmem:[#allocation8 + $0x428] sm:$0xff]
    %v316 = vld [vmem:[#allocation8 + $0x430] sm:$0xff]
    %v317 = vld [vmem:[#allocation8 + $0x438] sm:$0xff]
    %v318 = vld [vmem:[#allocation8 + $0x440] sm:$0xff]
    %v319 = vld [vmem:[#allocation8 + $0x448] sm:$0xff]
    %v320 = vld [vmem:[#allocation8 + $0x450] sm:$0xff]
    %v321 = vld [vmem:[#allocation8 + $0x458] sm:$0xff]
    %v322 = vld [vmem:[#allocation8 + $0x460] sm:$0xff]
    %v323 = vld [vmem:[#allocation8 + $0x468] sm:$0xff]
    %v324 = vld [vmem:[#allocation8 + $0x470] sm:$0xff]
    %v325 = vld [vmem:[#allocation8 + $0x478] sm:$0xff]
    %v326 = vld [vmem:[#allocation8 + $0x480] sm:$0xff]
    %v327 = vld [vmem:[#allocation8 + $0x488] sm:$0xff]
    %v328 = vld [vmem:[#allocation8 + $0x490] sm:$0xff]
    %v329 = vld [vmem:[#allocation8 + $0x498] sm:$0xff]
    %v330 = vld [vmem:[#allocation8 + $0x4a0] sm:$0xff]
    %v331 = vld [vmem:[#allocation8 + $0x4a8] sm:$0xff]
    %v332 = vld [vmem:[#allocation8 + $0x4b0] sm:$0xff]
    %v333 = vld [vmem:[#allocation8 + $0x4b8] sm:$0xff]
    %v334 = vld [vmem:[#allocation8 + $0x4c0] sm:$0xff]
    %v335 = vld [vmem:[#allocation8 + $0x4c8] sm:$0xff]
    %v336 = vld [vmem:[#allocation8 + $0x4d0] sm:$0xff]
    %v337 = vld [vmem:[#allocation8 + $0x4d8] sm:$0xff]
    %v338 = vld [vmem:[#allocation8 + $0x4e0] sm:$0xff]
    %v339 = vld [vmem:[#allocation8 + $0x4e8] sm:$0xff]
    %v340 = vld [vmem:[#allocation8 + $0x4f0] sm:$0xff]
    %v341 = vld [vmem:[#allocation8 + $0x4f8] sm:$0xff]
    %v342 = vld [vmem:[#allocation8 + $0x500] sm:$0xff]
    %v343 = vld [vmem:[#allocation8 + $0x508] sm:$0xff]
    %v344 = vld [vmem:[#allocation8 + $0x510] sm:$0xff]
    %v345 = vld [vmem:[#allocation8 + $0x518] sm:$0xff]
    %v346 = vld [vmem:[#allocation8 + $0x520] sm:$0xff]
    %v347 = vld [vmem:[#allocation8 + $0x528] sm:$0xff]
    %v348 = vld [vmem:[#allocation8 + $0x530] sm:$0xff]
    %v349 = vld [vmem:[#allocation8 + $0x538] sm:$0xff]
    %v350 = vld [vmem:[#allocation8 + $0x540] sm:$0xff]
    %v351 = vld [vmem:[#allocation8 + $0x548] sm:$0xff]
    %v352 = vld [vmem:[#allocation8 + $0x550] sm:$0xff]
    %v353 = vld [vmem:[#allocation8 + $0x558] sm:$0xff]
    %v354 = vld [vmem:[#allocation8 + $0x560] sm:$0xff]
    %v355 = vld [vmem:[#allocation8 + $0x568] sm:$0xff]
    %v356 = vld [vmem:[#allocation8 + $0x570] sm:$0xff]
    %v357 = vld [vmem:[#allocation8 + $0x578] sm:$0xff]
    %v358 = vld [vmem:[#allocation8 + $0x580] sm:$0xff]
    %v359 = vld [vmem:[#allocation8 + $0x588] sm:$0xff]
    %v360 = vld [vmem:[#allocation8 + $0x590] sm:$0xff]
    %v361 = vld [vmem:[#allocation8 + $0x598] sm:$0xff]
    %v362 = vld [vmem:[#allocation8 + $0x5a0] sm:$0xff]
    %v363 = vld [vmem:[#allocation8 + $0x5a8] sm:$0xff]
    %v364 = vld [vmem:[#allocation8 + $0x5b0] sm:$0xff]
    %v365 = vld [vmem:[#allocation8 + $0x5b8] sm:$0xff]
    %v366 = vld [vmem:[#allocation8 + $0x5c0] sm:$0xff]
    %v367 = vld [vmem:[#allocation8 + $0x5c8] sm:$0xff]
    %v368 = vld [vmem:[#allocation8 + $0x5d0] sm:$0xff]
    %v369 = vld [vmem:[#allocation8 + $0x5d8] sm:$0xff]
    %v370 = vld [vmem:[#allocation8 + $0x5e0] sm:$0xff]
    %v371 = vld [vmem:[#allocation8 + $0x5e8] sm:$0xff]
    %v372 = vld [vmem:[#allocation8 + $0x5f0] sm:$0xff]
    %v373 = vld [vmem:[#allocation8 + $0x5f8] sm:$0xff]
    %v374 = vld [vmem:[#allocation8 + $0x600] sm:$0xff]
    %v375 = vld [vmem:[#allocation8 + $0x608] sm:$0xff]
    %v376 = vld [vmem:[#allocation8 + $0x610] sm:$0xff]
    %v377 = vld [vmem:[#allocation8 + $0x618] sm:$0xff]
    %v378 = vld [vmem:[#allocation8 + $0x620] sm:$0xff]
    %v379 = vld [vmem:[#allocation8 + $0x628] sm:$0xff]
    %v380 = vld [vmem:[#allocation8 + $0x630] sm:$0xff]
    %v381 = vld [vmem:[#allocation8 + $0x638] sm:$0xff]
    %v382 = vld [vmem:[#allocation8 + $0x640] sm:$0xff]
    %v383 = vld [vmem:[#allocation8 + $0x648] sm:$0xff]
    %v384 = vld [vmem:[#allocation8 + $0x650] sm:$0xff]
    %v385 = vld [vmem:[#allocation8 + $0x658] sm:$0xff]
    %v386 = vld [vmem:[#allocation8 + $0x660] sm:$0xff]
    %v387 = vld [vmem:[#allocation8 + $0x668] sm:$0xff]
    %v388 = vld [vmem:[#allocation8 + $0x670] sm:$0xff]
    %v389 = vld [vmem:[#allocation8 + $0x678] sm:$0xff]
    %v390 = vld [vmem:[#allocation8 + $0x680] sm:$0xff]
    %v391 = vld [vmem:[#allocation8 + $0x688] sm:$0xff]
    %v392 = vld [vmem:[#allocation8 + $0x690] sm:$0xff]
    %v393 = vld [vmem:[#allocation8 + $0x698] sm:$0xff]
    %v394 = vld [vmem:[#allocation8 + $0x6a0] sm:$0xff]
    %v395 = vld [vmem:[#allocation8 + $0x6a8] sm:$0xff]
    %v396 = vld [vmem:[#allocation8 + $0x6b0] sm:$0xff]
    %v397 = vld [vmem:[#allocation8 + $0x6b8] sm:$0xff]
    %v398 = vld [vmem:[#allocation8 + $0x6c0] sm:$0xff]
    %v399 = vld [vmem:[#allocation8 + $0x6c8] sm:$0xff]
    %v400 = vld [vmem:[#allocation8 + $0x6d0] sm:$0xff]
    %v401 = vld [vmem:[#allocation8 + $0x6d8] sm:$0xff]
    %v402 = vld [vmem:[#allocation8 + $0x6e0] sm:$0xff]
    %v403 = vld [vmem:[#allocation8 + $0x6e8] sm:$0xff]
    %v404 = vld [vmem:[#allocation8 + $0x6f0] sm:$0xff]
    %v405 = vld [vmem:[#allocation8 + $0x6f8] sm:$0xff]
    %v406 = vld [vmem:[#allocation8 + $0x700] sm:$0xff]
    %v407 = vld [vmem:[#allocation8 + $0x708] sm:$0xff]
    %v408 = vld [vmem:[#allocation8 + $0x710] sm:$0xff]
    %v409 = vld [vmem:[#allocation8 + $0x718] sm:$0xff]
    %v410 = vld [vmem:[#allocation8 + $0x720] sm:$0xff]
    %v411 = vld [vmem:[#allocation8 + $0x728] sm:$0xff]
    %v412 = vld [vmem:[#allocation8 + $0x730] sm:$0xff]
    %v413 = vld [vmem:[#allocation8 + $0x738] sm:$0xff]
    %v414 = vld [vmem:[#allocation8 + $0x740] sm:$0xff]
    %v415 = vld [vmem:[#allocation8 + $0x748] sm:$0xff]
    %v416 = vld [vmem:[#allocation8 + $0x750] sm:$0xff]
    %v417 = vld [vmem:[#allocation8 + $0x758] sm:$0xff]
    %v418 = vld [vmem:[#allocation8 + $0x760] sm:$0xff]
    %v419 = vld [vmem:[#allocation8 + $0x768] sm:$0xff]
    %v420 = vld [vmem:[#allocation8 + $0x770] sm:$0xff]
    %v421 = vld [vmem:[#allocation8 + $0x778] sm:$0xff]
    %v422 = vld [vmem:[#allocation8 + $0x780] sm:$0xff]
    %v423 = vld [vmem:[#allocation8 + $0x788] sm:$0xff]
    %v424 = vld [vmem:[#allocation8 + $0x790] sm:$0xff]
    %v425 = vld [vmem:[#allocation8 + $0x798] sm:$0xff]
    %v426 = vld [vmem:[#allocation8 + $0x7a0] sm:$0xff]
    %v427 = vld [vmem:[#allocation8 + $0x7a8] sm:$0xff]
    %v428 = vld [vmem:[#allocation8 + $0x7b0] sm:$0xff]
    %v429 = vld [vmem:[#allocation8 + $0x7b8] sm:$0xff]
    %v430 = vld [vmem:[#allocation8 + $0x7c0] sm:$0xff]
    %v431 = vld [vmem:[#allocation8 + $0x7c8] sm:$0xff]
    %v432 = vld [vmem:[#allocation8 + $0x7d0] sm:$0xff]
    %v433 = vld [vmem:[#allocation8 + $0x7d8] sm:$0xff]
    %v434 = vld [vmem:[#allocation8 + $0x7e0] sm:$0xff]
    %v435 = vld [vmem:[#allocation8 + $0x7e8] sm:$0xff]
    %v436 = vld [vmem:[#allocation8 + $0x7f0] sm:$0xff]
    %v437 = vld [vmem:[#allocation8 + $0x7f8] sm:$0xff]
    %v438 = vld [vmem:[#allocation8 + $0x800] sm:$0xff]
    %v439 = vld [vmem:[#allocation8 + $0x808] sm:$0xff]
    %v440 = vld [vmem:[#allocation8 + $0x810] sm:$0xff]
    %v441 = vld [vmem:[#allocation8 + $0x818] sm:$0xff]
    %v442 = vld [vmem:[#allocation8 + $0x820] sm:$0xff]
    %v443 = vld [vmem:[#allocation8 + $0x828] sm:$0xff]
    %v444 = vld [vmem:[#allocation8 + $0x830] sm:$0xff]
    %v445 = vld [vmem:[#allocation8 + $0x838] sm:$0xff]
    %v446 = vld [vmem:[#allocation8 + $0x840] sm:$0xff]
    %v447 = vld [vmem:[#allocation8 + $0x848] sm:$0xff]
    %v448 = vld [vmem:[#allocation8 + $0x850] sm:$0xff]
    %v449 = vld [vmem:[#allocation8 + $0x858] sm:$0xff]
    %v450 = vld [vmem:[#allocation8 + $0x860] sm:$0xff]
    %v451 = vld [vmem:[#allocation8 + $0x868] sm:$0xff]
    %v452 = vld [vmem:[#allocation8 + $0x870] sm:$0xff]
    %v453 = vld [vmem:[#allocation8 + $0x878] sm:$0xff]
    %v454 = vld [vmem:[#allocation8 + $0x880] sm:$0xff]
    %v455 = vld [vmem:[#allocation8 + $0x888] sm:$0xff]
    %v456 = vld [vmem:[#allocation8 + $0x890] sm:$0xff]
    %v457 = vld [vmem:[#allocation8 + $0x898] sm:$0xff]
    %v458 = vld [vmem:[#allocation8 + $0x8a0] sm:$0xff]
    %v459 = vld [vmem:[#allocation8 + $0x8a8] sm:$0xff]
    %v460 = vld [vmem:[#allocation8 + $0x8b0] sm:$0xff]
    %v461 = vld [vmem:[#allocation8 + $0x8b8] sm:$0xff]
    %v462 = vld [vmem:[#allocation8 + $0x8c0] sm:$0xff]
    %v463 = vld [vmem:[#allocation8 + $0x8c8] sm:$0xff]
    %v464 = vld [vmem:[#allocation8 + $0x8d0] sm:$0xff]
    %v465 = vld [vmem:[#allocation8 + $0x8d8] sm:$0xff]
    %v466 = vld [vmem:[#allocation8 + $0x8e0] sm:$0xff]
    %v467 = vld [vmem:[#allocation8 + $0x8e8] sm:$0xff]
    %v468 = vld [vmem:[#allocation8 + $0x8f0] sm:$0xff]
    %v469 = vld [vmem:[#allocation8 + $0x8f8] sm:$0xff]
    %v470 = vld [vmem:[#allocation8 + $0x900] sm:$0xff]
    %v471 = vld [vmem:[#allocation8 + $0x908] sm:$0xff]
    %v472 = vld [vmem:[#allocation8 + $0x910] sm:$0xff]
    %v473 = vld [vmem:[#allocation8 + $0x918] sm:$0xff]
    %v474 = vld [vmem:[#allocation8 + $0x920] sm:$0xff]
    %v475 = vld [vmem:[#allocation8 + $0x928] sm:$0xff]
    %v476 = vld [vmem:[#allocation8 + $0x930] sm:$0xff]
    %v477 = vld [vmem:[#allocation8 + $0x938] sm:$0xff]
    %v478 = vld [vmem:[#allocation8 + $0x940] sm:$0xff]
    %v479 = vld [vmem:[#allocation8 + $0x948] sm:$0xff]
    %v480 = vld [vmem:[#allocation8 + $0x950] sm:$0xff]
    %v481 = vld [vmem:[#allocation8 + $0x958] sm:$0xff]
    %v482 = vld [vmem:[#allocation8 + $0x960] sm:$0xff]
    %v483 = vld [vmem:[#allocation8 + $0x968] sm:$0xff]
    %v484 = vld [vmem:[#allocation8 + $0x970] sm:$0xff]
    %v485 = vld [vmem:[#allocation8 + $0x978] sm:$0xff]
    %v486 = vld [vmem:[#allocation8 + $0x980] sm:$0xff]
    %v487 = vld [vmem:[#allocation8 + $0x988] sm:$0xff]
    %v488 = vld [vmem:[#allocation8 + $0x990] sm:$0xff]
    %v489 = vld [vmem:[#allocation8 + $0x998] sm:$0xff]
    %v490 = vld [vmem:[#allocation8 + $0x9a0] sm:$0xff]
    %v491 = vld [vmem:[#allocation8 + $0x9a8] sm:$0xff]
    %v492 = vld [vmem:[#allocation8 + $0x9b0] sm:$0xff]
    %v493 = vld [vmem:[#allocation8 + $0x9b8] sm:$0xff]
    %v494 = vld [vmem:[#allocation8 + $0x9c0] sm:$0xff]
    %v495 = vld [vmem:[#allocation8 + $0x9c8] sm:$0xff]
    %v496 = vld [vmem:[#allocation8 + $0x9d0] sm:$0xff]
    %v497 = vld [vmem:[#allocation8 + $0x9d8] sm:$0xff]
    %v498 = vld [vmem:[#allocation8 + $0x9e0] sm:$0xff]
    %v499 = vld [vmem:[#allocation8 + $0x9e8] sm:$0xff]
    %v500 = vld [vmem:[#allocation8 + $0x9f0] sm:$0xff]
    %v501 = vld [vmem:[#allocation8 + $0x9f8] sm:$0xff]
    %v502 = vld [vmem:[#allocation8 + $0xa00] sm:$0xff]
    %v503 = vld [vmem:[#allocation8 + $0xa08] sm:$0xff]
    %v504 = vld [vmem:[#allocation8 + $0xa10] sm:$0xff]
    %v505 = vld [vmem:[#allocation8 + $0xa18] sm:$0xff]
    %v506 = vld [vmem:[#allocation8 + $0xa20] sm:$0xff]
    %v507 = vld [vmem:[#allocation8 + $0xa28] sm:$0xff]
    %v508 = vld [vmem:[#allocation8 + $0xa30] sm:$0xff]
    %v509 = vld [vmem:[#allocation8 + $0xa38] sm:$0xff]
    %v510 = vld [vmem:[#allocation8 + $0xa40] sm:$0xff]
    %v511 = vld [vmem:[#allocation8 + $0xa48] sm:$0xff]
    %v512 = vld [vmem:[#allocation8 + $0xa50] sm:$0xff]
    %v513 = vld [vmem:[#allocation8 + $0xa58] sm:$0xff]
    %v514 = vld [vmem:[#allocation8 + $0xa60] sm:$0xff]
    %v515 = vld [vmem:[#allocation8 + $0xa68] sm:$0xff]
    %v516 = vld [vmem:[#allocation8 + $0xa70] sm:$0xff]
    %v517 = vld [vmem:[#allocation8 + $0xa78] sm:$0xff]
    %v518 = vld [vmem:[#allocation8 + $0xa80] sm:$0xff]
    %v519 = vld [vmem:[#allocation8 + $0xa88] sm:$0xff]
    %v520 = vld [vmem:[#allocation8 + $0xa90] sm:$0xff]
    %v521 = vld [vmem:[#allocation8 + $0xa98] sm:$0xff]
    %v522 = vld [vmem:[#allocation8 + $0xaa0] sm:$0xff]
    %v523 = vld [vmem:[#allocation8 + $0xaa8] sm:$0xff]
    %v524 = vld [vmem:[#allocation8 + $0xab0] sm:$0xff]
    %v525 = vld [vmem:[#allocation8 + $0xab8] sm:$0xff]
    %v526 = vld [vmem:[#allocation8 + $0xac0] sm:$0xff]
    %v527 = vld [vmem:[#allocation8 + $0xac8] sm:$0xff]
    %v528 = vld [vmem:[#allocation8 + $0xad0] sm:$0xff]
    %v529 = vld [vmem:[#allocation8 + $0xad8] sm:$0xff]
    %v530 = vld [vmem:[#allocation8 + $0xae0] sm:$0xff]
    %v531 = vld [vmem:[#allocation8 + $0xae8] sm:$0xff]
    %v532 = vld [vmem:[#allocation8 + $0xaf0] sm:$0xff]
    %v533 = vld [vmem:[#allocation8 + $0xaf8] sm:$0xff]
    %v534 = vld [vmem:[#allocation8 + $0xb00] sm:$0xff]
    %v535 = vld [vmem:[#allocation8 + $0xb08] sm:$0xff]
    %v536 = vld [vmem:[#allocation8 + $0xb10] sm:$0xff]
    %v537 = vld [vmem:[#allocation8 + $0xb18] sm:$0xff]
    %v538 = vld [vmem:[#allocation8 + $0xb20] sm:$0xff]
    %v539 = vld [vmem:[#allocation8 + $0xb28] sm:$0xff]
    %v540 = vld [vmem:[#allocation8 + $0xb30] sm:$0xff]
    %v541 = vld [vmem:[#allocation8 + $0xb38] sm:$0xff]
    %v542 = vld [vmem:[#allocation8 + $0xb40] sm:$0xff]
    %v543 = vld [vmem:[#allocation8 + $0xb48] sm:$0xff]
    %v544 = vld [vmem:[#allocation8 + $0xb50] sm:$0xff]
    %v545 = vld [vmem:[#allocation8 + $0xb58] sm:$0xff]
    %v546 = vld [vmem:[#allocation8 + $0xb60] sm:$0xff]
    %v547 = vld [vmem:[#allocation8 + $0xb68] sm:$0xff]
    %v548 = vld [vmem:[#allocation8 + $0xb70] sm:$0xff]
    %v549 = vld [vmem:[#allocation8 + $0xb78] sm:$0xff]
    %v550 = vld [vmem:[#allocation8 + $0xb80] sm:$0xff]
    %v551 = vld [vmem:[#allocation8 + $0xb88] sm:$0xff]
    %v552 = vld [vmem:[#allocation8 + $0xb90] sm:$0xff]
    %v553 = vld [vmem:[#allocation8 + $0xb98] sm:$0xff]
    %v554 = vld [vmem:[#allocation8 + $0xba0] sm:$0xff]
    %v555 = vld [vmem:[#allocation8 + $0xba8] sm:$0xff]
    %v556 = vld [vmem:[#allocation8 + $0xbb0] sm:$0xff]
    %v557 = vld [vmem:[#allocation8 + $0xbb8] sm:$0xff]
    %v558 = vld [vmem:[#allocation8 + $0xbc0] sm:$0xff]
    %v559 = vld [vmem:[#allocation8 + $0xbc8] sm:$0xff]
    %v560 = vld [vmem:[#allocation8 + $0xbd0] sm:$0xff]
    %v561 = vld [vmem:[#allocation8 + $0xbd8] sm:$0xff]
    %v562 = vld [vmem:[#allocation8 + $0xbe0] sm:$0xff]
    %v563 = vld [vmem:[#allocation8 + $0xbe8] sm:$0xff]
    %v564 = vld [vmem:[#allocation8 + $0xbf0] sm:$0xff]
    %v565 = vld [vmem:[#allocation8 + $0xbf8] sm:$0xff]
    %v566 = vld [vmem:[#allocation8 + $0xc00] sm:$0xff]
    %v567 = vld [vmem:[#allocation8 + $0xc08] sm:$0xff]
    %v568 = vld [vmem:[#allocation8 + $0xc10] sm:$0xff]
    %v569 = vld [vmem:[#allocation8 + $0xc18] sm:$0xff]
    %v570 = vld [vmem:[#allocation8 + $0xc20] sm:$0xff]
    %v571 = vld [vmem:[#allocation8 + $0xc28] sm:$0xff]
    %v572 = vld [vmem:[#allocation8 + $0xc30] sm:$0xff]
    %v573 = vld [vmem:[#allocation8 + $0xc38] sm:$0xff]
    %v574 = vld [vmem:[#allocation8 + $0xc40] sm:$0xff]
    %v575 = vld [vmem:[#allocation8 + $0xc48] sm:$0xff]
    %v576 = vld [vmem:[#allocation8 + $0xc50] sm:$0xff]
    %v577 = vld [vmem:[#allocation8 + $0xc58] sm:$0xff]
    %v578 = vld [vmem:[#allocation8 + $0xc60] sm:$0xff]
    %v579 = vld [vmem:[#allocation8 + $0xc68] sm:$0xff]
    %v580 = vld [vmem:[#allocation8 + $0xc70] sm:$0xff]
    %v581 = vld [vmem:[#allocation8 + $0xc78] sm:$0xff]
    %v582 = vld [vmem:[#allocation8 + $0xc80] sm:$0xff]
    %v583 = vld [vmem:[#allocation8 + $0xc88] sm:$0xff]
    %v584 = vld [vmem:[#allocation8 + $0xc90] sm:$0xff]
    %v585 = vld [vmem:[#allocation8 + $0xc98] sm:$0xff]
    %v586 = vld [vmem:[#allocation8 + $0xca0] sm:$0xff]
    %v587 = vld [vmem:[#allocation8 + $0xca8] sm:$0xff]
    %v588 = vld [vmem:[#allocation8 + $0xcb0] sm:$0xff]
    %v589 = vld [vmem:[#allocation8 + $0xcb8] sm:$0xff]
    %v590 = vld [vmem:[#allocation8 + $0xcc0] sm:$0xff]
    %v591 = vld [vmem:[#allocation8 + $0xcc8] sm:$0xff]
    %v592 = vld [vmem:[#allocation8 + $0xcd0] sm:$0xff]
    %v593 = vld [vmem:[#allocation8 + $0xcd8] sm:$0xff]
    %v594 = vld [vmem:[#allocation8 + $0xce0] sm:$0xff]
    %v595 = vld [vmem:[#allocation8 + $0xce8] sm:$0xff]
    %v596 = vld [vmem:[#allocation8 + $0xcf0] sm:$0xff]
    %v597 = vld [vmem:[#allocation8 + $0xcf8] sm:$0xff]
    %v598 = vld [vmem:[#allocation8 + $0xd00] sm:$0xff]
    %v599 = vld [vmem:[#allocation8 + $0xd08] sm:$0xff]
    %v600 = vld [vmem:[#allocation8 + $0xd10] sm:$0xff]
    %v601 = vld [vmem:[#allocation8 + $0xd18] sm:$0xff]
    %v602 = vld [vmem:[#allocation8 + $0xd20] sm:$0xff]
    %v603 = vld [vmem:[#allocation8 + $0xd28] sm:$0xff]
    %v604 = vld [vmem:[#allocation8 + $0xd30] sm:$0xff]
    %v605 = vld [vmem:[#allocation8 + $0xd38] sm:$0xff]
    %v606 = vld [vmem:[#allocation8 + $0xd40] sm:$0xff]
    %v607 = vld [vmem:[#allocation8 + $0xd48] sm:$0xff]
    %v608 = vld [vmem:[#allocation8 + $0xd50] sm:$0xff]
    %v609 = vld [vmem:[#allocation8 + $0xd58] sm:$0xff]
    %v610 = vld [vmem:[#allocation8 + $0xd60] sm:$0xff]
    %v611 = vld [vmem:[#allocation8 + $0xd68] sm:$0xff]
    %v612 = vld [vmem:[#allocation8 + $0xd70] sm:$0xff]
    %v613 = vld [vmem:[#allocation8 + $0xd78] sm:$0xff]
    %v614 = vld [vmem:[#allocation8 + $0xd80] sm:$0xff]
    %v615 = vld [vmem:[#allocation8 + $0xd88] sm:$0xff]
    %v616 = vld [vmem:[#allocation8 + $0xd90] sm:$0xff]
    %v617 = vld [vmem:[#allocation8 + $0xd98] sm:$0xff]
    %v618 = vld [vmem:[#allocation8 + $0xda0] sm:$0xff]
    %v619 = vld [vmem:[#allocation8 + $0xda8] sm:$0xff]
    %v620 = vld [vmem:[#allocation8 + $0xdb0] sm:$0xff]
    %v621 = vld [vmem:[#allocation8 + $0xdb8] sm:$0xff]
    %v622 = vld [vmem:[#allocation8 + $0xdc0] sm:$0xff]
    %v623 = vld [vmem:[#allocation8 + $0xdc8] sm:$0xff]
    %v624 = vld [vmem:[#allocation8 + $0xdd0] sm:$0xff]
    %v625 = vld [vmem:[#allocation8 + $0xdd8] sm:$0xff]
    %v626 = vld [vmem:[#allocation8 + $0xde0] sm:$0xff]
    %v627 = vld [vmem:[#allocation8 + $0xde8] sm:$0xff]
    %v628 = vld [vmem:[#allocation8 + $0xdf0] sm:$0xff]
    %v629 = vld [vmem:[#allocation8 + $0xdf8] sm:$0xff]
    %v630 = vld [vmem:[#allocation8 + $0xe00] sm:$0xff]
    %v631 = vld [vmem:[#allocation8 + $0xe08] sm:$0xff]
    %v632 = vld [vmem:[#allocation8 + $0xe10] sm:$0xff]
    %v633 = vld [vmem:[#allocation8 + $0xe18] sm:$0xff]
    %v634 = vld [vmem:[#allocation8 + $0xe20] sm:$0xff]
    %v635 = vld [vmem:[#allocation8 + $0xe28] sm:$0xff]
    %v636 = vld [vmem:[#allocation8 + $0xe30] sm:$0xff]
    %v637 = vld [vmem:[#allocation8 + $0xe38] sm:$0xff]
    %v638 = vld [vmem:[#allocation8 + $0xe40] sm:$0xff]
    %v639 = vld [vmem:[#allocation8 + $0xe48] sm:$0xff]
    %v640 = vld [vmem:[#allocation8 + $0xe50] sm:$0xff]
    %v641 = vld [vmem:[#allocation8 + $0xe58] sm:$0xff]
    %v642 = vld [vmem:[#allocation8 + $0xe60] sm:$0xff]
    %v643 = vld [vmem:[#allocation8 + $0xe68] sm:$0xff]
    %v644 = vld [vmem:[#allocation8 + $0xe70] sm:$0xff]
    %v645 = vld [vmem:[#allocation8 + $0xe78] sm:$0xff]
    %v646 = vld [vmem:[#allocation8 + $0xe80] sm:$0xff]
    %v647 = vld [vmem:[#allocation8 + $0xe88] sm:$0xff]
    %v648 = vld [vmem:[#allocation8 + $0xe90] sm:$0xff]
    %v649 = vld [vmem:[#allocation8 + $0xe98] sm:$0xff]
    %v650 = vld [vmem:[#allocation8 + $0xea0] sm:$0xff]
    %v651 = vld [vmem:[#allocation8 + $0xea8] sm:$0xff]
    %v652 = vld [vmem:[#allocation8 + $0xeb0] sm:$0xff]
    %v653 = vld [vmem:[#allocation8 + $0xeb8] sm:$0xff]
    %v654 = vld [vmem:[#allocation8 + $0xec0] sm:$0xff]
    %v655 = vld [vmem:[#allocation8 + $0xec8] sm:$0xff]
    %v656 = vld [vmem:[#allocation8 + $0xed0] sm:$0xff]
    %v657 = vld [vmem:[#allocation8 + $0xed8] sm:$0xff]
    %v658 = vld [vmem:[#allocation8 + $0xee0] sm:$0xff]
    %v659 = vld [vmem:[#allocation8 + $0xee8] sm:$0xff]
    %v660 = vld [vmem:[#allocation8 + $0xef0] sm:$0xff]
    %v661 = vld [vmem:[#allocation8 + $0xef8] sm:$0xff]
    %v662 = vld [vmem:[#allocation8 + $0xf00] sm:$0xff]
    %v663 = vld [vmem:[#allocation8 + $0xf08] sm:$0xff]
    %v664 = vld [vmem:[#allocation8 + $0xf10] sm:$0xff]
    %v665 = vld [vmem:[#allocation8 + $0xf18] sm:$0xff]
    %v666 = vld [vmem:[#allocation8 + $0xf20] sm:$0xff]
    %v667 = vld [vmem:[#allocation8 + $0xf28] sm:$0xff]
    %v668 = vld [vmem:[#allocation8 + $0xf30] sm:$0xff]
    %v669 = vld [vmem:[#allocation8 + $0xf38] sm:$0xff]
    %v670 = vld [vmem:[#allocation8 + $0xf40] sm:$0xff]
    %v671 = vld [vmem:[#allocation8 + $0xf48] sm:$0xff]
    %v672 = vld [vmem:[#allocation8 + $0xf50] sm:$0xff]
    %v673 = vld [vmem:[#allocation8 + $0xf58] sm:$0xff]
    %v674 = vld [vmem:[#allocation8 + $0xf60] sm:$0xff]
    %v675 = vld [vmem:[#allocation8 + $0xf68] sm:$0xff]
    %v676 = vld [vmem:[#allocation8 + $0xf70] sm:$0xff]
    %v677 = vld [vmem:[#allocation8 + $0xf78] sm:$0xff]
    %v678 = vld [vmem:[#allocation8 + $0xf80] sm:$0xff]
    %v679 = vld [vmem:[#allocation8 + $0xf88] sm:$0xff]
    %v680 = vld [vmem:[#allocation8 + $0xf90] sm:$0xff]
    %v681 = vld [vmem:[#allocation8 + $0xf98] sm:$0xff]
    %v682 = vld [vmem:[#allocation8 + $0xfa0] sm:$0xff]
    %v683 = vld [vmem:[#allocation8 + $0xfa8] sm:$0xff]
    %v684 = vld [vmem:[#allocation8 + $0xfb0] sm:$0xff]
    %v685 = vld [vmem:[#allocation8 + $0xfb8] sm:$0xff]
    %v686 = vld [vmem:[#allocation8 + $0xfc0] sm:$0xff]
    %v687 = vld [vmem:[#allocation8 + $0xfc8] sm:$0xff]
    %v688 = vld [vmem:[#allocation8 + $0xfd0] sm:$0xff]
    %v689 = vld [vmem:[#allocation8 + $0xfd8] sm:$0xff]
    %v690 = vld [vmem:[#allocation8 + $0xfe0] sm:$0xff]
    %v691 = vld [vmem:[#allocation8 + $0xfe8] sm:$0xff]
    %v692 = vld [vmem:[#allocation8 + $0xff0] sm:$0xff]
    %v693 = vld [vmem:[#allocation8 + $0xff8] sm:$0xff]
    %v694 = vld [vmem:[#allocation8 + $0x1000] sm:$0xff]
    %v695 = vld [vmem:[#allocation8 + $0x1008] sm:$0xff]
    %v696 = vld [vmem:[#allocation8 + $0x1010] sm:$0xff]
    %v697 = vld [vmem:[#allocation8 + $0x1018] sm:$0xff]
    %v698 = vld [vmem:[#allocation8 + $0x1020] sm:$0xff]
    %v699 = vld [vmem:[#allocation8 + $0x1028] sm:$0xff]
    %v700 = vld [vmem:[#allocation8 + $0x1030] sm:$0xff]
    %v701 = vld [vmem:[#allocation8 + $0x1038] sm:$0xff]
    %v702 = vld [vmem:[#allocation8 + $0x1040] sm:$0xff]
    %v703 = vld [vmem:[#allocation8 + $0x1048] sm:$0xff]
    %v704 = vld [vmem:[#allocation8 + $0x1050] sm:$0xff]
    %v705 = vld [vmem:[#allocation8 + $0x1058] sm:$0xff]
    %v706 = vld [vmem:[#allocation8 + $0x1060] sm:$0xff]
    %v707 = vld [vmem:[#allocation8 + $0x1068] sm:$0xff]
    %v708 = vld [vmem:[#allocation8 + $0x1070] sm:$0xff]
    %v709 = vld [vmem:[#allocation8 + $0x1078] sm:$0xff]
    %v710 = vld [vmem:[#allocation8 + $0x1080] sm:$0xff]
    %v711 = vld [vmem:[#allocation8 + $0x1088] sm:$0xff]
    %v712 = vld [vmem:[#allocation8 + $0x1090] sm:$0xff]
    %v713 = vld [vmem:[#allocation8 + $0x1098] sm:$0xff]
    %v714 = vld [vmem:[#allocation8 + $0x10a0] sm:$0xff]
    %v715 = vld [vmem:[#allocation8 + $0x10a8] sm:$0xff]
    %v716 = vld [vmem:[#allocation8 + $0x10b0] sm:$0xff]
    %v717 = vld [vmem:[#allocation8 + $0x10b8] sm:$0xff]
    %v718 = vld [vmem:[#allocation8 + $0x10c0] sm:$0xff]
    %v719 = vld [vmem:[#allocation8 + $0x10c8] sm:$0xff]
    %v720 = vld [vmem:[#allocation8 + $0x10d0] sm:$0xff]
    %v721 = vld [vmem:[#allocation8 + $0x10d8] sm:$0xff]
    %v722 = vld [vmem:[#allocation8 + $0x10e0] sm:$0xff]
    %v723 = vld [vmem:[#allocation8 + $0x10e8] sm:$0xff]
    %v724 = vld [vmem:[#allocation8 + $0x10f0] sm:$0xff]
    %v725 = vld [vmem:[#allocation8 + $0x10f8] sm:$0xff]
    %v726 = vld [vmem:[#allocation8 + $0x1100] sm:$0xff]
    %v727 = vld [vmem:[#allocation8 + $0x1108] sm:$0xff]
    %v728 = vld [vmem:[#allocation8 + $0x1110] sm:$0xff]
    %v729 = vld [vmem:[#allocation8 + $0x1118] sm:$0xff]
    %v730 = vld [vmem:[#allocation8 + $0x1120] sm:$0xff]
    %v731 = vld [vmem:[#allocation8 + $0x1128] sm:$0xff]
    %v732 = vld [vmem:[#allocation8 + $0x1130] sm:$0xff]
    %v733 = vld [vmem:[#allocation8 + $0x1138] sm:$0xff]
    %v734 = vld [vmem:[#allocation8 + $0x1140] sm:$0xff]
    %v735 = vld [vmem:[#allocation8 + $0x1148] sm:$0xff]
    %v736 = vld [vmem:[#allocation8 + $0x1150] sm:$0xff]
    %v737 = vld [vmem:[#allocation8 + $0x1158] sm:$0xff]
    %v738 = vld [vmem:[#allocation8 + $0x1160] sm:$0xff]
    %v739 = vld [vmem:[#allocation8 + $0x1168] sm:$0xff]
    %v740 = vld [vmem:[#allocation8 + $0x1170] sm:$0xff]
    %v741 = vld [vmem:[#allocation8 + $0x1178] sm:$0xff]
    %v742 = vld [vmem:[#allocation8 + $0x1180] sm:$0xff]
    %v743 = vld [vmem:[#allocation8 + $0x1188] sm:$0xff]
    %v744 = vld [vmem:[#allocation8 + $0x1190] sm:$0xff]
    %v745 = vld [vmem:[#allocation8 + $0x1198] sm:$0xff]
    %v746 = vld [vmem:[#allocation8 + $0x11a0] sm:$0xff]
    %v747 = vld [vmem:[#allocation8 + $0x11a8] sm:$0xff]
    %v748 = vld [vmem:[#allocation8 + $0x11b0] sm:$0xff]
    %v749 = vld [vmem:[#allocation8 + $0x11b8] sm:$0xff]
    %v750 = vld [vmem:[#allocation8 + $0x11c0] sm:$0xff]
    %v751 = vld [vmem:[#allocation8 + $0x11c8] sm:$0xff]
    %v752 = vld [vmem:[#allocation8 + $0x11d0] sm:$0xff]
    %v753 = vld [vmem:[#allocation8 + $0x11d8] sm:$0xff]
    %v754 = vld [vmem:[#allocation8 + $0x11e0] sm:$0xff]
    %v755 = vld [vmem:[#allocation8 + $0x11e8] sm:$0xff]
    %v756 = vld [vmem:[#allocation8 + $0x11f0] sm:$0xff]
    %v757 = vld [vmem:[#allocation8 + $0x11f8] sm:$0xff]
    %v758 = vld [vmem:[#allocation10] sm:$0xff]
    %v759 = vld [vmem:[#allocation10 + $0x8] sm:$0xff]
    %v760 = vld [vmem:[#allocation10 + $0x10] sm:$0xff]
    %v764 = vlaneseq
    %v765 = vshrl.u32 %v764, 7
    %v766 = vsub.s32 0, %v765
    %v767 = vrot.slane %v758, %v766
    %v768 = vlaneseq
    %v769 = vshrl.u32 %v768, 7
    %v770 = vsub.s32 1, %v769
    %v771 = vrot.slane %v758, %v770
    %v772 = vlaneseq
    %v773 = vshrl.u32 %v772, 7
    %v774 = vsub.s32 2, %v773
    %v775 = vrot.slane %v758, %v774
    %v776 = vlaneseq
    %v777 = vshrl.u32 %v776, 7
    %v778 = vsub.s32 3, %v777
    %v779 = vrot.slane %v758, %v778
    %v780 = vlaneseq
    %v781 = vshrl.u32 %v780, 7
    %v782 = vsub.s32 4, %v781
    %v783 = vrot.slane %v758, %v782
    %v784 = vlaneseq
    %v785 = vshrl.u32 %v784, 7
    %v786 = vsub.s32 5, %v785
    %v787 = vrot.slane %v758, %v786
    %v788 = vlaneseq
    %v789 = vshrl.u32 %v788, 7
    %v790 = vsub.s32 6, %v789
    %v791 = vrot.slane %v758, %v790
    %v792 = vlaneseq
    %v793 = vshrl.u32 %v792, 7
    %v794 = vsub.s32 7, %v793
    %v795 = vrot.slane %v758, %v794
    %v796 = vlaneseq
    %v797 = vshrl.u32 %v796, 7
    %v798 = vsub.s32 0, %v797
    %v799 = vrot.slane %v759, %v798
    %v800 = vlaneseq
    %v801 = vshrl.u32 %v800, 7
    %v802 = vsub.s32 1, %v801
    %v803 = vrot.slane %v759, %v802
    %v804 = vlaneseq
    %v805 = vshrl.u32 %v804, 7
    %v806 = vsub.s32 2, %v805
    %v807 = vrot.slane %v759, %v806
    %v808 = vlaneseq
    %v809 = vshrl.u32 %v808, 7
    %v810 = vsub.s32 3, %v809
    %v811 = vrot.slane %v759, %v810
    %v812 = vlaneseq
    %v813 = vshrl.u32 %v812, 7
    %v814 = vsub.s32 4, %v813
    %v815 = vrot.slane %v759, %v814
    %v816 = vlaneseq
    %v817 = vshrl.u32 %v816, 7
    %v818 = vsub.s32 5, %v817
    %v819 = vrot.slane %v759, %v818
    %v820 = vlaneseq
    %v821 = vshrl.u32 %v820, 7
    %v822 = vsub.s32 6, %v821
    %v823 = vrot.slane %v759, %v822
    %v824 = vlaneseq
    %v825 = vshrl.u32 %v824, 7
    %v826 = vsub.s32 7, %v825
    %v827 = vrot.slane %v759, %v826
    %v828 = vlaneseq
    %v829 = vshrl.u32 %v828, 7
    %v830 = vsub.s32 0, %v829
    %v831 = vrot.slane %v760, %v830
    %v832 = vlaneseq
    %v833 = vshrl.u32 %v832, 7
    %v834 = vsub.s32 1, %v833
    %v835 = vrot.slane %v760, %v834
    %v836 = vlaneseq
    %v837 = vshrl.u32 %v836, 7
    %v838 = vsub.s32 2, %v837
    %v839 = vrot.slane %v760, %v838
    %v840 = vlaneseq
    %v841 = vshrl.u32 %v840, 7
    %v842 = vsub.s32 3, %v841
    %v843 = vrot.slane %v760, %v842
    %v844 = vlaneseq
    %v845 = vshrl.u32 %v844, 7
    %v846 = vsub.s32 4, %v845
    %v847 = vrot.slane %v760, %v846
    %v848 = vlaneseq
    %v849 = vshrl.u32 %v848, 7
    %v850 = vsub.s32 5, %v849
    %v851 = vrot.slane %v760, %v850
    %v852 = vlaneseq
    %v853 = vshrl.u32 %v852, 7
    %v854 = vsub.s32 6, %v853
    %v855 = vrot.slane %v760, %v854
    %v856 = vlaneseq
    %v857 = vshrl.u32 %v856, 7
    %v858 = vsub.s32 7, %v857
    %v859 = vrot.slane %v760, %v858
    %v1460 = vunpack.c.l.b16 %v182
    %v1461 = vunpack.c.h.b16 %v182
    %v1462 = vunpack.c.l.b16 %v183
    %v1463 = vunpack.c.h.b16 %v183
    %v1464 = vunpack.c.l.b16 %v184
    %v1465 = vunpack.c.h.b16 %v184
    %v1466 = vunpack.c.l.b16 %v185
    %v1467 = vunpack.c.h.b16 %v185
    %v1468 = vunpack.c.l.b16 %v186
    %v1469 = vunpack.c.h.b16 %v186
    %v1470 = vunpack.c.l.b16 %v187
    %v1471 = vunpack.c.h.b16 %v187
    %v1472 = vunpack.c.l.b16 %v188
    %v1473 = vunpack.c.h.b16 %v188
    %v1474 = vunpack.c.l.b16 %v189
    %v1475 = vunpack.c.h.b16 %v189
    %v1476 = vunpack.c.l.b16 %v190
    %v1477 = vunpack.c.h.b16 %v190
    %v1478 = vunpack.c.l.b16 %v191
    %v1479 = vunpack.c.h.b16 %v191
    %v1480 = vunpack.c.l.b16 %v192
    %v1481 = vunpack.c.h.b16 %v192
    %v1482 = vunpack.c.l.b16 %v193
    %v1483 = vunpack.c.h.b16 %v193
    %v1484 = vunpack.c.l.b16 %v194
    %v1485 = vunpack.c.h.b16 %v194
    %v1486 = vunpack.c.l.b16 %v195
    %v1487 = vunpack.c.h.b16 %v195
    %v1488 = vunpack.c.l.b16 %v196
    %v1489 = vunpack.c.h.b16 %v196
    %v1490 = vunpack.c.l.b16 %v197
    %v1491 = vunpack.c.h.b16 %v197
    %v1492 = vunpack.c.l.b16 %v198
    %v1493 = vunpack.c.h.b16 %v198
    %v1494 = vunpack.c.l.b16 %v199
    %v1495 = vunpack.c.h.b16 %v199
    %v1496 = vunpack.c.l.b16 %v200
    %v1497 = vunpack.c.h.b16 %v200
    %v1498 = vunpack.c.l.b16 %v201
    %v1499 = vunpack.c.h.b16 %v201
    %v1500 = vunpack.c.l.b16 %v202
    %v1501 = vunpack.c.h.b16 %v202
    %v1502 = vunpack.c.l.b16 %v203
    %v1503 = vunpack.c.h.b16 %v203
    %v1504 = vunpack.c.l.b16 %v204
    %v1505 = vunpack.c.h.b16 %v204
    %v1506 = vunpack.c.l.b16 %v205
    %v1507 = vunpack.c.h.b16 %v205
    %v1508 = vunpack.c.l.b16 %v206
    %v1509 = vunpack.c.h.b16 %v206
    %v1510 = vunpack.c.l.b16 %v207
    %v1511 = vunpack.c.h.b16 %v207
    %v1512 = vunpack.c.l.b16 %v208
    %v1513 = vunpack.c.h.b16 %v208
    %v1514 = vunpack.c.l.b16 %v209
    %v1515 = vunpack.c.h.b16 %v209
    %v1516 = vunpack.c.l.b16 %v210
    %v1517 = vunpack.c.h.b16 %v210
    %v1518 = vunpack.c.l.b16 %v211
    %v1519 = vunpack.c.h.b16 %v211
    %v1520 = vunpack.c.l.b16 %v212
    %v1521 = vunpack.c.h.b16 %v212
    %v1522 = vunpack.c.l.b16 %v213
    %v1523 = vunpack.c.h.b16 %v213
    %v1524 = vunpack.c.l.b16 %v214
    %v1525 = vunpack.c.h.b16 %v214
    %v1526 = vunpack.c.l.b16 %v215
    %v1527 = vunpack.c.h.b16 %v215
    %v1528 = vunpack.c.l.b16 %v216
    %v1529 = vunpack.c.h.b16 %v216
    %v1530 = vunpack.c.l.b16 %v217
    %v1531 = vunpack.c.h.b16 %v217
    %v1532 = vunpack.c.l.b16 %v218
    %v1533 = vunpack.c.h.b16 %v218
    %v1534 = vunpack.c.l.b16 %v219
    %v1535 = vunpack.c.h.b16 %v219
    %v1536 = vunpack.c.l.b16 %v220
    %v1537 = vunpack.c.h.b16 %v220
    %v1538 = vunpack.c.l.b16 %v221
    %v1539 = vunpack.c.h.b16 %v221
    %v1540 = vunpack.c.l.b16 %v222
    %v1541 = vunpack.c.h.b16 %v222
    %v1542 = vunpack.c.l.b16 %v223
    %v1543 = vunpack.c.h.b16 %v223
    %v1544 = vunpack.c.l.b16 %v224
    %v1545 = vunpack.c.h.b16 %v224
    %v1546 = vunpack.c.l.b16 %v225
    %v1547 = vunpack.c.h.b16 %v225
    %v1548 = vunpack.c.l.b16 %v226
    %v1549 = vunpack.c.h.b16 %v226
    %v1550 = vunpack.c.l.b16 %v227
    %v1551 = vunpack.c.h.b16 %v227
    %v1552 = vunpack.c.l.b16 %v228
    %v1553 = vunpack.c.h.b16 %v228
    %v1554 = vunpack.c.l.b16 %v229
    %v1555 = vunpack.c.h.b16 %v229
    %v1556 = vunpack.c.l.b16 %v230
    %v1557 = vunpack.c.h.b16 %v230
    %v1558 = vunpack.c.l.b16 %v231
    %v1559 = vunpack.c.h.b16 %v231
    %v1560 = vunpack.c.l.b16 %v232
    %v1561 = vunpack.c.h.b16 %v232
    %v1562 = vunpack.c.l.b16 %v233
    %v1563 = vunpack.c.h.b16 %v233
    %v1564 = vunpack.c.l.b16 %v234
    %v1565 = vunpack.c.h.b16 %v234
    %v1566 = vunpack.c.l.b16 %v235
    %v1567 = vunpack.c.h.b16 %v235
    %v1568 = vunpack.c.l.b16 %v236
    %v1569 = vunpack.c.h.b16 %v236
    %v1570 = vunpack.c.l.b16 %v237
    %v1571 = vunpack.c.h.b16 %v237
    %v1572 = vunpack.c.l.b16 %v238
    %v1573 = vunpack.c.h.b16 %v238
    %v1574 = vunpack.c.l.b16 %v239
    %v1575 = vunpack.c.h.b16 %v239
    %v1576 = vunpack.c.l.b16 %v240
    %v1577 = vunpack.c.h.b16 %v240
    %v1578 = vunpack.c.l.b16 %v241
    %v1579 = vunpack.c.h.b16 %v241
    %v1580 = vunpack.c.l.b16 %v242
    %v1581 = vunpack.c.h.b16 %v242
    %v1582 = vunpack.c.l.b16 %v243
    %v1583 = vunpack.c.h.b16 %v243
    %v1584 = vunpack.c.l.b16 %v244
    %v1585 = vunpack.c.h.b16 %v244
    %v1586 = vunpack.c.l.b16 %v245
    %v1587 = vunpack.c.h.b16 %v245
    %v1588 = vunpack.c.l.b16 %v246
    %v1589 = vunpack.c.h.b16 %v246
    %v1590 = vunpack.c.l.b16 %v247
    %v1591 = vunpack.c.h.b16 %v247
    %v1592 = vunpack.c.l.b16 %v248
    %v1593 = vunpack.c.h.b16 %v248
    %v1594 = vunpack.c.l.b16 %v249
    %v1595 = vunpack.c.h.b16 %v249
    %v1596 = vunpack.c.l.b16 %v250
    %v1597 = vunpack.c.h.b16 %v250
    %v1598 = vunpack.c.l.b16 %v251
    %v1599 = vunpack.c.h.b16 %v251
    %v1600 = vunpack.c.l.b16 %v252
    %v1601 = vunpack.c.h.b16 %v252
    %v1602 = vunpack.c.l.b16 %v253
    %v1603 = vunpack.c.h.b16 %v253
    %v1604 = vunpack.c.l.b16 %v254
    %v1605 = vunpack.c.h.b16 %v254
    %v1606 = vunpack.c.l.b16 %v255
    %v1607 = vunpack.c.h.b16 %v255
    %v1608 = vunpack.c.l.b16 %v256
    %v1609 = vunpack.c.h.b16 %v256
    %v1610 = vunpack.c.l.b16 %v257
    %v1611 = vunpack.c.h.b16 %v257
    %v1612 = vunpack.c.l.b16 %v258
    %v1613 = vunpack.c.h.b16 %v258
    %v1614 = vunpack.c.l.b16 %v259
    %v1615 = vunpack.c.h.b16 %v259
    %v1616 = vunpack.c.l.b16 %v260
    %v1617 = vunpack.c.h.b16 %v260
    %v1618 = vunpack.c.l.b16 %v261
    %v1619 = vunpack.c.h.b16 %v261
    %v1620 = vunpack.c.l.b16 %v262
    %v1621 = vunpack.c.h.b16 %v262
    %v1622 = vunpack.c.l.b16 %v263
    %v1623 = vunpack.c.h.b16 %v263
    %v1624 = vunpack.c.l.b16 %v264
    %v1625 = vunpack.c.h.b16 %v264
    %v1626 = vunpack.c.l.b16 %v265
    %v1627 = vunpack.c.h.b16 %v265
    %v1628 = vunpack.c.l.b16 %v266
    %v1629 = vunpack.c.h.b16 %v266
    %v1630 = vunpack.c.l.b16 %v267
    %v1631 = vunpack.c.h.b16 %v267
    %v1632 = vunpack.c.l.b16 %v268
    %v1633 = vunpack.c.h.b16 %v268
    %v1634 = vunpack.c.l.b16 %v269
    %v1635 = vunpack.c.h.b16 %v269
    %v1636 = vunpack.c.l.b16 %v270
    %v1637 = vunpack.c.h.b16 %v270
    %v1638 = vunpack.c.l.b16 %v271
    %v1639 = vunpack.c.h.b16 %v271
    %v1640 = vunpack.c.l.b16 %v272
    %v1641 = vunpack.c.h.b16 %v272
    %v1642 = vunpack.c.l.b16 %v273
    %v1643 = vunpack.c.h.b16 %v273
    %v1644 = vunpack.c.l.b16 %v274
    %v1645 = vunpack.c.h.b16 %v274
    %v1646 = vunpack.c.l.b16 %v275
    %v1647 = vunpack.c.h.b16 %v275
    %v1648 = vunpack.c.l.b16 %v276
    %v1649 = vunpack.c.h.b16 %v276
    %v1650 = vunpack.c.l.b16 %v277
    %v1651 = vunpack.c.h.b16 %v277
    %v1652 = vunpack.c.l.b16 %v278
    %v1653 = vunpack.c.h.b16 %v278
    %v1654 = vunpack.c.l.b16 %v279
    %v1655 = vunpack.c.h.b16 %v279
    %v1656 = vunpack.c.l.b16 %v280
    %v1657 = vunpack.c.h.b16 %v280
    %v1658 = vunpack.c.l.b16 %v281
    %v1659 = vunpack.c.h.b16 %v281
    %v1660 = vunpack.c.l.b16 %v282
    %v1661 = vunpack.c.h.b16 %v282
    %v1662 = vunpack.c.l.b16 %v283
    %v1663 = vunpack.c.h.b16 %v283
    %v1664 = vunpack.c.l.b16 %v284
    %v1665 = vunpack.c.h.b16 %v284
    %v1666 = vunpack.c.l.b16 %v285
    %v1667 = vunpack.c.h.b16 %v285
    %v1668 = vunpack.c.l.b16 %v286
    %v1669 = vunpack.c.h.b16 %v286
    %v1670 = vunpack.c.l.b16 %v287
    %v1671 = vunpack.c.h.b16 %v287
    %v1672 = vunpack.c.l.b16 %v288
    %v1673 = vunpack.c.h.b16 %v288
    %v1674 = vunpack.c.l.b16 %v289
    %v1675 = vunpack.c.h.b16 %v289
    %v1676 = vunpack.c.l.b16 %v290
    %v1677 = vunpack.c.h.b16 %v290
    %v1678 = vunpack.c.l.b16 %v291
    %v1679 = vunpack.c.h.b16 %v291
    %v1680 = vunpack.c.l.b16 %v292
    %v1681 = vunpack.c.h.b16 %v292
    %v1682 = vunpack.c.l.b16 %v293
    %v1683 = vunpack.c.h.b16 %v293
    %v1684 = vunpack.c.l.b16 %v294
    %v1685 = vunpack.c.h.b16 %v294
    %v1686 = vunpack.c.l.b16 %v295
    %v1687 = vunpack.c.h.b16 %v295
    %v1688 = vunpack.c.l.b16 %v296
    %v1689 = vunpack.c.h.b16 %v296
    %v1690 = vunpack.c.l.b16 %v297
    %v1691 = vunpack.c.h.b16 %v297
    %v1692 = vunpack.c.l.b16 %v298
    %v1693 = vunpack.c.h.b16 %v298
    %v1694 = vunpack.c.l.b16 %v299
    %v1695 = vunpack.c.h.b16 %v299
    %v1696 = vunpack.c.l.b16 %v300
    %v1697 = vunpack.c.h.b16 %v300
    %v1698 = vunpack.c.l.b16 %v301
    %v1699 = vunpack.c.h.b16 %v301
    %v1700 = vunpack.c.l.b16 %v302
    %v1701 = vunpack.c.h.b16 %v302
    %v1702 = vunpack.c.l.b16 %v303
    %v1703 = vunpack.c.h.b16 %v303
    %v1704 = vunpack.c.l.b16 %v304
    %v1705 = vunpack.c.h.b16 %v304
    %v1706 = vunpack.c.l.b16 %v305
    %v1707 = vunpack.c.h.b16 %v305
    %v1708 = vunpack.c.l.b16 %v306
    %v1709 = vunpack.c.h.b16 %v306
    %v1710 = vunpack.c.l.b16 %v307
    %v1711 = vunpack.c.h.b16 %v307
    %v1712 = vunpack.c.l.b16 %v308
    %v1713 = vunpack.c.h.b16 %v308
    %v1714 = vunpack.c.l.b16 %v309
    %v1715 = vunpack.c.h.b16 %v309
    %v1716 = vunpack.c.l.b16 %v310
    %v1717 = vunpack.c.h.b16 %v310
    %v1718 = vunpack.c.l.b16 %v311
    %v1719 = vunpack.c.h.b16 %v311
    %v1720 = vunpack.c.l.b16 %v312
    %v1721 = vunpack.c.h.b16 %v312
    %v1722 = vunpack.c.l.b16 %v313
    %v1723 = vunpack.c.h.b16 %v313
    %v1724 = vunpack.c.l.b16 %v314
    %v1725 = vunpack.c.h.b16 %v314
    %v1726 = vunpack.c.l.b16 %v315
    %v1727 = vunpack.c.h.b16 %v315
    %v1728 = vunpack.c.l.b16 %v316
    %v1729 = vunpack.c.h.b16 %v316
    %v1730 = vunpack.c.l.b16 %v317
    %v1731 = vunpack.c.h.b16 %v317
    %v1732 = vunpack.c.l.b16 %v318
    %v1733 = vunpack.c.h.b16 %v318
    %v1734 = vunpack.c.l.b16 %v319
    %v1735 = vunpack.c.h.b16 %v319
    %v1736 = vunpack.c.l.b16 %v320
    %v1737 = vunpack.c.h.b16 %v320
    %v1738 = vunpack.c.l.b16 %v321
    %v1739 = vunpack.c.h.b16 %v321
    %v1740 = vunpack.c.l.b16 %v322
    %v1741 = vunpack.c.h.b16 %v322
    %v1742 = vunpack.c.l.b16 %v323
    %v1743 = vunpack.c.h.b16 %v323
    %v1744 = vunpack.c.l.b16 %v324
    %v1745 = vunpack.c.h.b16 %v324
    %v1746 = vunpack.c.l.b16 %v325
    %v1747 = vunpack.c.h.b16 %v325
    %v1748 = vunpack.c.l.b16 %v326
    %v1749 = vunpack.c.h.b16 %v326
    %v1750 = vunpack.c.l.b16 %v327
    %v1751 = vunpack.c.h.b16 %v327
    %v1752 = vunpack.c.l.b16 %v328
    %v1753 = vunpack.c.h.b16 %v328
    %v1754 = vunpack.c.l.b16 %v329
    %v1755 = vunpack.c.h.b16 %v329
    %v1756 = vunpack.c.l.b16 %v330
    %v1757 = vunpack.c.h.b16 %v330
    %v1758 = vunpack.c.l.b16 %v331
    %v1759 = vunpack.c.h.b16 %v331
    %v1760 = vunpack.c.l.b16 %v332
    %v1761 = vunpack.c.h.b16 %v332
    %v1762 = vunpack.c.l.b16 %v333
    %v1763 = vunpack.c.h.b16 %v333
    %v1764 = vunpack.c.l.b16 %v334
    %v1765 = vunpack.c.h.b16 %v334
    %v1766 = vunpack.c.l.b16 %v335
    %v1767 = vunpack.c.h.b16 %v335
    %v1768 = vunpack.c.l.b16 %v336
    %v1769 = vunpack.c.h.b16 %v336
    %v1770 = vunpack.c.l.b16 %v337
    %v1771 = vunpack.c.h.b16 %v337
    %v1772 = vunpack.c.l.b16 %v338
    %v1773 = vunpack.c.h.b16 %v338
    %v1774 = vunpack.c.l.b16 %v339
    %v1775 = vunpack.c.h.b16 %v339
    %v1776 = vunpack.c.l.b16 %v340
    %v1777 = vunpack.c.h.b16 %v340
    %v1778 = vunpack.c.l.b16 %v341
    %v1779 = vunpack.c.h.b16 %v341
    %v1780 = vunpack.c.l.b16 %v342
    %v1781 = vunpack.c.h.b16 %v342
    %v1782 = vunpack.c.l.b16 %v343
    %v1783 = vunpack.c.h.b16 %v343
    %v1784 = vunpack.c.l.b16 %v344
    %v1785 = vunpack.c.h.b16 %v344
    %v1786 = vunpack.c.l.b16 %v345
    %v1787 = vunpack.c.h.b16 %v345
    %v1788 = vunpack.c.l.b16 %v346
    %v1789 = vunpack.c.h.b16 %v346
    %v1790 = vunpack.c.l.b16 %v347
    %v1791 = vunpack.c.h.b16 %v347
    %v1792 = vunpack.c.l.b16 %v348
    %v1793 = vunpack.c.h.b16 %v348
    %v1794 = vunpack.c.l.b16 %v349
    %v1795 = vunpack.c.h.b16 %v349
    %v1796 = vunpack.c.l.b16 %v350
    %v1797 = vunpack.c.h.b16 %v350
    %v1798 = vunpack.c.l.b16 %v351
    %v1799 = vunpack.c.h.b16 %v351
    %v1800 = vunpack.c.l.b16 %v352
    %v1801 = vunpack.c.h.b16 %v352
    %v1802 = vunpack.c.l.b16 %v353
    %v1803 = vunpack.c.h.b16 %v353
    %v1804 = vunpack.c.l.b16 %v354
    %v1805 = vunpack.c.h.b16 %v354
    %v1806 = vunpack.c.l.b16 %v355
    %v1807 = vunpack.c.h.b16 %v355
    %v1808 = vunpack.c.l.b16 %v356
    %v1809 = vunpack.c.h.b16 %v356
    %v1810 = vunpack.c.l.b16 %v357
    %v1811 = vunpack.c.h.b16 %v357
    %v1812 = vunpack.c.l.b16 %v358
    %v1813 = vunpack.c.h.b16 %v358
    %v1814 = vunpack.c.l.b16 %v359
    %v1815 = vunpack.c.h.b16 %v359
    %v1816 = vunpack.c.l.b16 %v360
    %v1817 = vunpack.c.h.b16 %v360
    %v1818 = vunpack.c.l.b16 %v361
    %v1819 = vunpack.c.h.b16 %v361
    %v1820 = vunpack.c.l.b16 %v362
    %v1821 = vunpack.c.h.b16 %v362
    %v1822 = vunpack.c.l.b16 %v363
    %v1823 = vunpack.c.h.b16 %v363
    %v1824 = vunpack.c.l.b16 %v364
    %v1825 = vunpack.c.h.b16 %v364
    %v1826 = vunpack.c.l.b16 %v365
    %v1827 = vunpack.c.h.b16 %v365
    %v1828 = vunpack.c.l.b16 %v366
    %v1829 = vunpack.c.h.b16 %v366
    %v1830 = vunpack.c.l.b16 %v367
    %v1831 = vunpack.c.h.b16 %v367
    %v1832 = vunpack.c.l.b16 %v368
    %v1833 = vunpack.c.h.b16 %v368
    %v1834 = vunpack.c.l.b16 %v369
    %v1835 = vunpack.c.h.b16 %v369
    %v1836 = vunpack.c.l.b16 %v370
    %v1837 = vunpack.c.h.b16 %v370
    %v1838 = vunpack.c.l.b16 %v371
    %v1839 = vunpack.c.h.b16 %v371
    %v1840 = vunpack.c.l.b16 %v372
    %v1841 = vunpack.c.h.b16 %v372
    %v1842 = vunpack.c.l.b16 %v373
    %v1843 = vunpack.c.h.b16 %v373
    %v1844 = vunpack.c.l.b16 %v374
    %v1845 = vunpack.c.h.b16 %v374
    %v1846 = vunpack.c.l.b16 %v375
    %v1847 = vunpack.c.h.b16 %v375
    %v1848 = vunpack.c.l.b16 %v376
    %v1849 = vunpack.c.h.b16 %v376
    %v1850 = vunpack.c.l.b16 %v377
    %v1851 = vunpack.c.h.b16 %v377
    %v1852 = vunpack.c.l.b16 %v378
    %v1853 = vunpack.c.h.b16 %v378
    %v1854 = vunpack.c.l.b16 %v379
    %v1855 = vunpack.c.h.b16 %v379
    %v1856 = vunpack.c.l.b16 %v380
    %v1857 = vunpack.c.h.b16 %v380
    %v1858 = vunpack.c.l.b16 %v381
    %v1859 = vunpack.c.h.b16 %v381
    %v1860 = vunpack.c.l.b16 %v382
    %v1861 = vunpack.c.h.b16 %v382
    %v1862 = vunpack.c.l.b16 %v383
    %v1863 = vunpack.c.h.b16 %v383
    %v1864 = vunpack.c.l.b16 %v384
    %v1865 = vunpack.c.h.b16 %v384
    %v1866 = vunpack.c.l.b16 %v385
    %v1867 = vunpack.c.h.b16 %v385
    %v1868 = vunpack.c.l.b16 %v386
    %v1869 = vunpack.c.h.b16 %v386
    %v1870 = vunpack.c.l.b16 %v387
    %v1871 = vunpack.c.h.b16 %v387
    %v1872 = vunpack.c.l.b16 %v388
    %v1873 = vunpack.c.h.b16 %v388
    %v1874 = vunpack.c.l.b16 %v389
    %v1875 = vunpack.c.h.b16 %v389
    %v1876 = vunpack.c.l.b16 %v390
    %v1877 = vunpack.c.h.b16 %v390
    %v1878 = vunpack.c.l.b16 %v391
    %v1879 = vunpack.c.h.b16 %v391
    %v1880 = vunpack.c.l.b16 %v392
    %v1881 = vunpack.c.h.b16 %v392
    %v1882 = vunpack.c.l.b16 %v393
    %v1883 = vunpack.c.h.b16 %v393
    %v1884 = vunpack.c.l.b16 %v394
    %v1885 = vunpack.c.h.b16 %v394
    %v1886 = vunpack.c.l.b16 %v395
    %v1887 = vunpack.c.h.b16 %v395
    %v1888 = vunpack.c.l.b16 %v396
    %v1889 = vunpack.c.h.b16 %v396
    %v1890 = vunpack.c.l.b16 %v397
    %v1891 = vunpack.c.h.b16 %v397
    %v1892 = vunpack.c.l.b16 %v398
    %v1893 = vunpack.c.h.b16 %v398
    %v1894 = vunpack.c.l.b16 %v399
    %v1895 = vunpack.c.h.b16 %v399
    %v1896 = vunpack.c.l.b16 %v400
    %v1897 = vunpack.c.h.b16 %v400
    %v1898 = vunpack.c.l.b16 %v401
    %v1899 = vunpack.c.h.b16 %v401
    %v1900 = vunpack.c.l.b16 %v402
    %v1901 = vunpack.c.h.b16 %v402
    %v1902 = vunpack.c.l.b16 %v403
    %v1903 = vunpack.c.h.b16 %v403
    %v1904 = vunpack.c.l.b16 %v404
    %v1905 = vunpack.c.h.b16 %v404
    %v1906 = vunpack.c.l.b16 %v405
    %v1907 = vunpack.c.h.b16 %v405
    %v1908 = vunpack.c.l.b16 %v406
    %v1909 = vunpack.c.h.b16 %v406
    %v1910 = vunpack.c.l.b16 %v407
    %v1911 = vunpack.c.h.b16 %v407
    %v1912 = vunpack.c.l.b16 %v408
    %v1913 = vunpack.c.h.b16 %v408
    %v1914 = vunpack.c.l.b16 %v409
    %v1915 = vunpack.c.h.b16 %v409
    %v1916 = vunpack.c.l.b16 %v410
    %v1917 = vunpack.c.h.b16 %v410
    %v1918 = vunpack.c.l.b16 %v411
    %v1919 = vunpack.c.h.b16 %v411
    %v1920 = vunpack.c.l.b16 %v412
    %v1921 = vunpack.c.h.b16 %v412
    %v1922 = vunpack.c.l.b16 %v413
    %v1923 = vunpack.c.h.b16 %v413
    %v1924 = vunpack.c.l.b16 %v414
    %v1925 = vunpack.c.h.b16 %v414
    %v1926 = vunpack.c.l.b16 %v415
    %v1927 = vunpack.c.h.b16 %v415
    %v1928 = vunpack.c.l.b16 %v416
    %v1929 = vunpack.c.h.b16 %v416
    %v1930 = vunpack.c.l.b16 %v417
    %v1931 = vunpack.c.h.b16 %v417
    %v1932 = vunpack.c.l.b16 %v418
    %v1933 = vunpack.c.h.b16 %v418
    %v1934 = vunpack.c.l.b16 %v419
    %v1935 = vunpack.c.h.b16 %v419
    %v1936 = vunpack.c.l.b16 %v420
    %v1937 = vunpack.c.h.b16 %v420
    %v1938 = vunpack.c.l.b16 %v421
    %v1939 = vunpack.c.h.b16 %v421
    %v1940 = vunpack.c.l.b16 %v422
    %v1941 = vunpack.c.h.b16 %v422
    %v1942 = vunpack.c.l.b16 %v423
    %v1943 = vunpack.c.h.b16 %v423
    %v1944 = vunpack.c.l.b16 %v424
    %v1945 = vunpack.c.h.b16 %v424
    %v1946 = vunpack.c.l.b16 %v425
    %v1947 = vunpack.c.h.b16 %v425
    %v1948 = vunpack.c.l.b16 %v426
    %v1949 = vunpack.c.h.b16 %v426
    %v1950 = vunpack.c.l.b16 %v427
    %v1951 = vunpack.c.h.b16 %v427
    %v1952 = vunpack.c.l.b16 %v428
    %v1953 = vunpack.c.h.b16 %v428
    %v1954 = vunpack.c.l.b16 %v429
    %v1955 = vunpack.c.h.b16 %v429
    %v1956 = vunpack.c.l.b16 %v430
    %v1957 = vunpack.c.h.b16 %v430
    %v1958 = vunpack.c.l.b16 %v431
    %v1959 = vunpack.c.h.b16 %v431
    %v1960 = vunpack.c.l.b16 %v432
    %v1961 = vunpack.c.h.b16 %v432
    %v1962 = vunpack.c.l.b16 %v433
    %v1963 = vunpack.c.h.b16 %v433
    %v1964 = vunpack.c.l.b16 %v434
    %v1965 = vunpack.c.h.b16 %v434
    %v1966 = vunpack.c.l.b16 %v435
    %v1967 = vunpack.c.h.b16 %v435
    %v1968 = vunpack.c.l.b16 %v436
    %v1969 = vunpack.c.h.b16 %v436
    %v1970 = vunpack.c.l.b16 %v437
    %v1971 = vunpack.c.h.b16 %v437
    %v1972 = vunpack.c.l.b16 %v438
    %v1973 = vunpack.c.h.b16 %v438
    %v1974 = vunpack.c.l.b16 %v439
    %v1975 = vunpack.c.h.b16 %v439
    %v1976 = vunpack.c.l.b16 %v440
    %v1977 = vunpack.c.h.b16 %v440
    %v1978 = vunpack.c.l.b16 %v441
    %v1979 = vunpack.c.h.b16 %v441
    %v1980 = vunpack.c.l.b16 %v442
    %v1981 = vunpack.c.h.b16 %v442
    %v1982 = vunpack.c.l.b16 %v443
    %v1983 = vunpack.c.h.b16 %v443
    %v1984 = vunpack.c.l.b16 %v444
    %v1985 = vunpack.c.h.b16 %v444
    %v1986 = vunpack.c.l.b16 %v445
    %v1987 = vunpack.c.h.b16 %v445
    %v1988 = vunpack.c.l.b16 %v446
    %v1989 = vunpack.c.h.b16 %v446
    %v1990 = vunpack.c.l.b16 %v447
    %v1991 = vunpack.c.h.b16 %v447
    %v1992 = vunpack.c.l.b16 %v448
    %v1993 = vunpack.c.h.b16 %v448
    %v1994 = vunpack.c.l.b16 %v449
    %v1995 = vunpack.c.h.b16 %v449
    %v1996 = vunpack.c.l.b16 %v450
    %v1997 = vunpack.c.h.b16 %v450
    %v1998 = vunpack.c.l.b16 %v451
    %v1999 = vunpack.c.h.b16 %v451
    %v2000 = vunpack.c.l.b16 %v452
    %v2001 = vunpack.c.h.b16 %v452
    %v2002 = vunpack.c.l.b16 %v453
    %v2003 = vunpack.c.h.b16 %v453
    %v2004 = vunpack.c.l.b16 %v454
    %v2005 = vunpack.c.h.b16 %v454
    %v2006 = vunpack.c.l.b16 %v455
    %v2007 = vunpack.c.h.b16 %v455
    %v2008 = vunpack.c.l.b16 %v456
    %v2009 = vunpack.c.h.b16 %v456
    %v2010 = vunpack.c.l.b16 %v457
    %v2011 = vunpack.c.h.b16 %v457
    %v2012 = vunpack.c.l.b16 %v458
    %v2013 = vunpack.c.h.b16 %v458
    %v2014 = vunpack.c.l.b16 %v459
    %v2015 = vunpack.c.h.b16 %v459
    %v2016 = vunpack.c.l.b16 %v460
    %v2017 = vunpack.c.h.b16 %v460
    %v2018 = vunpack.c.l.b16 %v461
    %v2019 = vunpack.c.h.b16 %v461
    %v2020 = vunpack.c.l.b16 %v462
    %v2021 = vunpack.c.h.b16 %v462
    %v2022 = vunpack.c.l.b16 %v463
    %v2023 = vunpack.c.h.b16 %v463
    %v2024 = vunpack.c.l.b16 %v464
    %v2025 = vunpack.c.h.b16 %v464
    %v2026 = vunpack.c.l.b16 %v465
    %v2027 = vunpack.c.h.b16 %v465
    %v2028 = vunpack.c.l.b16 %v466
    %v2029 = vunpack.c.h.b16 %v466
    %v2030 = vunpack.c.l.b16 %v467
    %v2031 = vunpack.c.h.b16 %v467
    %v2032 = vunpack.c.l.b16 %v468
    %v2033 = vunpack.c.h.b16 %v468
    %v2034 = vunpack.c.l.b16 %v469
    %v2035 = vunpack.c.h.b16 %v469
    %v2036 = vunpack.c.l.b16 %v470
    %v2037 = vunpack.c.h.b16 %v470
    %v2038 = vunpack.c.l.b16 %v471
    %v2039 = vunpack.c.h.b16 %v471
    %v2040 = vunpack.c.l.b16 %v472
    %v2041 = vunpack.c.h.b16 %v472
    %v2042 = vunpack.c.l.b16 %v473
    %v2043 = vunpack.c.h.b16 %v473
    %v2044 = vunpack.c.l.b16 %v474
    %v2045 = vunpack.c.h.b16 %v474
    %v2046 = vunpack.c.l.b16 %v475
    %v2047 = vunpack.c.h.b16 %v475
    %v2048 = vunpack.c.l.b16 %v476
    %v2049 = vunpack.c.h.b16 %v476
    %v2050 = vunpack.c.l.b16 %v477
    %v2051 = vunpack.c.h.b16 %v477
    %v2052 = vunpack.c.l.b16 %v478
    %v2053 = vunpack.c.h.b16 %v478
    %v2054 = vunpack.c.l.b16 %v479
    %v2055 = vunpack.c.h.b16 %v479
    %v2056 = vunpack.c.l.b16 %v480
    %v2057 = vunpack.c.h.b16 %v480
    %v2058 = vunpack.c.l.b16 %v481
    %v2059 = vunpack.c.h.b16 %v481
    %v2060 = vunpack.c.l.b16 %v482
    %v2061 = vunpack.c.h.b16 %v482
    %v2062 = vunpack.c.l.b16 %v483
    %v2063 = vunpack.c.h.b16 %v483
    %v2064 = vunpack.c.l.b16 %v484
    %v2065 = vunpack.c.h.b16 %v484
    %v2066 = vunpack.c.l.b16 %v485
    %v2067 = vunpack.c.h.b16 %v485
    %v2068 = vunpack.c.l.b16 %v486
    %v2069 = vunpack.c.h.b16 %v486
    %v2070 = vunpack.c.l.b16 %v487
    %v2071 = vunpack.c.h.b16 %v487
    %v2072 = vunpack.c.l.b16 %v488
    %v2073 = vunpack.c.h.b16 %v488
    %v2074 = vunpack.c.l.b16 %v489
    %v2075 = vunpack.c.h.b16 %v489
    %v2076 = vunpack.c.l.b16 %v490
    %v2077 = vunpack.c.h.b16 %v490
    %v2078 = vunpack.c.l.b16 %v491
    %v2079 = vunpack.c.h.b16 %v491
    %v2080 = vunpack.c.l.b16 %v492
    %v2081 = vunpack.c.h.b16 %v492
    %v2082 = vunpack.c.l.b16 %v493
    %v2083 = vunpack.c.h.b16 %v493
    %v2084 = vunpack.c.l.b16 %v494
    %v2085 = vunpack.c.h.b16 %v494
    %v2086 = vunpack.c.l.b16 %v495
    %v2087 = vunpack.c.h.b16 %v495
    %v2088 = vunpack.c.l.b16 %v496
    %v2089 = vunpack.c.h.b16 %v496
    %v2090 = vunpack.c.l.b16 %v497
    %v2091 = vunpack.c.h.b16 %v497
    %v2092 = vunpack.c.l.b16 %v498
    %v2093 = vunpack.c.h.b16 %v498
    %v2094 = vunpack.c.l.b16 %v499
    %v2095 = vunpack.c.h.b16 %v499
    %v2096 = vunpack.c.l.b16 %v500
    %v2097 = vunpack.c.h.b16 %v500
    %v2098 = vunpack.c.l.b16 %v501
    %v2099 = vunpack.c.h.b16 %v501
    %v2100 = vunpack.c.l.b16 %v502
    %v2101 = vunpack.c.h.b16 %v502
    %v2102 = vunpack.c.l.b16 %v503
    %v2103 = vunpack.c.h.b16 %v503
    %v2104 = vunpack.c.l.b16 %v504
    %v2105 = vunpack.c.h.b16 %v504
    %v2106 = vunpack.c.l.b16 %v505
    %v2107 = vunpack.c.h.b16 %v505
    %v2108 = vunpack.c.l.b16 %v506
    %v2109 = vunpack.c.h.b16 %v506
    %v2110 = vunpack.c.l.b16 %v507
    %v2111 = vunpack.c.h.b16 %v507
    %v2112 = vunpack.c.l.b16 %v508
    %v2113 = vunpack.c.h.b16 %v508
    %v2114 = vunpack.c.l.b16 %v509
    %v2115 = vunpack.c.h.b16 %v509
    %v2116 = vunpack.c.l.b16 %v510
    %v2117 = vunpack.c.h.b16 %v510
    %v2118 = vunpack.c.l.b16 %v511
    %v2119 = vunpack.c.h.b16 %v511
    %v2120 = vunpack.c.l.b16 %v512
    %v2121 = vunpack.c.h.b16 %v512
    %v2122 = vunpack.c.l.b16 %v513
    %v2123 = vunpack.c.h.b16 %v513
    %v2124 = vunpack.c.l.b16 %v514
    %v2125 = vunpack.c.h.b16 %v514
    %v2126 = vunpack.c.l.b16 %v515
    %v2127 = vunpack.c.h.b16 %v515
    %v2128 = vunpack.c.l.b16 %v516
    %v2129 = vunpack.c.h.b16 %v516
    %v2130 = vunpack.c.l.b16 %v517
    %v2131 = vunpack.c.h.b16 %v517
    %v2132 = vunpack.c.l.b16 %v518
    %v2133 = vunpack.c.h.b16 %v518
    %v2134 = vunpack.c.l.b16 %v519
    %v2135 = vunpack.c.h.b16 %v519
    %v2136 = vunpack.c.l.b16 %v520
    %v2137 = vunpack.c.h.b16 %v520
    %v2138 = vunpack.c.l.b16 %v521
    %v2139 = vunpack.c.h.b16 %v521
    %v2140 = vunpack.c.l.b16 %v522
    %v2141 = vunpack.c.h.b16 %v522
    %v2142 = vunpack.c.l.b16 %v523
    %v2143 = vunpack.c.h.b16 %v523
    %v2144 = vunpack.c.l.b16 %v524
    %v2145 = vunpack.c.h.b16 %v524
    %v2146 = vunpack.c.l.b16 %v525
    %v2147 = vunpack.c.h.b16 %v525
    %v2148 = vunpack.c.l.b16 %v526
    %v2149 = vunpack.c.h.b16 %v526
    %v2150 = vunpack.c.l.b16 %v527
    %v2151 = vunpack.c.h.b16 %v527
    %v2152 = vunpack.c.l.b16 %v528
    %v2153 = vunpack.c.h.b16 %v528
    %v2154 = vunpack.c.l.b16 %v529
    %v2155 = vunpack.c.h.b16 %v529
    %v2156 = vunpack.c.l.b16 %v530
    %v2157 = vunpack.c.h.b16 %v530
    %v2158 = vunpack.c.l.b16 %v531
    %v2159 = vunpack.c.h.b16 %v531
    %v2160 = vunpack.c.l.b16 %v532
    %v2161 = vunpack.c.h.b16 %v532
    %v2162 = vunpack.c.l.b16 %v533
    %v2163 = vunpack.c.h.b16 %v533
    %v2164 = vunpack.c.l.b16 %v534
    %v2165 = vunpack.c.h.b16 %v534
    %v2166 = vunpack.c.l.b16 %v535
    %v2167 = vunpack.c.h.b16 %v535
    %v2168 = vunpack.c.l.b16 %v536
    %v2169 = vunpack.c.h.b16 %v536
    %v2170 = vunpack.c.l.b16 %v537
    %v2171 = vunpack.c.h.b16 %v537
    %v2172 = vunpack.c.l.b16 %v538
    %v2173 = vunpack.c.h.b16 %v538
    %v2174 = vunpack.c.l.b16 %v539
    %v2175 = vunpack.c.h.b16 %v539
    %v2176 = vunpack.c.l.b16 %v540
    %v2177 = vunpack.c.h.b16 %v540
    %v2178 = vunpack.c.l.b16 %v541
    %v2179 = vunpack.c.h.b16 %v541
    %v2180 = vunpack.c.l.b16 %v542
    %v2181 = vunpack.c.h.b16 %v542
    %v2182 = vunpack.c.l.b16 %v543
    %v2183 = vunpack.c.h.b16 %v543
    %v2184 = vunpack.c.l.b16 %v544
    %v2185 = vunpack.c.h.b16 %v544
    %v2186 = vunpack.c.l.b16 %v545
    %v2187 = vunpack.c.h.b16 %v545
    %v2188 = vunpack.c.l.b16 %v546
    %v2189 = vunpack.c.h.b16 %v546
    %v2190 = vunpack.c.l.b16 %v547
    %v2191 = vunpack.c.h.b16 %v547
    %v2192 = vunpack.c.l.b16 %v548
    %v2193 = vunpack.c.h.b16 %v548
    %v2194 = vunpack.c.l.b16 %v549
    %v2195 = vunpack.c.h.b16 %v549
    %v2196 = vunpack.c.l.b16 %v550
    %v2197 = vunpack.c.h.b16 %v550
    %v2198 = vunpack.c.l.b16 %v551
    %v2199 = vunpack.c.h.b16 %v551
    %v2200 = vunpack.c.l.b16 %v552
    %v2201 = vunpack.c.h.b16 %v552
    %v2202 = vunpack.c.l.b16 %v553
    %v2203 = vunpack.c.h.b16 %v553
    %v2204 = vunpack.c.l.b16 %v554
    %v2205 = vunpack.c.h.b16 %v554
    %v2206 = vunpack.c.l.b16 %v555
    %v2207 = vunpack.c.h.b16 %v555
    %v2208 = vunpack.c.l.b16 %v556
    %v2209 = vunpack.c.h.b16 %v556
    %v2210 = vunpack.c.l.b16 %v557
    %v2211 = vunpack.c.h.b16 %v557
    %v2212 = vunpack.c.l.b16 %v558
    %v2213 = vunpack.c.h.b16 %v558
    %v2214 = vunpack.c.l.b16 %v559
    %v2215 = vunpack.c.h.b16 %v559
    %v2216 = vunpack.c.l.b16 %v560
    %v2217 = vunpack.c.h.b16 %v560
    %v2218 = vunpack.c.l.b16 %v561
    %v2219 = vunpack.c.h.b16 %v561
    %v2220 = vunpack.c.l.b16 %v562
    %v2221 = vunpack.c.h.b16 %v562
    %v2222 = vunpack.c.l.b16 %v563
    %v2223 = vunpack.c.h.b16 %v563
    %v2224 = vunpack.c.l.b16 %v564
    %v2225 = vunpack.c.h.b16 %v564
    %v2226 = vunpack.c.l.b16 %v565
    %v2227 = vunpack.c.h.b16 %v565
    %v2228 = vunpack.c.l.b16 %v566
    %v2229 = vunpack.c.h.b16 %v566
    %v2230 = vunpack.c.l.b16 %v567
    %v2231 = vunpack.c.h.b16 %v567
    %v2232 = vunpack.c.l.b16 %v568
    %v2233 = vunpack.c.h.b16 %v568
    %v2234 = vunpack.c.l.b16 %v569
    %v2235 = vunpack.c.h.b16 %v569
    %v2236 = vunpack.c.l.b16 %v570
    %v2237 = vunpack.c.h.b16 %v570
    %v2238 = vunpack.c.l.b16 %v571
    %v2239 = vunpack.c.h.b16 %v571
    %v2240 = vunpack.c.l.b16 %v572
    %v2241 = vunpack.c.h.b16 %v572
    %v2242 = vunpack.c.l.b16 %v573
    %v2243 = vunpack.c.h.b16 %v573
    %v2244 = vunpack.c.l.b16 %v574
    %v2245 = vunpack.c.h.b16 %v574
    %v2246 = vunpack.c.l.b16 %v575
    %v2247 = vunpack.c.h.b16 %v575
    %v2248 = vunpack.c.l.b16 %v576
    %v2249 = vunpack.c.h.b16 %v576
    %v2250 = vunpack.c.l.b16 %v577
    %v2251 = vunpack.c.h.b16 %v577
    %v2252 = vunpack.c.l.b16 %v578
    %v2253 = vunpack.c.h.b16 %v578
    %v2254 = vunpack.c.l.b16 %v579
    %v2255 = vunpack.c.h.b16 %v579
    %v2256 = vunpack.c.l.b16 %v580
    %v2257 = vunpack.c.h.b16 %v580
    %v2258 = vunpack.c.l.b16 %v581
    %v2259 = vunpack.c.h.b16 %v581
    %v2260 = vunpack.c.l.b16 %v582
    %v2261 = vunpack.c.h.b16 %v582
    %v2262 = vunpack.c.l.b16 %v583
    %v2263 = vunpack.c.h.b16 %v583
    %v2264 = vunpack.c.l.b16 %v584
    %v2265 = vunpack.c.h.b16 %v584
    %v2266 = vunpack.c.l.b16 %v585
    %v2267 = vunpack.c.h.b16 %v585
    %v2268 = vunpack.c.l.b16 %v586
    %v2269 = vunpack.c.h.b16 %v586
    %v2270 = vunpack.c.l.b16 %v587
    %v2271 = vunpack.c.h.b16 %v587
    %v2272 = vunpack.c.l.b16 %v588
    %v2273 = vunpack.c.h.b16 %v588
    %v2274 = vunpack.c.l.b16 %v589
    %v2275 = vunpack.c.h.b16 %v589
    %v2276 = vunpack.c.l.b16 %v590
    %v2277 = vunpack.c.h.b16 %v590
    %v2278 = vunpack.c.l.b16 %v591
    %v2279 = vunpack.c.h.b16 %v591
    %v2280 = vunpack.c.l.b16 %v592
    %v2281 = vunpack.c.h.b16 %v592
    %v2282 = vunpack.c.l.b16 %v593
    %v2283 = vunpack.c.h.b16 %v593
    %v2284 = vunpack.c.l.b16 %v594
    %v2285 = vunpack.c.h.b16 %v594
    %v2286 = vunpack.c.l.b16 %v595
    %v2287 = vunpack.c.h.b16 %v595
    %v2288 = vunpack.c.l.b16 %v596
    %v2289 = vunpack.c.h.b16 %v596
    %v2290 = vunpack.c.l.b16 %v597
    %v2291 = vunpack.c.h.b16 %v597
    %v2292 = vunpack.c.l.b16 %v598
    %v2293 = vunpack.c.h.b16 %v598
    %v2294 = vunpack.c.l.b16 %v599
    %v2295 = vunpack.c.h.b16 %v599
    %v2296 = vunpack.c.l.b16 %v600
    %v2297 = vunpack.c.h.b16 %v600
    %v2298 = vunpack.c.l.b16 %v601
    %v2299 = vunpack.c.h.b16 %v601
    %v2300 = vunpack.c.l.b16 %v602
    %v2301 = vunpack.c.h.b16 %v602
    %v2302 = vunpack.c.l.b16 %v603
    %v2303 = vunpack.c.h.b16 %v603
    %v2304 = vunpack.c.l.b16 %v604
    %v2305 = vunpack.c.h.b16 %v604
    %v2306 = vunpack.c.l.b16 %v605
    %v2307 = vunpack.c.h.b16 %v605
    %v2308 = vunpack.c.l.b16 %v606
    %v2309 = vunpack.c.h.b16 %v606
    %v2310 = vunpack.c.l.b16 %v607
    %v2311 = vunpack.c.h.b16 %v607
    %v2312 = vunpack.c.l.b16 %v608
    %v2313 = vunpack.c.h.b16 %v608
    %v2314 = vunpack.c.l.b16 %v609
    %v2315 = vunpack.c.h.b16 %v609
    %v2316 = vunpack.c.l.b16 %v610
    %v2317 = vunpack.c.h.b16 %v610
    %v2318 = vunpack.c.l.b16 %v611
    %v2319 = vunpack.c.h.b16 %v611
    %v2320 = vunpack.c.l.b16 %v612
    %v2321 = vunpack.c.h.b16 %v612
    %v2322 = vunpack.c.l.b16 %v613
    %v2323 = vunpack.c.h.b16 %v613
    %v2324 = vunpack.c.l.b16 %v614
    %v2325 = vunpack.c.h.b16 %v614
    %v2326 = vunpack.c.l.b16 %v615
    %v2327 = vunpack.c.h.b16 %v615
    %v2328 = vunpack.c.l.b16 %v616
    %v2329 = vunpack.c.h.b16 %v616
    %v2330 = vunpack.c.l.b16 %v617
    %v2331 = vunpack.c.h.b16 %v617
    %v2332 = vunpack.c.l.b16 %v618
    %v2333 = vunpack.c.h.b16 %v618
    %v2334 = vunpack.c.l.b16 %v619
    %v2335 = vunpack.c.h.b16 %v619
    %v2336 = vunpack.c.l.b16 %v620
    %v2337 = vunpack.c.h.b16 %v620
    %v2338 = vunpack.c.l.b16 %v621
    %v2339 = vunpack.c.h.b16 %v621
    %v2340 = vunpack.c.l.b16 %v622
    %v2341 = vunpack.c.h.b16 %v622
    %v2342 = vunpack.c.l.b16 %v623
    %v2343 = vunpack.c.h.b16 %v623
    %v2344 = vunpack.c.l.b16 %v624
    %v2345 = vunpack.c.h.b16 %v624
    %v2346 = vunpack.c.l.b16 %v625
    %v2347 = vunpack.c.h.b16 %v625
    %v2348 = vunpack.c.l.b16 %v626
    %v2349 = vunpack.c.h.b16 %v626
    %v2350 = vunpack.c.l.b16 %v627
    %v2351 = vunpack.c.h.b16 %v627
    %v2352 = vunpack.c.l.b16 %v628
    %v2353 = vunpack.c.h.b16 %v628
    %v2354 = vunpack.c.l.b16 %v629
    %v2355 = vunpack.c.h.b16 %v629
    %v2356 = vunpack.c.l.b16 %v630
    %v2357 = vunpack.c.h.b16 %v630
    %v2358 = vunpack.c.l.b16 %v631
    %v2359 = vunpack.c.h.b16 %v631
    %v2360 = vunpack.c.l.b16 %v632
    %v2361 = vunpack.c.h.b16 %v632
    %v2362 = vunpack.c.l.b16 %v633
    %v2363 = vunpack.c.h.b16 %v633
    %v2364 = vunpack.c.l.b16 %v634
    %v2365 = vunpack.c.h.b16 %v634
    %v2366 = vunpack.c.l.b16 %v635
    %v2367 = vunpack.c.h.b16 %v635
    %v2368 = vunpack.c.l.b16 %v636
    %v2369 = vunpack.c.h.b16 %v636
    %v2370 = vunpack.c.l.b16 %v637
    %v2371 = vunpack.c.h.b16 %v637
    %v2372 = vunpack.c.l.b16 %v638
    %v2373 = vunpack.c.h.b16 %v638
    %v2374 = vunpack.c.l.b16 %v639
    %v2375 = vunpack.c.h.b16 %v639
    %v2376 = vunpack.c.l.b16 %v640
    %v2377 = vunpack.c.h.b16 %v640
    %v2378 = vunpack.c.l.b16 %v641
    %v2379 = vunpack.c.h.b16 %v641
    %v2380 = vunpack.c.l.b16 %v642
    %v2381 = vunpack.c.h.b16 %v642
    %v2382 = vunpack.c.l.b16 %v643
    %v2383 = vunpack.c.h.b16 %v643
    %v2384 = vunpack.c.l.b16 %v644
    %v2385 = vunpack.c.h.b16 %v644
    %v2386 = vunpack.c.l.b16 %v645
    %v2387 = vunpack.c.h.b16 %v645
    %v2388 = vunpack.c.l.b16 %v646
    %v2389 = vunpack.c.h.b16 %v646
    %v2390 = vunpack.c.l.b16 %v647
    %v2391 = vunpack.c.h.b16 %v647
    %v2392 = vunpack.c.l.b16 %v648
    %v2393 = vunpack.c.h.b16 %v648
    %v2394 = vunpack.c.l.b16 %v649
    %v2395 = vunpack.c.h.b16 %v649
    %v2396 = vunpack.c.l.b16 %v650
    %v2397 = vunpack.c.h.b16 %v650
    %v2398 = vunpack.c.l.b16 %v651
    %v2399 = vunpack.c.h.b16 %v651
    %v2400 = vunpack.c.l.b16 %v652
    %v2401 = vunpack.c.h.b16 %v652
    %v2402 = vunpack.c.l.b16 %v653
    %v2403 = vunpack.c.h.b16 %v653
    %v2404 = vunpack.c.l.b16 %v654
    %v2405 = vunpack.c.h.b16 %v654
    %v2406 = vunpack.c.l.b16 %v655
    %v2407 = vunpack.c.h.b16 %v655
    %v2408 = vunpack.c.l.b16 %v656
    %v2409 = vunpack.c.h.b16 %v656
    %v2410 = vunpack.c.l.b16 %v657
    %v2411 = vunpack.c.h.b16 %v657
    %v2412 = vunpack.c.l.b16 %v658
    %v2413 = vunpack.c.h.b16 %v658
    %v2414 = vunpack.c.l.b16 %v659
    %v2415 = vunpack.c.h.b16 %v659
    %v2416 = vunpack.c.l.b16 %v660
    %v2417 = vunpack.c.h.b16 %v660
    %v2418 = vunpack.c.l.b16 %v661
    %v2419 = vunpack.c.h.b16 %v661
    %v2420 = vunpack.c.l.b16 %v662
    %v2421 = vunpack.c.h.b16 %v662
    %v2422 = vunpack.c.l.b16 %v663
    %v2423 = vunpack.c.h.b16 %v663
    %v2424 = vunpack.c.l.b16 %v664
    %v2425 = vunpack.c.h.b16 %v664
    %v2426 = vunpack.c.l.b16 %v665
    %v2427 = vunpack.c.h.b16 %v665
    %v2428 = vunpack.c.l.b16 %v666
    %v2429 = vunpack.c.h.b16 %v666
    %v2430 = vunpack.c.l.b16 %v667
    %v2431 = vunpack.c.h.b16 %v667
    %v2432 = vunpack.c.l.b16 %v668
    %v2433 = vunpack.c.h.b16 %v668
    %v2434 = vunpack.c.l.b16 %v669
    %v2435 = vunpack.c.h.b16 %v669
    %v2436 = vunpack.c.l.b16 %v670
    %v2437 = vunpack.c.h.b16 %v670
    %v2438 = vunpack.c.l.b16 %v671
    %v2439 = vunpack.c.h.b16 %v671
    %v2440 = vunpack.c.l.b16 %v672
    %v2441 = vunpack.c.h.b16 %v672
    %v2442 = vunpack.c.l.b16 %v673
    %v2443 = vunpack.c.h.b16 %v673
    %v2444 = vunpack.c.l.b16 %v674
    %v2445 = vunpack.c.h.b16 %v674
    %v2446 = vunpack.c.l.b16 %v675
    %v2447 = vunpack.c.h.b16 %v675
    %v2448 = vunpack.c.l.b16 %v676
    %v2449 = vunpack.c.h.b16 %v676
    %v2450 = vunpack.c.l.b16 %v677
    %v2451 = vunpack.c.h.b16 %v677
    %v2452 = vunpack.c.l.b16 %v678
    %v2453 = vunpack.c.h.b16 %v678
    %v2454 = vunpack.c.l.b16 %v679
    %v2455 = vunpack.c.h.b16 %v679
    %v2456 = vunpack.c.l.b16 %v680
    %v2457 = vunpack.c.h.b16 %v680
    %v2458 = vunpack.c.l.b16 %v681
    %v2459 = vunpack.c.h.b16 %v681
    %v2460 = vunpack.c.l.b16 %v682
    %v2461 = vunpack.c.h.b16 %v682
    %v2462 = vunpack.c.l.b16 %v683
    %v2463 = vunpack.c.h.b16 %v683
    %v2464 = vunpack.c.l.b16 %v684
    %v2465 = vunpack.c.h.b16 %v684
    %v2466 = vunpack.c.l.b16 %v685
    %v2467 = vunpack.c.h.b16 %v685
    %v2468 = vunpack.c.l.b16 %v686
    %v2469 = vunpack.c.h.b16 %v686
    %v2470 = vunpack.c.l.b16 %v687
    %v2471 = vunpack.c.h.b16 %v687
    %v2472 = vunpack.c.l.b16 %v688
    %v2473 = vunpack.c.h.b16 %v688
    %v2474 = vunpack.c.l.b16 %v689
    %v2475 = vunpack.c.h.b16 %v689
    %v2476 = vunpack.c.l.b16 %v690
    %v2477 = vunpack.c.h.b16 %v690
    %v2478 = vunpack.c.l.b16 %v691
    %v2479 = vunpack.c.h.b16 %v691
    %v2480 = vunpack.c.l.b16 %v692
    %v2481 = vunpack.c.h.b16 %v692
    %v2482 = vunpack.c.l.b16 %v693
    %v2483 = vunpack.c.h.b16 %v693
    %v2484 = vunpack.c.l.b16 %v694
    %v2485 = vunpack.c.h.b16 %v694
    %v2486 = vunpack.c.l.b16 %v695
    %v2487 = vunpack.c.h.b16 %v695
    %v2488 = vunpack.c.l.b16 %v696
    %v2489 = vunpack.c.h.b16 %v696
    %v2490 = vunpack.c.l.b16 %v697
    %v2491 = vunpack.c.h.b16 %v697
    %v2492 = vunpack.c.l.b16 %v698
    %v2493 = vunpack.c.h.b16 %v698
    %v2494 = vunpack.c.l.b16 %v699
    %v2495 = vunpack.c.h.b16 %v699
    %v2496 = vunpack.c.l.b16 %v700
    %v2497 = vunpack.c.h.b16 %v700
    %v2498 = vunpack.c.l.b16 %v701
    %v2499 = vunpack.c.h.b16 %v701
    %v2500 = vunpack.c.l.b16 %v702
    %v2501 = vunpack.c.h.b16 %v702
    %v2502 = vunpack.c.l.b16 %v703
    %v2503 = vunpack.c.h.b16 %v703
    %v2504 = vunpack.c.l.b16 %v704
    %v2505 = vunpack.c.h.b16 %v704
    %v2506 = vunpack.c.l.b16 %v705
    %v2507 = vunpack.c.h.b16 %v705
    %v2508 = vunpack.c.l.b16 %v706
    %v2509 = vunpack.c.h.b16 %v706
    %v2510 = vunpack.c.l.b16 %v707
    %v2511 = vunpack.c.h.b16 %v707
    %v2512 = vunpack.c.l.b16 %v708
    %v2513 = vunpack.c.h.b16 %v708
    %v2514 = vunpack.c.l.b16 %v709
    %v2515 = vunpack.c.h.b16 %v709
    %v2516 = vunpack.c.l.b16 %v710
    %v2517 = vunpack.c.h.b16 %v710
    %v2518 = vunpack.c.l.b16 %v711
    %v2519 = vunpack.c.h.b16 %v711
    %v2520 = vunpack.c.l.b16 %v712
    %v2521 = vunpack.c.h.b16 %v712
    %v2522 = vunpack.c.l.b16 %v713
    %v2523 = vunpack.c.h.b16 %v713
    %v2524 = vunpack.c.l.b16 %v714
    %v2525 = vunpack.c.h.b16 %v714
    %v2526 = vunpack.c.l.b16 %v715
    %v2527 = vunpack.c.h.b16 %v715
    %v2528 = vunpack.c.l.b16 %v716
    %v2529 = vunpack.c.h.b16 %v716
    %v2530 = vunpack.c.l.b16 %v717
    %v2531 = vunpack.c.h.b16 %v717
    %v2532 = vunpack.c.l.b16 %v718
    %v2533 = vunpack.c.h.b16 %v718
    %v2534 = vunpack.c.l.b16 %v719
    %v2535 = vunpack.c.h.b16 %v719
    %v2536 = vunpack.c.l.b16 %v720
    %v2537 = vunpack.c.h.b16 %v720
    %v2538 = vunpack.c.l.b16 %v721
    %v2539 = vunpack.c.h.b16 %v721
    %v2540 = vunpack.c.l.b16 %v722
    %v2541 = vunpack.c.h.b16 %v722
    %v2542 = vunpack.c.l.b16 %v723
    %v2543 = vunpack.c.h.b16 %v723
    %v2544 = vunpack.c.l.b16 %v724
    %v2545 = vunpack.c.h.b16 %v724
    %v2546 = vunpack.c.l.b16 %v725
    %v2547 = vunpack.c.h.b16 %v725
    %v2548 = vunpack.c.l.b16 %v726
    %v2549 = vunpack.c.h.b16 %v726
    %v2550 = vunpack.c.l.b16 %v727
    %v2551 = vunpack.c.h.b16 %v727
    %v2552 = vunpack.c.l.b16 %v728
    %v2553 = vunpack.c.h.b16 %v728
    %v2554 = vunpack.c.l.b16 %v729
    %v2555 = vunpack.c.h.b16 %v729
    %v2556 = vunpack.c.l.b16 %v730
    %v2557 = vunpack.c.h.b16 %v730
    %v2558 = vunpack.c.l.b16 %v731
    %v2559 = vunpack.c.h.b16 %v731
    %v2560 = vunpack.c.l.b16 %v732
    %v2561 = vunpack.c.h.b16 %v732
    %v2562 = vunpack.c.l.b16 %v733
    %v2563 = vunpack.c.h.b16 %v733
    %v2564 = vunpack.c.l.b16 %v734
    %v2565 = vunpack.c.h.b16 %v734
    %v2566 = vunpack.c.l.b16 %v735
    %v2567 = vunpack.c.h.b16 %v735
    %v2568 = vunpack.c.l.b16 %v736
    %v2569 = vunpack.c.h.b16 %v736
    %v2570 = vunpack.c.l.b16 %v737
    %v2571 = vunpack.c.h.b16 %v737
    %v2572 = vunpack.c.l.b16 %v738
    %v2573 = vunpack.c.h.b16 %v738
    %v2574 = vunpack.c.l.b16 %v739
    %v2575 = vunpack.c.h.b16 %v739
    %v2576 = vunpack.c.l.b16 %v740
    %v2577 = vunpack.c.h.b16 %v740
    %v2578 = vunpack.c.l.b16 %v741
    %v2579 = vunpack.c.h.b16 %v741
    %v2580 = vunpack.c.l.b16 %v742
    %v2581 = vunpack.c.h.b16 %v742
    %v2582 = vunpack.c.l.b16 %v743
    %v2583 = vunpack.c.h.b16 %v743
    %v2584 = vunpack.c.l.b16 %v744
    %v2585 = vunpack.c.h.b16 %v744
    %v2586 = vunpack.c.l.b16 %v745
    %v2587 = vunpack.c.h.b16 %v745
    %v2588 = vunpack.c.l.b16 %v746
    %v2589 = vunpack.c.h.b16 %v746
    %v2590 = vunpack.c.l.b16 %v747
    %v2591 = vunpack.c.h.b16 %v747
    %v2592 = vunpack.c.l.b16 %v748
    %v2593 = vunpack.c.h.b16 %v748
    %v2594 = vunpack.c.l.b16 %v749
    %v2595 = vunpack.c.h.b16 %v749
    %v2596 = vunpack.c.l.b16 %v750
    %v2597 = vunpack.c.h.b16 %v750
    %v2598 = vunpack.c.l.b16 %v751
    %v2599 = vunpack.c.h.b16 %v751
    %v2600 = vunpack.c.l.b16 %v752
    %v2601 = vunpack.c.h.b16 %v752
    %v2602 = vunpack.c.l.b16 %v753
    %v2603 = vunpack.c.h.b16 %v753
    %v2604 = vunpack.c.l.b16 %v754
    %v2605 = vunpack.c.h.b16 %v754
    %v2606 = vunpack.c.l.b16 %v755
    %v2607 = vunpack.c.h.b16 %v755
    %v2608 = vunpack.c.l.b16 %v756
    %v2609 = vunpack.c.h.b16 %v756
    %v2610 = vunpack.c.l.b16 %v757
    %v2611 = vunpack.c.h.b16 %v757
    %v2612 = vpack.c.b16 %v1484, %v1460
    %v2613 = vpack.c.b16 %v1485, %v1461
    %v2614 = vpack.c.b16 %v1486, %v1462
    %v2615 = vpack.c.b16 %v1487, %v1463
    %v2616 = vpack.c.b16 %v1488, %v1464
    %v2617 = vpack.c.b16 %v1489, %v1465
    %v2618 = vpack.c.b16 %v1490, %v1466
    %v2619 = vpack.c.b16 %v1491, %v1467
    %v2620 = vpack.c.b16 %v1492, %v1468
    %v2621 = vpack.c.b16 %v1493, %v1469
    %v2622 = vpack.c.b16 %v1494, %v1470
    %v2623 = vpack.c.b16 %v1495, %v1471
    %v2624 = vpack.c.b16 %v1496, %v1472
    %v2625 = vpack.c.b16 %v1497, %v1473
    %v2626 = vpack.c.b16 %v1498, %v1474
    %v2627 = vpack.c.b16 %v1499, %v1475
    %v2628 = vpack.c.b16 %v1500, %v1476
    %v2629 = vpack.c.b16 %v1501, %v1477
    %v2630 = vpack.c.b16 %v1502, %v1478
    %v2631 = vpack.c.b16 %v1503, %v1479
    %v2632 = vpack.c.b16 %v1504, %v1480
    %v2633 = vpack.c.b16 %v1505, %v1481
    %v2634 = vpack.c.b16 %v1506, %v1482
    %v2635 = vpack.c.b16 %v1507, %v1483
    %v2636 = vpack.c.b16 %v1532, %v1508
    %v2637 = vpack.c.b16 %v1533, %v1509
    %v2638 = vpack.c.b16 %v1534, %v1510
    %v2639 = vpack.c.b16 %v1535, %v1511
    %v2640 = vpack.c.b16 %v1536, %v1512
    %v2641 = vpack.c.b16 %v1537, %v1513
    %v2642 = vpack.c.b16 %v1538, %v1514
    %v2643 = vpack.c.b16 %v1539, %v1515
    %v2644 = vpack.c.b16 %v1540, %v1516
    %v2645 = vpack.c.b16 %v1541, %v1517
    %v2646 = vpack.c.b16 %v1542, %v1518
    %v2647 = vpack.c.b16 %v1543, %v1519
    %v2648 = vpack.c.b16 %v1544, %v1520
    %v2649 = vpack.c.b16 %v1545, %v1521
    %v2650 = vpack.c.b16 %v1546, %v1522
    %v2651 = vpack.c.b16 %v1547, %v1523
    %v2652 = vpack.c.b16 %v1548, %v1524
    %v2653 = vpack.c.b16 %v1549, %v1525
    %v2654 = vpack.c.b16 %v1550, %v1526
    %v2655 = vpack.c.b16 %v1551, %v1527
    %v2656 = vpack.c.b16 %v1552, %v1528
    %v2657 = vpack.c.b16 %v1553, %v1529
    %v2658 = vpack.c.b16 %v1554, %v1530
    %v2659 = vpack.c.b16 %v1555, %v1531
    %v2660 = vpack.c.b16 %v1580, %v1556
    %v2661 = vpack.c.b16 %v1581, %v1557
    %v2662 = vpack.c.b16 %v1582, %v1558
    %v2663 = vpack.c.b16 %v1583, %v1559
    %v2664 = vpack.c.b16 %v1584, %v1560
    %v2665 = vpack.c.b16 %v1585, %v1561
    %v2666 = vpack.c.b16 %v1586, %v1562
    %v2667 = vpack.c.b16 %v1587, %v1563
    %v2668 = vpack.c.b16 %v1588, %v1564
    %v2669 = vpack.c.b16 %v1589, %v1565
    %v2670 = vpack.c.b16 %v1590, %v1566
    %v2671 = vpack.c.b16 %v1591, %v1567
    %v2672 = vpack.c.b16 %v1592, %v1568
    %v2673 = vpack.c.b16 %v1593, %v1569
    %v2674 = vpack.c.b16 %v1594, %v1570
    %v2675 = vpack.c.b16 %v1595, %v1571
    %v2676 = vpack.c.b16 %v1596, %v1572
    %v2677 = vpack.c.b16 %v1597, %v1573
    %v2678 = vpack.c.b16 %v1598, %v1574
    %v2679 = vpack.c.b16 %v1599, %v1575
    %v2680 = vpack.c.b16 %v1600, %v1576
    %v2681 = vpack.c.b16 %v1601, %v1577
    %v2682 = vpack.c.b16 %v1602, %v1578
    %v2683 = vpack.c.b16 %v1603, %v1579
    %v2684 = vpack.c.b16 %v1628, %v1604
    %v2685 = vpack.c.b16 %v1629, %v1605
    %v2686 = vpack.c.b16 %v1630, %v1606
    %v2687 = vpack.c.b16 %v1631, %v1607
    %v2688 = vpack.c.b16 %v1632, %v1608
    %v2689 = vpack.c.b16 %v1633, %v1609
    %v2690 = vpack.c.b16 %v1634, %v1610
    %v2691 = vpack.c.b16 %v1635, %v1611
    %v2692 = vpack.c.b16 %v1636, %v1612
    %v2693 = vpack.c.b16 %v1637, %v1613
    %v2694 = vpack.c.b16 %v1638, %v1614
    %v2695 = vpack.c.b16 %v1639, %v1615
    %v2696 = vpack.c.b16 %v1640, %v1616
    %v2697 = vpack.c.b16 %v1641, %v1617
    %v2698 = vpack.c.b16 %v1642, %v1618
    %v2699 = vpack.c.b16 %v1643, %v1619
    %v2700 = vpack.c.b16 %v1644, %v1620
    %v2701 = vpack.c.b16 %v1645, %v1621
    %v2702 = vpack.c.b16 %v1646, %v1622
    %v2703 = vpack.c.b16 %v1647, %v1623
    %v2704 = vpack.c.b16 %v1648, %v1624
    %v2705 = vpack.c.b16 %v1649, %v1625
    %v2706 = vpack.c.b16 %v1650, %v1626
    %v2707 = vpack.c.b16 %v1651, %v1627
    %v2708 = vpack.c.b16 %v1676, %v1652
    %v2709 = vpack.c.b16 %v1677, %v1653
    %v2710 = vpack.c.b16 %v1678, %v1654
    %v2711 = vpack.c.b16 %v1679, %v1655
    %v2712 = vpack.c.b16 %v1680, %v1656
    %v2713 = vpack.c.b16 %v1681, %v1657
    %v2714 = vpack.c.b16 %v1682, %v1658
    %v2715 = vpack.c.b16 %v1683, %v1659
    %v2716 = vpack.c.b16 %v1684, %v1660
    %v2717 = vpack.c.b16 %v1685, %v1661
    %v2718 = vpack.c.b16 %v1686, %v1662
    %v2719 = vpack.c.b16 %v1687, %v1663
    %v2720 = vpack.c.b16 %v1688, %v1664
    %v2721 = vpack.c.b16 %v1689, %v1665
    %v2722 = vpack.c.b16 %v1690, %v1666
    %v2723 = vpack.c.b16 %v1691, %v1667
    %v2724 = vpack.c.b16 %v1692, %v1668
    %v2725 = vpack.c.b16 %v1693, %v1669
    %v2726 = vpack.c.b16 %v1694, %v1670
    %v2727 = vpack.c.b16 %v1695, %v1671
    %v2728 = vpack.c.b16 %v1696, %v1672
    %v2729 = vpack.c.b16 %v1697, %v1673
    %v2730 = vpack.c.b16 %v1698, %v1674
    %v2731 = vpack.c.b16 %v1699, %v1675
    %v2732 = vpack.c.b16 %v1724, %v1700
    %v2733 = vpack.c.b16 %v1725, %v1701
    %v2734 = vpack.c.b16 %v1726, %v1702
    %v2735 = vpack.c.b16 %v1727, %v1703
    %v2736 = vpack.c.b16 %v1728, %v1704
    %v2737 = vpack.c.b16 %v1729, %v1705
    %v2738 = vpack.c.b16 %v1730, %v1706
    %v2739 = vpack.c.b16 %v1731, %v1707
    %v2740 = vpack.c.b16 %v1732, %v1708
    %v2741 = vpack.c.b16 %v1733, %v1709
    %v2742 = vpack.c.b16 %v1734, %v1710
    %v2743 = vpack.c.b16 %v1735, %v1711
    %v2744 = vpack.c.b16 %v1736, %v1712
    %v2745 = vpack.c.b16 %v1737, %v1713
    %v2746 = vpack.c.b16 %v1738, %v1714
    %v2747 = vpack.c.b16 %v1739, %v1715
    %v2748 = vpack.c.b16 %v1740, %v1716
    %v2749 = vpack.c.b16 %v1741, %v1717
    %v2750 = vpack.c.b16 %v1742, %v1718
    %v2751 = vpack.c.b16 %v1743, %v1719
    %v2752 = vpack.c.b16 %v1744, %v1720
    %v2753 = vpack.c.b16 %v1745, %v1721
    %v2754 = vpack.c.b16 %v1746, %v1722
    %v2755 = vpack.c.b16 %v1747, %v1723
    %v2756 = vpack.c.b16 %v1772, %v1748
    %v2757 = vpack.c.b16 %v1773, %v1749
    %v2758 = vpack.c.b16 %v1774, %v1750
    %v2759 = vpack.c.b16 %v1775, %v1751
    %v2760 = vpack.c.b16 %v1776, %v1752
    %v2761 = vpack.c.b16 %v1777, %v1753
    %v2762 = vpack.c.b16 %v1778, %v1754
    %v2763 = vpack.c.b16 %v1779, %v1755
    %v2764 = vpack.c.b16 %v1780, %v1756
    %v2765 = vpack.c.b16 %v1781, %v1757
    %v2766 = vpack.c.b16 %v1782, %v1758
    %v2767 = vpack.c.b16 %v1783, %v1759
    %v2768 = vpack.c.b16 %v1784, %v1760
    %v2769 = vpack.c.b16 %v1785, %v1761
    %v2770 = vpack.c.b16 %v1786, %v1762
    %v2771 = vpack.c.b16 %v1787, %v1763
    %v2772 = vpack.c.b16 %v1788, %v1764
    %v2773 = vpack.c.b16 %v1789, %v1765
    %v2774 = vpack.c.b16 %v1790, %v1766
    %v2775 = vpack.c.b16 %v1791, %v1767
    %v2776 = vpack.c.b16 %v1792, %v1768
    %v2777 = vpack.c.b16 %v1793, %v1769
    %v2778 = vpack.c.b16 %v1794, %v1770
    %v2779 = vpack.c.b16 %v1795, %v1771
    %v2780 = vpack.c.b16 %v1820, %v1796
    %v2781 = vpack.c.b16 %v1821, %v1797
    %v2782 = vpack.c.b16 %v1822, %v1798
    %v2783 = vpack.c.b16 %v1823, %v1799
    %v2784 = vpack.c.b16 %v1824, %v1800
    %v2785 = vpack.c.b16 %v1825, %v1801
    %v2786 = vpack.c.b16 %v1826, %v1802
    %v2787 = vpack.c.b16 %v1827, %v1803
    %v2788 = vpack.c.b16 %v1828, %v1804
    %v2789 = vpack.c.b16 %v1829, %v1805
    %v2790 = vpack.c.b16 %v1830, %v1806
    %v2791 = vpack.c.b16 %v1831, %v1807
    %v2792 = vpack.c.b16 %v1832, %v1808
    %v2793 = vpack.c.b16 %v1833, %v1809
    %v2794 = vpack.c.b16 %v1834, %v1810
    %v2795 = vpack.c.b16 %v1835, %v1811
    %v2796 = vpack.c.b16 %v1836, %v1812
    %v2797 = vpack.c.b16 %v1837, %v1813
    %v2798 = vpack.c.b16 %v1838, %v1814
    %v2799 = vpack.c.b16 %v1839, %v1815
    %v2800 = vpack.c.b16 %v1840, %v1816
    %v2801 = vpack.c.b16 %v1841, %v1817
    %v2802 = vpack.c.b16 %v1842, %v1818
    %v2803 = vpack.c.b16 %v1843, %v1819
    %v2804 = vpack.c.b16 %v1868, %v1844
    %v2805 = vpack.c.b16 %v1869, %v1845
    %v2806 = vpack.c.b16 %v1870, %v1846
    %v2807 = vpack.c.b16 %v1871, %v1847
    %v2808 = vpack.c.b16 %v1872, %v1848
    %v2809 = vpack.c.b16 %v1873, %v1849
    %v2810 = vpack.c.b16 %v1874, %v1850
    %v2811 = vpack.c.b16 %v1875, %v1851
    %v2812 = vpack.c.b16 %v1876, %v1852
    %v2813 = vpack.c.b16 %v1877, %v1853
    %v2814 = vpack.c.b16 %v1878, %v1854
    %v2815 = vpack.c.b16 %v1879, %v1855
    %v2816 = vpack.c.b16 %v1880, %v1856
    %v2817 = vpack.c.b16 %v1881, %v1857
    %v2818 = vpack.c.b16 %v1882, %v1858
    %v2819 = vpack.c.b16 %v1883, %v1859
    %v2820 = vpack.c.b16 %v1884, %v1860
    %v2821 = vpack.c.b16 %v1885, %v1861
    %v2822 = vpack.c.b16 %v1886, %v1862
    %v2823 = vpack.c.b16 %v1887, %v1863
    %v2824 = vpack.c.b16 %v1888, %v1864
    %v2825 = vpack.c.b16 %v1889, %v1865
    %v2826 = vpack.c.b16 %v1890, %v1866
    %v2827 = vpack.c.b16 %v1891, %v1867
    %v2828 = vpack.c.b16 %v1916, %v1892
    %v2829 = vpack.c.b16 %v1917, %v1893
    %v2830 = vpack.c.b16 %v1918, %v1894
    %v2831 = vpack.c.b16 %v1919, %v1895
    %v2832 = vpack.c.b16 %v1920, %v1896
    %v2833 = vpack.c.b16 %v1921, %v1897
    %v2834 = vpack.c.b16 %v1922, %v1898
    %v2835 = vpack.c.b16 %v1923, %v1899
    %v2836 = vpack.c.b16 %v1924, %v1900
    %v2837 = vpack.c.b16 %v1925, %v1901
    %v2838 = vpack.c.b16 %v1926, %v1902
    %v2839 = vpack.c.b16 %v1927, %v1903
    %v2840 = vpack.c.b16 %v1928, %v1904
    %v2841 = vpack.c.b16 %v1929, %v1905
    %v2842 = vpack.c.b16 %v1930, %v1906
    %v2843 = vpack.c.b16 %v1931, %v1907
    %v2844 = vpack.c.b16 %v1932, %v1908
    %v2845 = vpack.c.b16 %v1933, %v1909
    %v2846 = vpack.c.b16 %v1934, %v1910
    %v2847 = vpack.c.b16 %v1935, %v1911
    %v2848 = vpack.c.b16 %v1936, %v1912
    %v2849 = vpack.c.b16 %v1937, %v1913
    %v2850 = vpack.c.b16 %v1938, %v1914
    %v2851 = vpack.c.b16 %v1939, %v1915
    %v2852 = vpack.c.b16 %v1964, %v1940
    %v2853 = vpack.c.b16 %v1965, %v1941
    %v2854 = vpack.c.b16 %v1966, %v1942
    %v2855 = vpack.c.b16 %v1967, %v1943
    %v2856 = vpack.c.b16 %v1968, %v1944
    %v2857 = vpack.c.b16 %v1969, %v1945
    %v2858 = vpack.c.b16 %v1970, %v1946
    %v2859 = vpack.c.b16 %v1971, %v1947
    %v2860 = vpack.c.b16 %v1972, %v1948
    %v2861 = vpack.c.b16 %v1973, %v1949
    %v2862 = vpack.c.b16 %v1974, %v1950
    %v2863 = vpack.c.b16 %v1975, %v1951
    %v2864 = vpack.c.b16 %v1976, %v1952
    %v2865 = vpack.c.b16 %v1977, %v1953
    %v2866 = vpack.c.b16 %v1978, %v1954
    %v2867 = vpack.c.b16 %v1979, %v1955
    %v2868 = vpack.c.b16 %v1980, %v1956
    %v2869 = vpack.c.b16 %v1981, %v1957
    %v2870 = vpack.c.b16 %v1982, %v1958
    %v2871 = vpack.c.b16 %v1983, %v1959
    %v2872 = vpack.c.b16 %v1984, %v1960
    %v2873 = vpack.c.b16 %v1985, %v1961
    %v2874 = vpack.c.b16 %v1986, %v1962
    %v2875 = vpack.c.b16 %v1987, %v1963
    %v2876 = vpack.c.b16 %v2012, %v1988
    %v2877 = vpack.c.b16 %v2013, %v1989
    %v2878 = vpack.c.b16 %v2014, %v1990
    %v2879 = vpack.c.b16 %v2015, %v1991
    %v2880 = vpack.c.b16 %v2016, %v1992
    %v2881 = vpack.c.b16 %v2017, %v1993
    %v2882 = vpack.c.b16 %v2018, %v1994
    %v2883 = vpack.c.b16 %v2019, %v1995
    %v2884 = vpack.c.b16 %v2020, %v1996
    %v2885 = vpack.c.b16 %v2021, %v1997
    %v2886 = vpack.c.b16 %v2022, %v1998
    %v2887 = vpack.c.b16 %v2023, %v1999
    %v2888 = vpack.c.b16 %v2024, %v2000
    %v2889 = vpack.c.b16 %v2025, %v2001
    %v2890 = vpack.c.b16 %v2026, %v2002
    %v2891 = vpack.c.b16 %v2027, %v2003
    %v2892 = vpack.c.b16 %v2028, %v2004
    %v2893 = vpack.c.b16 %v2029, %v2005
    %v2894 = vpack.c.b16 %v2030, %v2006
    %v2895 = vpack.c.b16 %v2031, %v2007
    %v2896 = vpack.c.b16 %v2032, %v2008
    %v2897 = vpack.c.b16 %v2033, %v2009
    %v2898 = vpack.c.b16 %v2034, %v2010
    %v2899 = vpack.c.b16 %v2035, %v2011
    %v2900 = vpack.c.b16 %v2060, %v2036
    %v2901 = vpack.c.b16 %v2061, %v2037
    %v2902 = vpack.c.b16 %v2062, %v2038
    %v2903 = vpack.c.b16 %v2063, %v2039
    %v2904 = vpack.c.b16 %v2064, %v2040
    %v2905 = vpack.c.b16 %v2065, %v2041
    %v2906 = vpack.c.b16 %v2066, %v2042
    %v2907 = vpack.c.b16 %v2067, %v2043
    %v2908 = vpack.c.b16 %v2068, %v2044
    %v2909 = vpack.c.b16 %v2069, %v2045
    %v2910 = vpack.c.b16 %v2070, %v2046
    %v2911 = vpack.c.b16 %v2071, %v2047
    %v2912 = vpack.c.b16 %v2072, %v2048
    %v2913 = vpack.c.b16 %v2073, %v2049
    %v2914 = vpack.c.b16 %v2074, %v2050
    %v2915 = vpack.c.b16 %v2075, %v2051
    %v2916 = vpack.c.b16 %v2076, %v2052
    %v2917 = vpack.c.b16 %v2077, %v2053
    %v2918 = vpack.c.b16 %v2078, %v2054
    %v2919 = vpack.c.b16 %v2079, %v2055
    %v2920 = vpack.c.b16 %v2080, %v2056
    %v2921 = vpack.c.b16 %v2081, %v2057
    %v2922 = vpack.c.b16 %v2082, %v2058
    %v2923 = vpack.c.b16 %v2083, %v2059
    %v2924 = vpack.c.b16 %v2108, %v2084
    %v2925 = vpack.c.b16 %v2109, %v2085
    %v2926 = vpack.c.b16 %v2110, %v2086
    %v2927 = vpack.c.b16 %v2111, %v2087
    %v2928 = vpack.c.b16 %v2112, %v2088
    %v2929 = vpack.c.b16 %v2113, %v2089
    %v2930 = vpack.c.b16 %v2114, %v2090
    %v2931 = vpack.c.b16 %v2115, %v2091
    %v2932 = vpack.c.b16 %v2116, %v2092
    %v2933 = vpack.c.b16 %v2117, %v2093
    %v2934 = vpack.c.b16 %v2118, %v2094
    %v2935 = vpack.c.b16 %v2119, %v2095
    %v2936 = vpack.c.b16 %v2120, %v2096
    %v2937 = vpack.c.b16 %v2121, %v2097
    %v2938 = vpack.c.b16 %v2122, %v2098
    %v2939 = vpack.c.b16 %v2123, %v2099
    %v2940 = vpack.c.b16 %v2124, %v2100
    %v2941 = vpack.c.b16 %v2125, %v2101
    %v2942 = vpack.c.b16 %v2126, %v2102
    %v2943 = vpack.c.b16 %v2127, %v2103
    %v2944 = vpack.c.b16 %v2128, %v2104
    %v2945 = vpack.c.b16 %v2129, %v2105
    %v2946 = vpack.c.b16 %v2130, %v2106
    %v2947 = vpack.c.b16 %v2131, %v2107
    %v2948 = vpack.c.b16 %v2156, %v2132
    %v2949 = vpack.c.b16 %v2157, %v2133
    %v2950 = vpack.c.b16 %v2158, %v2134
    %v2951 = vpack.c.b16 %v2159, %v2135
    %v2952 = vpack.c.b16 %v2160, %v2136
    %v2953 = vpack.c.b16 %v2161, %v2137
    %v2954 = vpack.c.b16 %v2162, %v2138
    %v2955 = vpack.c.b16 %v2163, %v2139
    %v2956 = vpack.c.b16 %v2164, %v2140
    %v2957 = vpack.c.b16 %v2165, %v2141
    %v2958 = vpack.c.b16 %v2166, %v2142
    %v2959 = vpack.c.b16 %v2167, %v2143
    %v2960 = vpack.c.b16 %v2168, %v2144
    %v2961 = vpack.c.b16 %v2169, %v2145
    %v2962 = vpack.c.b16 %v2170, %v2146
    %v2963 = vpack.c.b16 %v2171, %v2147
    %v2964 = vpack.c.b16 %v2172, %v2148
    %v2965 = vpack.c.b16 %v2173, %v2149
    %v2966 = vpack.c.b16 %v2174, %v2150
    %v2967 = vpack.c.b16 %v2175, %v2151
    %v2968 = vpack.c.b16 %v2176, %v2152
    %v2969 = vpack.c.b16 %v2177, %v2153
    %v2970 = vpack.c.b16 %v2178, %v2154
    %v2971 = vpack.c.b16 %v2179, %v2155
    %v2972 = vpack.c.b16 %v2204, %v2180
    %v2973 = vpack.c.b16 %v2205, %v2181
    %v2974 = vpack.c.b16 %v2206, %v2182
    %v2975 = vpack.c.b16 %v2207, %v2183
    %v2976 = vpack.c.b16 %v2208, %v2184
    %v2977 = vpack.c.b16 %v2209, %v2185
    %v2978 = vpack.c.b16 %v2210, %v2186
    %v2979 = vpack.c.b16 %v2211, %v2187
    %v2980 = vpack.c.b16 %v2212, %v2188
    %v2981 = vpack.c.b16 %v2213, %v2189
    %v2982 = vpack.c.b16 %v2214, %v2190
    %v2983 = vpack.c.b16 %v2215, %v2191
    %v2984 = vpack.c.b16 %v2216, %v2192
    %v2985 = vpack.c.b16 %v2217, %v2193
    %v2986 = vpack.c.b16 %v2218, %v2194
    %v2987 = vpack.c.b16 %v2219, %v2195
    %v2988 = vpack.c.b16 %v2220, %v2196
    %v2989 = vpack.c.b16 %v2221, %v2197
    %v2990 = vpack.c.b16 %v2222, %v2198
    %v2991 = vpack.c.b16 %v2223, %v2199
    %v2992 = vpack.c.b16 %v2224, %v2200
    %v2993 = vpack.c.b16 %v2225, %v2201
    %v2994 = vpack.c.b16 %v2226, %v2202
    %v2995 = vpack.c.b16 %v2227, %v2203
    %v2996 = vpack.c.b16 %v2252, %v2228
    %v2997 = vpack.c.b16 %v2253, %v2229
    %v2998 = vpack.c.b16 %v2254, %v2230
    %v2999 = vpack.c.b16 %v2255, %v2231
    %v3000 = vpack.c.b16 %v2256, %v2232
    %v3001 = vpack.c.b16 %v2257, %v2233
    %v3002 = vpack.c.b16 %v2258, %v2234
    %v3003 = vpack.c.b16 %v2259, %v2235
    %v3004 = vpack.c.b16 %v2260, %v2236
    %v3005 = vpack.c.b16 %v2261, %v2237
    %v3006 = vpack.c.b16 %v2262, %v2238
    %v3007 = vpack.c.b16 %v2263, %v2239
    %v3008 = vpack.c.b16 %v2264, %v2240
    %v3009 = vpack.c.b16 %v2265, %v2241
    %v3010 = vpack.c.b16 %v2266, %v2242
    %v3011 = vpack.c.b16 %v2267, %v2243
    %v3012 = vpack.c.b16 %v2268, %v2244
    %v3013 = vpack.c.b16 %v2269, %v2245
    %v3014 = vpack.c.b16 %v2270, %v2246
    %v3015 = vpack.c.b16 %v2271, %v2247
    %v3016 = vpack.c.b16 %v2272, %v2248
    %v3017 = vpack.c.b16 %v2273, %v2249
    %v3018 = vpack.c.b16 %v2274, %v2250
    %v3019 = vpack.c.b16 %v2275, %v2251
    %v3020 = vpack.c.b16 %v2300, %v2276
    %v3021 = vpack.c.b16 %v2301, %v2277
    %v3022 = vpack.c.b16 %v2302, %v2278
    %v3023 = vpack.c.b16 %v2303, %v2279
    %v3024 = vpack.c.b16 %v2304, %v2280
    %v3025 = vpack.c.b16 %v2305, %v2281
    %v3026 = vpack.c.b16 %v2306, %v2282
    %v3027 = vpack.c.b16 %v2307, %v2283
    %v3028 = vpack.c.b16 %v2308, %v2284
    %v3029 = vpack.c.b16 %v2309, %v2285
    %v3030 = vpack.c.b16 %v2310, %v2286
    %v3031 = vpack.c.b16 %v2311, %v2287
    %v3032 = vpack.c.b16 %v2312, %v2288
    %v3033 = vpack.c.b16 %v2313, %v2289
    %v3034 = vpack.c.b16 %v2314, %v2290
    %v3035 = vpack.c.b16 %v2315, %v2291
    %v3036 = vpack.c.b16 %v2316, %v2292
    %v3037 = vpack.c.b16 %v2317, %v2293
    %v3038 = vpack.c.b16 %v2318, %v2294
    %v3039 = vpack.c.b16 %v2319, %v2295
    %v3040 = vpack.c.b16 %v2320, %v2296
    %v3041 = vpack.c.b16 %v2321, %v2297
    %v3042 = vpack.c.b16 %v2322, %v2298
    %v3043 = vpack.c.b16 %v2323, %v2299
    %v3044 = vpack.c.b16 %v2348, %v2324
    %v3045 = vpack.c.b16 %v2349, %v2325
    %v3046 = vpack.c.b16 %v2350, %v2326
    %v3047 = vpack.c.b16 %v2351, %v2327
    %v3048 = vpack.c.b16 %v2352, %v2328
    %v3049 = vpack.c.b16 %v2353, %v2329
    %v3050 = vpack.c.b16 %v2354, %v2330
    %v3051 = vpack.c.b16 %v2355, %v2331
    %v3052 = vpack.c.b16 %v2356, %v2332
    %v3053 = vpack.c.b16 %v2357, %v2333
    %v3054 = vpack.c.b16 %v2358, %v2334
    %v3055 = vpack.c.b16 %v2359, %v2335
    %v3056 = vpack.c.b16 %v2360, %v2336
    %v3057 = vpack.c.b16 %v2361, %v2337
    %v3058 = vpack.c.b16 %v2362, %v2338
    %v3059 = vpack.c.b16 %v2363, %v2339
    %v3060 = vpack.c.b16 %v2364, %v2340
    %v3061 = vpack.c.b16 %v2365, %v2341
    %v3062 = vpack.c.b16 %v2366, %v2342
    %v3063 = vpack.c.b16 %v2367, %v2343
    %v3064 = vpack.c.b16 %v2368, %v2344
    %v3065 = vpack.c.b16 %v2369, %v2345
    %v3066 = vpack.c.b16 %v2370, %v2346
    %v3067 = vpack.c.b16 %v2371, %v2347
    %v3068 = vpack.c.b16 %v2396, %v2372
    %v3069 = vpack.c.b16 %v2397, %v2373
    %v3070 = vpack.c.b16 %v2398, %v2374
    %v3071 = vpack.c.b16 %v2399, %v2375
    %v3072 = vpack.c.b16 %v2400, %v2376
    %v3073 = vpack.c.b16 %v2401, %v2377
    %v3074 = vpack.c.b16 %v2402, %v2378
    %v3075 = vpack.c.b16 %v2403, %v2379
    %v3076 = vpack.c.b16 %v2404, %v2380
    %v3077 = vpack.c.b16 %v2405, %v2381
    %v3078 = vpack.c.b16 %v2406, %v2382
    %v3079 = vpack.c.b16 %v2407, %v2383
    %v3080 = vpack.c.b16 %v2408, %v2384
    %v3081 = vpack.c.b16 %v2409, %v2385
    %v3082 = vpack.c.b16 %v2410, %v2386
    %v3083 = vpack.c.b16 %v2411, %v2387
    %v3084 = vpack.c.b16 %v2412, %v2388
    %v3085 = vpack.c.b16 %v2413, %v2389
    %v3086 = vpack.c.b16 %v2414, %v2390
    %v3087 = vpack.c.b16 %v2415, %v2391
    %v3088 = vpack.c.b16 %v2416, %v2392
    %v3089 = vpack.c.b16 %v2417, %v2393
    %v3090 = vpack.c.b16 %v2418, %v2394
    %v3091 = vpack.c.b16 %v2419, %v2395
    %v3092 = vpack.c.b16 %v2444, %v2420
    %v3093 = vpack.c.b16 %v2445, %v2421
    %v3094 = vpack.c.b16 %v2446, %v2422
    %v3095 = vpack.c.b16 %v2447, %v2423
    %v3096 = vpack.c.b16 %v2448, %v2424
    %v3097 = vpack.c.b16 %v2449, %v2425
    %v3098 = vpack.c.b16 %v2450, %v2426
    %v3099 = vpack.c.b16 %v2451, %v2427
    %v3100 = vpack.c.b16 %v2452, %v2428
    %v3101 = vpack.c.b16 %v2453, %v2429
    %v3102 = vpack.c.b16 %v2454, %v2430
    %v3103 = vpack.c.b16 %v2455, %v2431
    %v3104 = vpack.c.b16 %v2456, %v2432
    %v3105 = vpack.c.b16 %v2457, %v2433
    %v3106 = vpack.c.b16 %v2458, %v2434
    %v3107 = vpack.c.b16 %v2459, %v2435
    %v3108 = vpack.c.b16 %v2460, %v2436
    %v3109 = vpack.c.b16 %v2461, %v2437
    %v3110 = vpack.c.b16 %v2462, %v2438
    %v3111 = vpack.c.b16 %v2463, %v2439
    %v3112 = vpack.c.b16 %v2464, %v2440
    %v3113 = vpack.c.b16 %v2465, %v2441
    %v3114 = vpack.c.b16 %v2466, %v2442
    %v3115 = vpack.c.b16 %v2467, %v2443
    %v3116 = vpack.c.b16 %v2492, %v2468
    %v3117 = vpack.c.b16 %v2493, %v2469
    %v3118 = vpack.c.b16 %v2494, %v2470
    %v3119 = vpack.c.b16 %v2495, %v2471
    %v3120 = vpack.c.b16 %v2496, %v2472
    %v3121 = vpack.c.b16 %v2497, %v2473
    %v3122 = vpack.c.b16 %v2498, %v2474
    %v3123 = vpack.c.b16 %v2499, %v2475
    %v3124 = vpack.c.b16 %v2500, %v2476
    %v3125 = vpack.c.b16 %v2501, %v2477
    %v3126 = vpack.c.b16 %v2502, %v2478
    %v3127 = vpack.c.b16 %v2503, %v2479
    %v3128 = vpack.c.b16 %v2504, %v2480
    %v3129 = vpack.c.b16 %v2505, %v2481
    %v3130 = vpack.c.b16 %v2506, %v2482
    %v3131 = vpack.c.b16 %v2507, %v2483
    %v3132 = vpack.c.b16 %v2508, %v2484
    %v3133 = vpack.c.b16 %v2509, %v2485
    %v3134 = vpack.c.b16 %v2510, %v2486
    %v3135 = vpack.c.b16 %v2511, %v2487
    %v3136 = vpack.c.b16 %v2512, %v2488
    %v3137 = vpack.c.b16 %v2513, %v2489
    %v3138 = vpack.c.b16 %v2514, %v2490
    %v3139 = vpack.c.b16 %v2515, %v2491
    %v3140 = vpack.c.b16 %v2540, %v2516
    %v3141 = vpack.c.b16 %v2541, %v2517
    %v3142 = vpack.c.b16 %v2542, %v2518
    %v3143 = vpack.c.b16 %v2543, %v2519
    %v3144 = vpack.c.b16 %v2544, %v2520
    %v3145 = vpack.c.b16 %v2545, %v2521
    %v3146 = vpack.c.b16 %v2546, %v2522
    %v3147 = vpack.c.b16 %v2547, %v2523
    %v3148 = vpack.c.b16 %v2548, %v2524
    %v3149 = vpack.c.b16 %v2549, %v2525
    %v3150 = vpack.c.b16 %v2550, %v2526
    %v3151 = vpack.c.b16 %v2551, %v2527
    %v3152 = vpack.c.b16 %v2552, %v2528
    %v3153 = vpack.c.b16 %v2553, %v2529
    %v3154 = vpack.c.b16 %v2554, %v2530
    %v3155 = vpack.c.b16 %v2555, %v2531
    %v3156 = vpack.c.b16 %v2556, %v2532
    %v3157 = vpack.c.b16 %v2557, %v2533
    %v3158 = vpack.c.b16 %v2558, %v2534
    %v3159 = vpack.c.b16 %v2559, %v2535
    %v3160 = vpack.c.b16 %v2560, %v2536
    %v3161 = vpack.c.b16 %v2561, %v2537
    %v3162 = vpack.c.b16 %v2562, %v2538
    %v3163 = vpack.c.b16 %v2563, %v2539
    %v3164 = vpack.c.b16 %v2588, %v2564
    %v3165 = vpack.c.b16 %v2589, %v2565
    %v3166 = vpack.c.b16 %v2590, %v2566
    %v3167 = vpack.c.b16 %v2591, %v2567
    %v3168 = vpack.c.b16 %v2592, %v2568
    %v3169 = vpack.c.b16 %v2593, %v2569
    %v3170 = vpack.c.b16 %v2594, %v2570
    %v3171 = vpack.c.b16 %v2595, %v2571
    %v3172 = vpack.c.b16 %v2596, %v2572
    %v3173 = vpack.c.b16 %v2597, %v2573
    %v3174 = vpack.c.b16 %v2598, %v2574
    %v3175 = vpack.c.b16 %v2599, %v2575
    %v3176 = vpack.c.b16 %v2600, %v2576
    %v3177 = vpack.c.b16 %v2601, %v2577
    %v3178 = vpack.c.b16 %v2602, %v2578
    %v3179 = vpack.c.b16 %v2603, %v2579
    %v3180 = vpack.c.b16 %v2604, %v2580
    %v3181 = vpack.c.b16 %v2605, %v2581
    %v3182 = vpack.c.b16 %v2606, %v2582
    %v3183 = vpack.c.b16 %v2607, %v2583
    %v3184 = vpack.c.b16 %v2608, %v2584
    %v3185 = vpack.c.b16 %v2609, %v2585
    %v3186 = vpack.c.b16 %v2610, %v2586
    %v3187 = vpack.c.b16 %v2611, %v2587
    %3764 = vmatprep.subr.bf16.mxu0 %v2613
    %3765 = vmatpush1.bf16.msra.mxu0 %v2612
    %3766 = vmatprep.subr.bf16.mxu0 %v2637
    %3767 = vmatpush1.bf16.msra.mxu0 %v2636
    %3768 = vmatprep.subr.bf16.mxu0 %v2661
    %3769 = vmatpush1.bf16.msra.mxu0 %v2660
    %3770 = vmatprep.subr.bf16.mxu0 %v2685
    %3771 = vmatpush1.bf16.msra.mxu0 %v2684
    %3772 = vmatprep.subr.bf16.mxu0 %v2709
    %3773 = vmatpush1.bf16.msra.mxu0 %v2708
    %3774 = vmatprep.subr.bf16.mxu0 %v2733
    %3775 = vmatpush1.bf16.msra.mxu0 %v2732
    %3776 = vmatprep.subr.bf16.mxu0 %v2757
    %3777 = vmatpush1.bf16.msra.mxu0 %v2756
    %3778 = vmatprep.subr.bf16.mxu0 %v2781
    %3779 = vmatpush1.bf16.msra.mxu0 %v2780
    %3780 = vmatprep.subr.bf16.mxu0 %v2805
    %3781 = vmatpush1.bf16.msra.mxu0 %v2804
    %3782 = vmatprep.subr.bf16.mxu0 %v2829
    %3783 = vmatpush1.bf16.msra.mxu0 %v2828
    %3784 = vmatprep.subr.bf16.mxu0 %v2853
    %3785 = vmatpush1.bf16.msra.mxu0 %v2852
    %3786 = vmatprep.subr.bf16.mxu0 %v2877
    %3787 = vmatpush1.bf16.msra.mxu0 %v2876
    %3788 = vmatprep.subr.bf16.mxu0 %v2901
    %3789 = vmatpush1.bf16.msra.mxu0 %v2900
    %3790 = vmatprep.subr.bf16.mxu0 %v2925
    %3791 = vmatpush1.bf16.msra.mxu0 %v2924
    %3792 = vmatprep.subr.bf16.mxu0 %v2949
    %3793 = vmatpush1.bf16.msra.mxu0 %v2948
    %3794 = vmatprep.subr.bf16.mxu0 %v2973
    %3795 = vmatpush1.bf16.msra.mxu0 %v2972
    %3796 = vmatprep.mubr.bf16.mxu0 %v180
    %3797 = vmatmul.mubr.bf16.gmra.mrb[0].mxu0 %v179
    %v3798 = vpop.f32.mrb[0].mxu0
    %v3799 = vadd.f32 %v767, %v3798
    %v3800 = vpop.f32.mrb[0].mxu0
    %v3801 = vadd.f32 %v771, %v3800
    %v3802 = vpop.f32.mrb[0].mxu0
    %v3803 = vadd.f32 %v767, %v3802
    %v3804 = vpop.f32.mrb[0].mxu0
    %v3805 = vadd.f32 %v771, %v3804
    %3806 = vdwg.mxu0
    %3807 = vmatprep.subr.bf16.mxu0 %v2997
    %3808 = vmatpush1.bf16.msra.mxu0 %v2996
    %3809 = vmatprep.subr.bf16.mxu0 %v3021
    %3810 = vmatpush1.bf16.msra.mxu0 %v3020
    %3811 = vmatprep.subr.bf16.mxu0 %v3045
    %3812 = vmatpush1.bf16.msra.mxu0 %v3044
    %3813 = vmatprep.subr.bf16.mxu0 %v3069
    %3814 = vmatpush1.bf16.msra.mxu0 %v3068
    %3815 = vmatprep.subr.bf16.mxu0 %v3093
    %3816 = vmatpush1.bf16.msra.mxu0 %v3092
    %3817 = vmatprep.subr.bf16.mxu0 %v3117
    %3818 = vmatpush1.bf16.msra.mxu0 %v3116
    %3819 = vmatprep.subr.bf16.mxu0 %v3141
    %3820 = vmatpush1.bf16.msra.mxu0 %v3140
    %3821 = vmatprep.subr.bf16.mxu0 %v3165
    %3822 = vmatpush1.bf16.msra.mxu0 %v3164
    %3823 = vmatprep.subr.bf16.mxu0 0
    %3824 = vmatpush1.bf16.msra.mxu0 0
    %3825 = vmatprep.subr.bf16.mxu0 0
    %3826 = vmatpush1.bf16.msra.mxu0 0
    %3827 = vmatprep.subr.bf16.mxu0 0
    %3828 = vmatpush1.bf16.msra.mxu0 0
    %3829 = vmatprep.subr.bf16.mxu0 0
    %3830 = vmatpush1.bf16.msra.mxu0 0
    %3831 = vmatprep.subr.bf16.mxu0 0
    %3832 = vmatpush1.bf16.msra.mxu0 0
    %3833 = vmatprep.subr.bf16.mxu0 0
    %3834 = vmatpush1.bf16.msra.mxu0 0
    %3835 = vmatprep.subr.bf16.mxu0 0
    %3836 = vmatpush1.bf16.msra.mxu0 0
    %3837 = vmatprep.subr.bf16.mxu0 0
    %3838 = vmatpush1.bf16.msra.mxu0 0
    %3839 = vmatprep.mubr.bf16.mxu0 0
    %3840 = vmatmul.mubr.bf16.gmra.mrb[0].mxu0 %v181
    %v3841 = vpop.f32.mrb[0].mxu0
    %v3842 = vadd.f32 %v3799, %v3841
    %v3843 = vpop.f32.mrb[0].mxu0
    %v3844 = vadd.f32 %v3801, %v3843
    %v3845 = vpop.f32.mrb[0].mxu0
    %v3846 = vadd.f32 %v3803, %v3845
    %v3847 = vpop.f32.mrb[0].mxu0
    %v3848 = vadd.f32 %v3805, %v3847
    %3849 = vdwg.mxu0
    %3850 = vmatprep.subr.bf16.mxu0 %v2615
    %3851 = vmatpush1.bf16.msra.mxu0 %v2614
    %3852 = vmatprep.subr.bf16.mxu0 %v2639
    %3853 = vmatpush1.bf16.msra.mxu0 %v2638
    %3854 = vmatprep.subr.bf16.mxu0 %v2663
    %3855 = vmatpush1.bf16.msra.mxu0 %v2662
    %3856 = vmatprep.subr.bf16.mxu0 %v2687
    %3857 = vmatpush1.bf16.msra.mxu0 %v2686
    %3858 = vmatprep.subr.bf16.mxu0 %v2711
    %3859 = vmatpush1.bf16.msra.mxu0 %v2710
    %3860 = vmatprep.subr.bf16.mxu0 %v2735
    %3861 = vmatpush1.bf16.msra.mxu0 %v2734
    %3862 = vmatprep.subr.bf16.mxu0 %v2759
    %3863 = vmatpush1.bf16.msra.mxu0 %v2758
    %3864 = vmatprep.subr.bf16.mxu0 %v2783
    %3865 = vmatpush1.bf16.msra.mxu0 %v2782
    %3866 = vmatprep.subr.bf16.mxu0 %v2807
    %3867 = vmatpush1.bf16.msra.mxu0 %v2806
    %3868 = vmatprep.subr.bf16.mxu0 %v2831
    %3869 = vmatpush1.bf16.msra.mxu0 %v2830
    %3870 = vmatprep.subr.bf16.mxu0 %v2855
    %3871 = vmatpush1.bf16.msra.mxu0 %v2854
    %3872 = vmatprep.subr.bf16.mxu0 %v2879
    %3873 = vmatpush1.bf16.msra.mxu0 %v2878
    %3874 = vmatprep.subr.bf16.mxu0 %v2903
    %3875 = vmatpush1.bf16.msra.mxu0 %v2902
    %3876 = vmatprep.subr.bf16.mxu0 %v2927
    %3877 = vmatpush1.bf16.msra.mxu0 %v2926
    %3878 = vmatprep.subr.bf16.mxu0 %v2951
    %3879 = vmatpush1.bf16.msra.mxu0 %v2950
    %3880 = vmatprep.subr.bf16.mxu0 %v2975
    %3881 = vmatpush1.bf16.msra.mxu0 %v2974
    %3882 = vmatprep.mubr.bf16.mxu0 %v180
    %3883 = vmatmul.mubr.bf16.gmra.mrb[0].mxu0 %v179
    %v3884 = vpop.f32.mrb[0].mxu0
    %v3885 = vadd.f32 %v775, %v3884
    %v3886 = vpop.f32.mrb[0].mxu0
    %v3887 = vadd.f32 %v779, %v3886
    %v3888 = vpop.f32.mrb[0].mxu0
    %v3889 = vadd.f32 %v775, %v3888
    %v3890 = vpop.f32.mrb[0].mxu0
    %v3891 = vadd.f32 %v779, %v3890
    %3892 = vdwg.mxu0
    %3893 = vmatprep.subr.bf16.mxu0 %v2999
    %3894 = vmatpush1.bf16.msra.mxu0 %v2998
    %3895 = vmatprep.subr.bf16.mxu0 %v3023
    %3896 = vmatpush1.bf16.msra.mxu0 %v3022
    %3897 = vmatprep.subr.bf16.mxu0 %v3047
    %3898 = vmatpush1.bf16.msra.mxu0 %v3046
    %3899 = vmatprep.subr.bf16.mxu0 %v3071
    %3900 = vmatpush1.bf16.msra.mxu0 %v3070
    %3901 = vmatprep.subr.bf16.mxu0 %v3095
    %3902 = vmatpush1.bf16.msra.mxu0 %v3094
    %3903 = vmatprep.subr.bf16.mxu0 %v3119
    %3904 = vmatpush1.bf16.msra.mxu0 %v3118
    %3905 = vmatprep.subr.bf16.mxu0 %v3143
    %3906 = vmatpush1.bf16.msra.mxu0 %v3142
    %3907 = vmatprep.subr.bf16.mxu0 %v3167
    %3908 = vmatpush1.bf16.msra.mxu0 %v3166
    %3909 = vmatprep.subr.bf16.mxu0 0
    %3910 = vmatpush1.bf16.msra.mxu0 0
    %3911 = vmatprep.subr.bf16.mxu0 0
    %3912 = vmatpush1.bf16.msra.mxu0 0
    %3913 = vmatprep.subr.bf16.mxu0 0
    %3914 = vmatpush1.bf16.msra.mxu0 0
    %3915 = vmatprep.subr.bf16.mxu0 0
    %3916 = vmatpush1.bf16.msra.mxu0 0
    %3917 = vmatprep.subr.bf16.mxu0 0
    %3918 = vmatpush1.bf16.msra.mxu0 0
    %3919 = vmatprep.subr.bf16.mxu0 0
    %3920 = vmatpush1.bf16.msra.mxu0 0
    %3921 = vmatprep.subr.bf16.mxu0 0
    %3922 = vmatpush1.bf16.msra.mxu0 0
    %3923 = vmatprep.subr.bf16.mxu0 0
    %3924 = vmatpush1.bf16.msra.mxu0 0
    %3925 = vmatprep.mubr.bf16.mxu0 0
    %3926 = vmatmul.mubr.bf16.gmra.mrb[0].mxu0 %v181
    %v3927 = vpop.f32.mrb[0].mxu0
    %v3928 = vadd.f32 %v3885, %v3927
    %v3929 = vpop.f32.mrb[0].mxu0
    %v3930 = vadd.f32 %v3887, %v3929
    %v3931 = vpop.f32.mrb[0].mxu0
    %v3932 = vadd.f32 %v3889, %v3931
    %v3933 = vpop.f32.mrb[0].mxu0
    %v3934 = vadd.f32 %v3891, %v3933
    %3935 = vdwg.mxu0
    %3936 = vmatprep.subr.bf16.mxu0 %v2617
    %3937 = vmatpush1.bf16.msra.mxu0 %v2616
    %3938 = vmatprep.subr.bf16.mxu0 %v2641
    %3939 = vmatpush1.bf16.msra.mxu0 %v2640
    %3940 = vmatprep.subr.bf16.mxu0 %v2665
    %3941 = vmatpush1.bf16.msra.mxu0 %v2664
    %3942 = vmatprep.subr.bf16.mxu0 %v2689
    %3943 = vmatpush1.bf16.msra.mxu0 %v2688
    %3944 = vmatprep.subr.bf16.mxu0 %v2713
    %3945 = vmatpush1.bf16.msra.mxu0 %v2712
    %3946 = vmatprep.subr.bf16.mxu0 %v2737
    %3947 = vmatpush1.bf16.msra.mxu0 %v2736
    %3948 = vmatprep.subr.bf16.mxu0 %v2761
    %3949 = vmatpush1.bf16.msra.mxu0 %v2760
    %3950 = vmatprep.subr.bf16.mxu0 %v2785
    %3951 = vmatpush1.bf16.msra.mxu0 %v2784
    %3952 = vmatprep.subr.bf16.mxu0 %v2809
    %3953 = vmatpush1.bf16.msra.mxu0 %v2808
    %3954 = vmatprep.subr.bf16.mxu0 %v2833
    %3955 = vmatpush1.bf16.msra.mxu0 %v2832
    %3956 = vmatprep.subr.bf16.mxu0 %v2857
    %3957 = vmatpush1.bf16.msra.mxu0 %v2856
    %3958 = vmatprep.subr.bf16.mxu0 %v2881
    %3959 = vmatpush1.bf16.msra.mxu0 %v2880
    %3960 = vmatprep.subr.bf16.mxu0 %v2905
    %3961 = vmatpush1.bf16.msra.mxu0 %v2904
    %3962 = vmatprep.subr.bf16.mxu0 %v2929
    %3963 = vmatpush1.bf16.msra.mxu0 %v2928
    %3964 = vmatprep.subr.bf16.mxu0 %v2953
    %3965 = vmatpush1.bf16.msra.mxu0 %v2952
    %3966 = vmatprep.subr.bf16.mxu0 %v2977
    %3967 = vmatpush1.bf16.msra.mxu0 %v2976
    %3968 = vmatprep.mubr.bf16.mxu0 %v180
    %3969 = vmatmul.mubr.bf16.gmra.mrb[0].mxu0 %v179
    %v3970 = vpop.f32.mrb[0].mxu0
    %v3971 = vadd.f32 %v783, %v3970
    %v3972 = vpop.f32.mrb[0].mxu0
    %v3973 = vadd.f32 %v787, %v3972
    %v3974 = vpop.f32.mrb[0].mxu0
    %v3975 = vadd.f32 %v783, %v3974
    %v3976 = vpop.f32.mrb[0].mxu0
    %v3977 = vadd.f32 %v787, %v3976
    %3978 = vdwg.mxu0
    %3979 = vmatprep.subr.bf16.mxu0 %v3001
    %3980 = vmatpush1.bf16.msra.mxu0 %v3000
    %3981 = vmatprep.subr.bf16.mxu0 %v3025
    %3982 = vmatpush1.bf16.msra.mxu0 %v3024
    %3983 = vmatprep.subr.bf16.mxu0 %v3049
    %3984 = vmatpush1.bf16.msra.mxu0 %v3048
    %3985 = vmatprep.subr.bf16.mxu0 %v3073
    %3986 = vmatpush1.bf16.msra.mxu0 %v3072
    %3987 = vmatprep.subr.bf16.mxu0 %v3097
    %3988 = vmatpush1.bf16.msra.mxu0 %v3096
    %3989 = vmatprep.subr.bf16.mxu0 %v3121
    %3990 = vmatpush1.bf16.msra.mxu0 %v3120
    %3991 = vmatprep.subr.bf16.mxu0 %v3145
    %3992 = vmatpush1.bf16.msra.mxu0 %v3144
    %3993 = vmatprep.subr.bf16.mxu0 %v3169
    %3994 = vmatpush1.bf16.msra.mxu0 %v3168
    %3995 = vmatprep.subr.bf16.mxu0 0
    %3996 = vmatpush1.bf16.msra.mxu0 0
    %3997 = vmatprep.subr.bf16.mxu0 0
    %3998 = vmatpush1.bf16.msra.mxu0 0
    %3999 = vmatprep.subr.bf16.mxu0 0
    %4000 = vmatpush1.bf16.msra.mxu0 0
    %4001 = vmatprep.subr.bf16.mxu0 0
    %4002 = vmatpush1.bf16.msra.mxu0 0
    %4003 = vmatprep.subr.bf16.mxu0 0
    %4004 = vmatpush1.bf16.msra.mxu0 0
    %4005 = vmatprep.subr.bf16.mxu0 0
    %4006 = vmatpush1.bf16.msra.mxu0 0
    %4007 = vmatprep.subr.bf16.mxu0 0
    %4008 = vmatpush1.bf16.msra.mxu0 0
    %4009 = vmatprep.subr.bf16.mxu0 0
    %4010 = vmatpush1.bf16.msra.mxu0 0
    %4011 = vmatprep.mubr.bf16.mxu0 0
    %4012 = vmatmul.mubr.bf16.gmra.mrb[0].mxu0 %v181
    %v4013 = vpop.f32.mrb[0].mxu0
    %v4014 = vadd.f32 %v3971, %v4013
    %v4015 = vpop.f32.mrb[0].mxu0
    %v4016 = vadd.f32 %v3973, %v4015
    %v4017 = vpop.f32.mrb[0].mxu0
    %v4018 = vadd.f32 %v3975, %v4017
    %v4019 = vpop.f32.mrb[0].mxu0
    %v4020 = vadd.f32 %v3977, %v4019
    %4021 = vdwg.mxu0
    %4022 = vmatprep.subr.bf16.mxu0 %v2619
    %4023 = vmatpush1.bf16.msra.mxu0 %v2618
    %4024 = vmatprep.subr.bf16.mxu0 %v2643
    %4025 = vmatpush1.bf16.msra.mxu0 %v2642
    %4026 = vmatprep.subr.bf16.mxu0 %v2667
    %4027 = vmatpush1.bf16.msra.mxu0 %v2666
    %4028 = vmatprep.subr.bf16.mxu0 %v2691
    %4029 = vmatpush1.bf16.msra.mxu0 %v2690
    %4030 = vmatprep.subr.bf16.mxu0 %v2715
    %4031 = vmatpush1.bf16.msra.mxu0 %v2714
    %4032 = vmatprep.subr.bf16.mxu0 %v2739
    %4033 = vmatpush1.bf16.msra.mxu0 %v2738
    %4034 = vmatprep.subr.bf16.mxu0 %v2763
    %4035 = vmatpush1.bf16.msra.mxu0 %v2762
    %4036 = vmatprep.subr.bf16.mxu0 %v2787
    %4037 = vmatpush1.bf16.msra.mxu0 %v2786
    %4038 = vmatprep.subr.bf16.mxu0 %v2811
    %4039 = vmatpush1.bf16.msra.mxu0 %v2810
    %4040 = vmatprep.subr.bf16.mxu0 %v2835
    %4041 = vmatpush1.bf16.msra.mxu0 %v2834
    %4042 = vmatprep.subr.bf16.mxu0 %v2859
    %4043 = vmatpush1.bf16.msra.mxu0 %v2858
    %4044 = vmatprep.subr.bf16.mxu0 %v2883
    %4045 = vmatpush1.bf16.msra.mxu0 %v2882
    %4046 = vmatprep.subr.bf16.mxu0 %v2907
    %4047 = vmatpush1.bf16.msra.mxu0 %v2906
    %4048 = vmatprep.subr.bf16.mxu0 %v2931
    %4049 = vmatpush1.bf16.msra.mxu0 %v2930
    %4050 = vmatprep.subr.bf16.mxu0 %v2955
    %4051 = vmatpush1.bf16.msra.mxu0 %v2954
    %4052 = vmatprep.subr.bf16.mxu0 %v2979
    %4053 = vmatpush1.bf16.msra.mxu0 %v2978
    %4054 = vmatprep.mubr.bf16.mxu0 %v180
    %4055 = vmatmul.mubr.bf16.gmra.mrb[0].mxu0 %v179
    %v4056 = vpop.f32.mrb[0].mxu0
    %v4057 = vadd.f32 %v791, %v4056
    %v4058 = vpop.f32.mrb[0].mxu0
    %v4059 = vadd.f32 %v795, %v4058
    %v4060 = vpop.f32.mrb[0].mxu0
    %v4061 = vadd.f32 %v791, %v4060
    %v4062 = vpop.f32.mrb[0].mxu0
    %v4063 = vadd.f32 %v795, %v4062
    %4064 = vdwg.mxu0
    %4065 = vmatprep.subr.bf16.mxu0 %v3003
    %4066 = vmatpush1.bf16.msra.mxu0 %v3002
    %4067 = vmatprep.subr.bf16.mxu0 %v3027
    %4068 = vmatpush1.bf16.msra.mxu0 %v3026
    %4069 = vmatprep.subr.bf16.mxu0 %v3051
    %4070 = vmatpush1.bf16.msra.mxu0 %v3050
    %4071 = vmatprep.subr.bf16.mxu0 %v3075
    %4072 = vmatpush1.bf16.msra.mxu0 %v3074
    %4073 = vmatprep.subr.bf16.mxu0 %v3099
    %4074 = vmatpush1.bf16.msra.mxu0 %v3098
    %4075 = vmatprep.subr.bf16.mxu0 %v3123
    %4076 = vmatpush1.bf16.msra.mxu0 %v3122
    %4077 = vmatprep.subr.bf16.mxu0 %v3147
    %4078 = vmatpush1.bf16.msra.mxu0 %v3146
    %4079 = vmatprep.subr.bf16.mxu0 %v3171
    %4080 = vmatpush1.bf16.msra.mxu0 %v3170
    %4081 = vmatprep.subr.bf16.mxu0 0
    %4082 = vmatpush1.bf16.msra.mxu0 0
    %4083 = vmatprep.subr.bf16.mxu0 0
    %4084 = vmatpush1.bf16.msra.mxu0 0
    %4085 = vmatprep.subr.bf16.mxu0 0
    %4086 = vmatpush1.bf16.msra.mxu0 0
    %4087 = vmatprep.subr.bf16.mxu0 0
    %4088 = vmatpush1.bf16.msra.mxu0 0
    %4089 = vmatprep.subr.bf16.mxu0 0
    %4090 = vmatpush1.bf16.msra.mxu0 0
    %4091 = vmatprep.subr.bf16.mxu0 0
    %4092 = vmatpush1.bf16.msra.mxu0 0
    %4093 = vmatprep.subr.bf16.mxu0 0
    %4094 = vmatpush1.bf16.msra.mxu0 0
    %4095 = vmatprep.subr.bf16.mxu0 0
    %4096 = vmatpush1.bf16.msra.mxu0 0
    %4097 = vmatprep.mubr.bf16.mxu0 0
    %4098 = vmatmul.mubr.bf16.gmra.mrb[0].mxu0 %v181
    %v4099 = vpop.f32.mrb[0].mxu0
    %v4100 = vadd.f32 %v4057, %v4099
    %v4101 = vpop.f32.mrb[0].mxu0
    %v4102 = vadd.f32 %v4059, %v4101
    %v4103 = vpop.f32.mrb[0].mxu0
    %v4104 = vadd.f32 %v4061, %v4103
    %v4105 = vpop.f32.mrb[0].mxu0
    %v4106 = vadd.f32 %v4063, %v4105
    %4107 = vdwg.mxu0
    %4108 = vmatprep.subr.bf16.mxu0 %v2621
    %4109 = vmatpush1.bf16.msra.mxu0 %v2620
    %4110 = vmatprep.subr.bf16.mxu0 %v2645
    %4111 = vmatpush1.bf16.msra.mxu0 %v2644
    %4112 = vmatprep.subr.bf16.mxu0 %v2669
    %4113 = vmatpush1.bf16.msra.mxu0 %v2668
    %4114 = vmatprep.subr.bf16.mxu0 %v2693
    %4115 = vmatpush1.bf16.msra.mxu0 %v2692
    %4116 = vmatprep.subr.bf16.mxu0 %v2717
    %4117 = vmatpush1.bf16.msra.mxu0 %v2716
    %4118 = vmatprep.subr.bf16.mxu0 %v2741
    %4119 = vmatpush1.bf16.msra.mxu0 %v2740
    %4120 = vmatprep.subr.bf16.mxu0 %v2765
    %4121 = vmatpush1.bf16.msra.mxu0 %v2764
    %4122 = vmatprep.subr.bf16.mxu0 %v2789
    %4123 = vmatpush1.bf16.msra.mxu0 %v2788
    %4124 = vmatprep.subr.bf16.mxu0 %v2813
    %4125 = vmatpush1.bf16.msra.mxu0 %v2812
    %4126 = vmatprep.subr.bf16.mxu0 %v2837
    %4127 = vmatpush1.bf16.msra.mxu0 %v2836
    %4128 = vmatprep.subr.bf16.mxu0 %v2861
    %4129 = vmatpush1.bf16.msra.mxu0 %v2860
    %4130 = vmatprep.subr.bf16.mxu0 %v2885
    %4131 = vmatpush1.bf16.msra.mxu0 %v2884
    %4132 = vmatprep.subr.bf16.mxu0 %v2909
    %4133 = vmatpush1.bf16.msra.mxu0 %v2908
    %4134 = vmatprep.subr.bf16.mxu0 %v2933
    %4135 = vmatpush1.bf16.msra.mxu0 %v2932
    %4136 = vmatprep.subr.bf16.mxu0 %v2957
    %4137 = vmatpush1.bf16.msra.mxu0 %v2956
    %4138 = vmatprep.subr.bf16.mxu0 %v2981
    %4139 = vmatpush1.bf16.msra.mxu0 %v2980
    %4140 = vmatprep.mubr.bf16.mxu0 %v180
    %4141 = vmatmul.mubr.bf16.gmra.mrb[0].mxu0 %v179
    %v4142 = vpop.f32.mrb[0].mxu0
    %v4143 = vadd.f32 %v799, %v4142
    %v4144 = vpop.f32.mrb[0].mxu0
    %v4145 = vadd.f32 %v803, %v4144
    %v4146 = vpop.f32.mrb[0].mxu0
    %v4147 = vadd.f32 %v799, %v4146
    %v4148 = vpop.f32.mrb[0].mxu0
    %v4149 = vadd.f32 %v803, %v4148
    %4150 = vdwg.mxu0
    %4151 = vmatprep.subr.bf16.mxu0 %v3005
    %4152 = vmatpush1.bf16.msra.mxu0 %v3004
    %4153 = vmatprep.subr.bf16.mxu0 %v3029
    %4154 = vmatpush1.bf16.msra.mxu0 %v3028
    %4155 = vmatprep.subr.bf16.mxu0 %v3053
    %4156 = vmatpush1.bf16.msra.mxu0 %v3052
    %4157 = vmatprep.subr.bf16.mxu0 %v3077
    %4158 = vmatpush1.bf16.msra.mxu0 %v3076
    %4159 = vmatprep.subr.bf16.mxu0 %v3101
    %4160 = vmatpush1.bf16.msra.mxu0 %v3100
    %4161 = vmatprep.subr.bf16.mxu0 %v3125
    %4162 = vmatpush1.bf16.msra.mxu0 %v3124
    %4163 = vmatprep.subr.bf16.mxu0 %v3149
    %4164 = vmatpush1.bf16.msra.mxu0 %v3148
    %4165 = vmatprep.subr.bf16.mxu0 %v3173
    %4166 = vmatpush1.bf16.msra.mxu0 %v3172
    %4167 = vmatprep.subr.bf16.mxu0 0
    %4168 = vmatpush1.bf16.msra.mxu0 0
    %4169 = vmatprep.subr.bf16.mxu0 0
    %4170 = vmatpush1.bf16.msra.mxu0 0
    %4171 = vmatprep.subr.bf16.mxu0 0
    %4172 = vmatpush1.bf16.msra.mxu0 0
    %4173 = vmatprep.subr.bf16.mxu0 0
    %4174 = vmatpush1.bf16.msra.mxu0 0
    %4175 = vmatprep.subr.bf16.mxu0 0
    %4176 = vmatpush1.bf16.msra.mxu0 0
    %4177 = vmatprep.subr.bf16.mxu0 0
    %4178 = vmatpush1.bf16.msra.mxu0 0
    %4179 = vmatprep.subr.bf16.mxu0 0
    %4180 = vmatpush1.bf16.msra.mxu0 0
    %4181 = vmatprep.subr.bf16.mxu0 0
    %4182 = vmatpush1.bf16.msra.mxu0 0
    %4183 = vmatprep.mubr.bf16.mxu0 0
    %4184 = vmatmul.mubr.bf16.gmra.mrb[0].mxu0 %v181
    %v4185 = vpop.f32.mrb[0].mxu0
    %v4186 = vadd.f32 %v4143, %v4185
    %v4187 = vpop.f32.mrb[0].mxu0
    %v4188 = vadd.f32 %v4145, %v4187
    %v4189 = vpop.f32.mrb[0].mxu0
    %v4190 = vadd.f32 %v4147, %v4189
    %v4191 = vpop.f32.mrb[0].mxu0
    %v4192 = vadd.f32 %v4149, %v4191
    %4193 = vdwg.mxu0
    %4194 = vmatprep.subr.bf16.mxu0 %v2623
    %4195 = vmatpush1.bf16.msra.mxu0 %v2622
    %4196 = vmatprep.subr.bf16.mxu0 %v2647
    %4197 = vmatpush1.bf16.msra.mxu0 %v2646
    %4198 = vmatprep.subr.bf16.mxu0 %v2671
    %4199 = vmatpush1.bf16.msra.mxu0 %v2670
    %4200 = vmatprep.subr.bf16.mxu0 %v2695
    %4201 = vmatpush1.bf16.msra.mxu0 %v2694
    %4202 = vmatprep.subr.bf16.mxu0 %v2719
    %4203 = vmatpush1.bf16.msra.mxu0 %v2718
    %4204 = vmatprep.subr.bf16.mxu0 %v2743
    %4205 = vmatpush1.bf16.msra.mxu0 %v2742
    %4206 = vmatprep.subr.bf16.mxu0 %v2767
    %4207 = vmatpush1.bf16.msra.mxu0 %v2766
    %4208 = vmatprep.subr.bf16.mxu0 %v2791
    %4209 = vmatpush1.bf16.msra.mxu0 %v2790
    %4210 = vmatprep.subr.bf16.mxu0 %v2815
    %4211 = vmatpush1.bf16.msra.mxu0 %v2814
    %4212 = vmatprep.subr.bf16.mxu0 %v2839
    %4213 = vmatpush1.bf16.msra.mxu0 %v2838
    %4214 = vmatprep.subr.bf16.mxu0 %v2863
    %4215 = vmatpush1.bf16.msra.mxu0 %v2862
    %4216 = vmatprep.subr.bf16.mxu0 %v2887
    %4217 = vmatpush1.bf16.msra.mxu0 %v2886
    %4218 = vmatprep.subr.bf16.mxu0 %v2911
    %4219 = vmatpush1.bf16.msra.mxu0 %v2910
    %4220 = vmatprep.subr.bf16.mxu0 %v2935
    %4221 = vmatpush1.bf16.msra.mxu0 %v2934
    %4222 = vmatprep.subr.bf16.mxu0 %v2959
    %4223 = vmatpush1.bf16.msra.mxu0 %v2958
    %4224 = vmatprep.subr.bf16.mxu0 %v2983
    %4225 = vmatpush1.bf16.msra.mxu0 %v2982
    %4226 = vmatprep.mubr.bf16.mxu0 %v180
    %4227 = vmatmul.mubr.bf16.gmra.mrb[0].mxu0 %v179
    %v4228 = vpop.f32.mrb[0].mxu0
    %v4229 = vadd.f32 %v807, %v4228
    %v4230 = vpop.f32.mrb[0].mxu0
    %v4231 = vadd.f32 %v811, %v4230
    %v4232 = vpop.f32.mrb[0].mxu0
    %v4233 = vadd.f32 %v807, %v4232
    %v4234 = vpop.f32.mrb[0].mxu0
    %v4235 = vadd.f32 %v811, %v4234
    %4236 = vdwg.mxu0
    %4237 = vmatprep.subr.bf16.mxu0 %v3007
    %4238 = vmatpush1.bf16.msra.mxu0 %v3006
    %4239 = vmatprep.subr.bf16.mxu0 %v3031
    %4240 = vmatpush1.bf16.msra.mxu0 %v3030
    %4241 = vmatprep.subr.bf16.mxu0 %v3055
    %4242 = vmatpush1.bf16.msra.mxu0 %v3054
    %4243 = vmatprep.subr.bf16.mxu0 %v3079
    %4244 = vmatpush1.bf16.msra.mxu0 %v3078
    %4245 = vmatprep.subr.bf16.mxu0 %v3103
    %4246 = vmatpush1.bf16.msra.mxu0 %v3102
    %4247 = vmatprep.subr.bf16.mxu0 %v3127
    %4248 = vmatpush1.bf16.msra.mxu0 %v3126
    %4249 = vmatprep.subr.bf16.mxu0 %v3151
    %4250 = vmatpush1.bf16.msra.mxu0 %v3150
    %4251 = vmatprep.subr.bf16.mxu0 %v3175
    %4252 = vmatpush1.bf16.msra.mxu0 %v3174
    %4253 = vmatprep.subr.bf16.mxu0 0
    %4254 = vmatpush1.bf16.msra.mxu0 0
    %4255 = vmatprep.subr.bf16.mxu0 0
    %4256 = vmatpush1.bf16.msra.mxu0 0
    %4257 = vmatprep.subr.bf16.mxu0 0
    %4258 = vmatpush1.bf16.msra.mxu0 0
    %4259 = vmatprep.subr.bf16.mxu0 0
    %4260 = vmatpush1.bf16.msra.mxu0 0
    %4261 = vmatprep.subr.bf16.mxu0 0
    %4262 = vmatpush1.bf16.msra.mxu0 0
    %4263 = vmatprep.subr.bf16.mxu0 0
    %4264 = vmatpush1.bf16.msra.mxu0 0
    %4265 = vmatprep.subr.bf16.mxu0 0
    %4266 = vmatpush1.bf16.msra.mxu0 0
    %4267 = vmatprep.subr.bf16.mxu0 0
    %4268 = vmatpush1.bf16.msra.mxu0 0
    %4269 = vmatprep.mubr.bf16.mxu0 0
    %4270 = vmatmul.mubr.bf16.gmra.mrb[0].mxu0 %v181
    %v4271 = vpop.f32.mrb[0].mxu0
    %v4272 = vadd.f32 %v4229, %v4271
    %v4273 = vpop.f32.mrb[0].mxu0
    %v4274 = vadd.f32 %v4231, %v4273
    %v4275 = vpop.f32.mrb[0].mxu0
    %v4276 = vadd.f32 %v4233, %v4275
    %v4277 = vpop.f32.mrb[0].mxu0
    %v4278 = vadd.f32 %v4235, %v4277
    %4279 = vdwg.mxu0
    %4280 = vmatprep.subr.bf16.mxu0 %v2625
    %4281 = vmatpush1.bf16.msra.mxu0 %v2624
    %4282 = vmatprep.subr.bf16.mxu0 %v2649
    %4283 = vmatpush1.bf16.msra.mxu0 %v2648
    %4284 = vmatprep.subr.bf16.mxu0 %v2673
    %4285 = vmatpush1.bf16.msra.mxu0 %v2672
    %4286 = vmatprep.subr.bf16.mxu0 %v2697
    %4287 = vmatpush1.bf16.msra.mxu0 %v2696
    %4288 = vmatprep.subr.bf16.mxu0 %v2721
    %4289 = vmatpush1.bf16.msra.mxu0 %v2720
    %4290 = vmatprep.subr.bf16.mxu0 %v2745
    %4291 = vmatpush1.bf16.msra.mxu0 %v2744
    %4292 = vmatprep.subr.bf16.mxu0 %v2769
    %4293 = vmatpush1.bf16.msra.mxu0 %v2768
    %4294 = vmatprep.subr.bf16.mxu0 %v2793
    %4295 = vmatpush1.bf16.msra.mxu0 %v2792
    %4296 = vmatprep.subr.bf16.mxu0 %v2817
    %4297 = vmatpush1.bf16.msra.mxu0 %v2816
    %4298 = vmatprep.subr.bf16.mxu0 %v2841
    %4299 = vmatpush1.bf16.msra.mxu0 %v2840
    %4300 = vmatprep.subr.bf16.mxu0 %v2865
    %4301 = vmatpush1.bf16.msra.mxu0 %v2864
    %4302 = vmatprep.subr.bf16.mxu0 %v2889
    %4303 = vmatpush1.bf16.msra.mxu0 %v2888
    %4304 = vmatprep.subr.bf16.mxu0 %v2913
    %4305 = vmatpush1.bf16.msra.mxu0 %v2912
    %4306 = vmatprep.subr.bf16.mxu0 %v2937
    %4307 = vmatpush1.bf16.msra.mxu0 %v2936
    %4308 = vmatprep.subr.bf16.mxu0 %v2961
    %4309 = vmatpush1.bf16.msra.mxu0 %v2960
    %4310 = vmatprep.subr.bf16.mxu0 %v2985
    %4311 = vmatpush1.bf16.msra.mxu0 %v2984
    %4312 = vmatprep.mubr.bf16.mxu0 %v180
    %4313 = vmatmul.mubr.bf16.gmra.mrb[0].mxu0 %v179
    %v4314 = vpop.f32.mrb[0].mxu0
    %v4315 = vadd.f32 %v815, %v4314
    %v4316 = vpop.f32.mrb[0].mxu0
    %v4317 = vadd.f32 %v819, %v4316
    %v4318 = vpop.f32.mrb[0].mxu0
    %v4319 = vadd.f32 %v815, %v4318
    %v4320 = vpop.f32.mrb[0].mxu0
    %v4321 = vadd.f32 %v819, %v4320
    %4322 = vdwg.mxu0
    %4323 = vmatprep.subr.bf16.mxu0 %v3009
    %4324 = vmatpush1.bf16.msra.mxu0 %v3008
    %4325 = vmatprep.subr.bf16.mxu0 %v3033
    %4326 = vmatpush1.bf16.msra.mxu0 %v3032
    %4327 = vmatprep.subr.bf16.mxu0 %v3057
    %4328 = vmatpush1.bf16.msra.mxu0 %v3056
    %4329 = vmatprep.subr.bf16.mxu0 %v3081
    %4330 = vmatpush1.bf16.msra.mxu0 %v3080
    %4331 = vmatprep.subr.bf16.mxu0 %v3105
    %4332 = vmatpush1.bf16.msra.mxu0 %v3104
    %4333 = vmatprep.subr.bf16.mxu0 %v3129
    %4334 = vmatpush1.bf16.msra.mxu0 %v3128
    %4335 = vmatprep.subr.bf16.mxu0 %v3153
    %4336 = vmatpush1.bf16.msra.mxu0 %v3152
    %4337 = vmatprep.subr.bf16.mxu0 %v3177
    %4338 = vmatpush1.bf16.msra.mxu0 %v3176
    %4339 = vmatprep.subr.bf16.mxu0 0
    %4340 = vmatpush1.bf16.msra.mxu0 0
    %4341 = vmatprep.subr.bf16.mxu0 0
    %4342 = vmatpush1.bf16.msra.mxu0 0
    %4343 = vmatprep.subr.bf16.mxu0 0
    %4344 = vmatpush1.bf16.msra.mxu0 0
    %4345 = vmatprep.subr.bf16.mxu0 0
    %4346 = vmatpush1.bf16.msra.mxu0 0
    %4347 = vmatprep.subr.bf16.mxu0 0
    %4348 = vmatpush1.bf16.msra.mxu0 0
    %4349 = vmatprep.subr.bf16.mxu0 0
    %4350 = vmatpush1.bf16.msra.mxu0 0
    %4351 = vmatprep.subr.bf16.mxu0 0
    %4352 = vmatpush1.bf16.msra.mxu0 0
    %4353 = vmatprep.subr.bf16.mxu0 0
    %4354 = vmatpush1.bf16.msra.mxu0 0
    %4355 = vmatprep.mubr.bf16.mxu0 0
    %4356 = vmatmul.mubr.bf16.gmra.mrb[0].mxu0 %v181
    %v4357 = vpop.f32.mrb[0].mxu0
    %v4358 = vadd.f32 %v4315, %v4357
    %v4359 = vpop.f32.mrb[0].mxu0
    %v4360 = vadd.f32 %v4317, %v4359
    %v4361 = vpop.f32.mrb[0].mxu0
    %v4362 = vadd.f32 %v4319, %v4361
    %v4363 = vpop.f32.mrb[0].mxu0
    %v4364 = vadd.f32 %v4321, %v4363
    %4365 = vdwg.mxu0
    %4366 = vmatprep.subr.bf16.mxu0 %v2627
    %4367 = vmatpush1.bf16.msra.mxu0 %v2626
    %4368 = vmatprep.subr.bf16.mxu0 %v2651
    %4369 = vmatpush1.bf16.msra.mxu0 %v2650
    %4370 = vmatprep.subr.bf16.mxu0 %v2675
    %4371 = vmatpush1.bf16.msra.mxu0 %v2674
    %4372 = vmatprep.subr.bf16.mxu0 %v2699
    %4373 = vmatpush1.bf16.msra.mxu0 %v2698
    %4374 = vmatprep.subr.bf16.mxu0 %v2723
    %4375 = vmatpush1.bf16.msra.mxu0 %v2722
    %4376 = vmatprep.subr.bf16.mxu0 %v2747
    %4377 = vmatpush1.bf16.msra.mxu0 %v2746
    %4378 = vmatprep.subr.bf16.mxu0 %v2771
    %4379 = vmatpush1.bf16.msra.mxu0 %v2770
    %4380 = vmatprep.subr.bf16.mxu0 %v2795
    %4381 = vmatpush1.bf16.msra.mxu0 %v2794
    %4382 = vmatprep.subr.bf16.mxu0 %v2819
    %4383 = vmatpush1.bf16.msra.mxu0 %v2818
    %4384 = vmatprep.subr.bf16.mxu0 %v2843
    %4385 = vmatpush1.bf16.msra.mxu0 %v2842
    %4386 = vmatprep.subr.bf16.mxu0 %v2867
    %4387 = vmatpush1.bf16.msra.mxu0 %v2866
    %4388 = vmatprep.subr.bf16.mxu0 %v2891
    %4389 = vmatpush1.bf16.msra.mxu0 %v2890
    %4390 = vmatprep.subr.bf16.mxu0 %v2915
    %4391 = vmatpush1.bf16.msra.mxu0 %v2914
    %4392 = vmatprep.subr.bf16.mxu0 %v2939
    %4393 = vmatpush1.bf16.msra.mxu0 %v2938
    %4394 = vmatprep.subr.bf16.mxu0 %v2963
    %4395 = vmatpush1.bf16.msra.mxu0 %v2962
    %4396 = vmatprep.subr.bf16.mxu0 %v2987
    %4397 = vmatpush1.bf16.msra.mxu0 %v2986
    %4398 = vmatprep.mubr.bf16.mxu0 %v180
    %4399 = vmatmul.mubr.bf16.gmra.mrb[0].mxu0 %v179
    %v4400 = vpop.f32.mrb[0].mxu0
    %v4401 = vadd.f32 %v823, %v4400
    %v4402 = vpop.f32.mrb[0].mxu0
    %v4403 = vadd.f32 %v827, %v4402
    %v4404 = vpop.f32.mrb[0].mxu0
    %v4405 = vadd.f32 %v823, %v4404
    %v4406 = vpop.f32.mrb[0].mxu0
    %v4407 = vadd.f32 %v827, %v4406
    %4408 = vdwg.mxu0
    %4409 = vmatprep.subr.bf16.mxu0 %v3011
    %4410 = vmatpush1.bf16.msra.mxu0 %v3010
    %4411 = vmatprep.subr.bf16.mxu0 %v3035
    %4412 = vmatpush1.bf16.msra.mxu0 %v3034
    %4413 = vmatprep.subr.bf16.mxu0 %v3059
    %4414 = vmatpush1.bf16.msra.mxu0 %v3058
    %4415 = vmatprep.subr.bf16.mxu0 %v3083
    %4416 = vmatpush1.bf16.msra.mxu0 %v3082
    %4417 = vmatprep.subr.bf16.mxu0 %v3107
    %4418 = vmatpush1.bf16.msra.mxu0 %v3106
    %4419 = vmatprep.subr.bf16.mxu0 %v3131
    %4420 = vmatpush1.bf16.msra.mxu0 %v3130
    %4421 = vmatprep.subr.bf16.mxu0 %v3155
    %4422 = vmatpush1.bf16.msra.mxu0 %v3154
    %4423 = vmatprep.subr.bf16.mxu0 %v3179
    %4424 = vmatpush1.bf16.msra.mxu0 %v3178
    %4425 = vmatprep.subr.bf16.mxu0 0
    %4426 = vmatpush1.bf16.msra.mxu0 0
    %4427 = vmatprep.subr.bf16.mxu0 0
    %4428 = vmatpush1.bf16.msra.mxu0 0
    %4429 = vmatprep.subr.bf16.mxu0 0
    %4430 = vmatpush1.bf16.msra.mxu0 0
    %4431 = vmatprep.subr.bf16.mxu0 0
    %4432 = vmatpush1.bf16.msra.mxu0 0
    %4433 = vmatprep.subr.bf16.mxu0 0
    %4434 = vmatpush1.bf16.msra.mxu0 0
    %4435 = vmatprep.subr.bf16.mxu0 0
    %4436 = vmatpush1.bf16.msra.mxu0 0
    %4437 = vmatprep.subr.bf16.mxu0 0
    %4438 = vmatpush1.bf16.msra.mxu0 0
    %4439 = vmatprep.subr.bf16.mxu0 0
    %4440 = vmatpush1.bf16.msra.mxu0 0
    %4441 = vmatprep.mubr.bf16.mxu0 0
    %4442 = vmatmul.mubr.bf16.gmra.mrb[0].mxu0 %v181
    %v4443 = vpop.f32.mrb[0].mxu0
    %v4444 = vadd.f32 %v4401, %v4443
    %v4445 = vpop.f32.mrb[0].mxu0
    %v4446 = vadd.f32 %v4403, %v4445
    %v4447 = vpop.f32.mrb[0].mxu0
    %v4448 = vadd.f32 %v4405, %v4447
    %v4449 = vpop.f32.mrb[0].mxu0
    %v4450 = vadd.f32 %v4407, %v4449
    %4451 = vdwg.mxu0
    %4452 = vmatprep.subr.bf16.mxu0 %v2629
    %4453 = vmatpush1.bf16.msra.mxu0 %v2628
    %4454 = vmatprep.subr.bf16.mxu0 %v2653
    %4455 = vmatpush1.bf16.msra.mxu0 %v2652
    %4456 = vmatprep.subr.bf16.mxu0 %v2677
    %4457 = vmatpush1.bf16.msra.mxu0 %v2676
    %4458 = vmatprep.subr.bf16.mxu0 %v2701
    %4459 = vmatpush1.bf16.msra.mxu0 %v2700
    %4460 = vmatprep.subr.bf16.mxu0 %v2725
    %4461 = vmatpush1.bf16.msra.mxu0 %v2724
    %4462 = vmatprep.subr.bf16.mxu0 %v2749
    %4463 = vmatpush1.bf16.msra.mxu0 %v2748
    %4464 = vmatprep.subr.bf16.mxu0 %v2773
    %4465 = vmatpush1.bf16.msra.mxu0 %v2772
    %4466 = vmatprep.subr.bf16.mxu0 %v2797
    %4467 = vmatpush1.bf16.msra.mxu0 %v2796
    %4468 = vmatprep.subr.bf16.mxu0 %v2821
    %4469 = vmatpush1.bf16.msra.mxu0 %v2820
    %4470 = vmatprep.subr.bf16.mxu0 %v2845
    %4471 = vmatpush1.bf16.msra.mxu0 %v2844
    %4472 = vmatprep.subr.bf16.mxu0 %v2869
    %4473 = vmatpush1.bf16.msra.mxu0 %v2868
    %4474 = vmatprep.subr.bf16.mxu0 %v2893
    %4475 = vmatpush1.bf16.msra.mxu0 %v2892
    %4476 = vmatprep.subr.bf16.mxu0 %v2917
    %4477 = vmatpush1.bf16.msra.mxu0 %v2916
    %4478 = vmatprep.subr.bf16.mxu0 %v2941
    %4479 = vmatpush1.bf16.msra.mxu0 %v2940
    %4480 = vmatprep.subr.bf16.mxu0 %v2965
    %4481 = vmatpush1.bf16.msra.mxu0 %v2964
    %4482 = vmatprep.subr.bf16.mxu0 %v2989
    %4483 = vmatpush1.bf16.msra.mxu0 %v2988
    %4484 = vmatprep.mubr.bf16.mxu0 %v180
    %4485 = vmatmul.mubr.bf16.gmra.mrb[0].mxu0 %v179
    %v4486 = vpop.f32.mrb[0].mxu0
    %v4487 = vadd.f32 %v831, %v4486
    %v4488 = vpop.f32.mrb[0].mxu0
    %v4489 = vadd.f32 %v835, %v4488
    %v4490 = vpop.f32.mrb[0].mxu0
    %v4491 = vadd.f32 %v831, %v4490
    %v4492 = vpop.f32.mrb[0].mxu0
    %v4493 = vadd.f32 %v835, %v4492
    %4494 = vdwg.mxu0
    %4495 = vmatprep.subr.bf16.mxu0 %v3013
    %4496 = vmatpush1.bf16.msra.mxu0 %v3012
    %4497 = vmatprep.subr.bf16.mxu0 %v3037
    %4498 = vmatpush1.bf16.msra.mxu0 %v3036
    %4499 = vmatprep.subr.bf16.mxu0 %v3061
    %4500 = vmatpush1.bf16.msra.mxu0 %v3060
    %4501 = vmatprep.subr.bf16.mxu0 %v3085
    %4502 = vmatpush1.bf16.msra.mxu0 %v3084
    %4503 = vmatprep.subr.bf16.mxu0 %v3109
    %4504 = vmatpush1.bf16.msra.mxu0 %v3108
    %4505 = vmatprep.subr.bf16.mxu0 %v3133
    %4506 = vmatpush1.bf16.msra.mxu0 %v3132
    %4507 = vmatprep.subr.bf16.mxu0 %v3157
    %4508 = vmatpush1.bf16.msra.mxu0 %v3156
    %4509 = vmatprep.subr.bf16.mxu0 %v3181
    %4510 = vmatpush1.bf16.msra.mxu0 %v3180
    %4511 = vmatprep.subr.bf16.mxu0 0
    %4512 = vmatpush1.bf16.msra.mxu0 0
    %4513 = vmatprep.subr.bf16.mxu0 0
    %4514 = vmatpush1.bf16.msra.mxu0 0
    %4515 = vmatprep.subr.bf16.mxu0 0
    %4516 = vmatpush1.bf16.msra.mxu0 0
    %4517 = vmatprep.subr.bf16.mxu0 0
    %4518 = vmatpush1.bf16.msra.mxu0 0
    %4519 = vmatprep.subr.bf16.mxu0 0
    %4520 = vmatpush1.bf16.msra.mxu0 0
    %4521 = vmatprep.subr.bf16.mxu0 0
    %4522 = vmatpush1.bf16.msra.mxu0 0
    %4523 = vmatprep.subr.bf16.mxu0 0
    %4524 = vmatpush1.bf16.msra.mxu0 0
    %4525 = vmatprep.subr.bf16.mxu0 0
    %4526 = vmatpush1.bf16.msra.mxu0 0
    %4527 = vmatprep.mubr.bf16.mxu0 0
    %4528 = vmatmul.mubr.bf16.gmra.mrb[0].mxu0 %v181
    %v4529 = vpop.f32.mrb[0].mxu0
    %v4530 = vadd.f32 %v4487, %v4529
    %v4531 = vpop.f32.mrb[0].mxu0
    %v4532 = vadd.f32 %v4489, %v4531
    %v4533 = vpop.f32.mrb[0].mxu0
    %v4534 = vadd.f32 %v4491, %v4533
    %v4535 = vpop.f32.mrb[0].mxu0
    %v4536 = vadd.f32 %v4493, %v4535
    %4537 = vdwg.mxu0
    %4538 = vmatprep.subr.bf16.mxu0 %v2631
    %4539 = vmatpush1.bf16.msra.mxu0 %v2630
    %4540 = vmatprep.subr.bf16.mxu0 %v2655
    %4541 = vmatpush1.bf16.msra.mxu0 %v2654
    %4542 = vmatprep.subr.bf16.mxu0 %v2679
    %4543 = vmatpush1.bf16.msra.mxu0 %v2678
    %4544 = vmatprep.subr.bf16.mxu0 %v2703
    %4545 = vmatpush1.bf16.msra.mxu0 %v2702
    %4546 = vmatprep.subr.bf16.mxu0 %v2727
    %4547 = vmatpush1.bf16.msra.mxu0 %v2726
    %4548 = vmatprep.subr.bf16.mxu0 %v2751
    %4549 = vmatpush1.bf16.msra.mxu0 %v2750
    %4550 = vmatprep.subr.bf16.mxu0 %v2775
    %4551 = vmatpush1.bf16.msra.mxu0 %v2774
    %4552 = vmatprep.subr.bf16.mxu0 %v2799
    %4553 = vmatpush1.bf16.msra.mxu0 %v2798
    %4554 = vmatprep.subr.bf16.mxu0 %v2823
    %4555 = vmatpush1.bf16.msra.mxu0 %v2822
    %4556 = vmatprep.subr.bf16.mxu0 %v2847
    %4557 = vmatpush1.bf16.msra.mxu0 %v2846
    %4558 = vmatprep.subr.bf16.mxu0 %v2871
    %4559 = vmatpush1.bf16.msra.mxu0 %v2870
    %4560 = vmatprep.subr.bf16.mxu0 %v2895
    %4561 = vmatpush1.bf16.msra.mxu0 %v2894
    %4562 = vmatprep.subr.bf16.mxu0 %v2919
    %4563 = vmatpush1.bf16.msra.mxu0 %v2918
    %4564 = vmatprep.subr.bf16.mxu0 %v2943
    %4565 = vmatpush1.bf16.msra.mxu0 %v2942
    %4566 = vmatprep.subr.bf16.mxu0 %v2967
    %4567 = vmatpush1.bf16.msra.mxu0 %v2966
    %4568 = vmatprep.subr.bf16.mxu0 %v2991
    %4569 = vmatpush1.bf16.msra.mxu0 %v2990
    %4570 = vmatprep.mubr.bf16.mxu0 %v180
    %4571 = vmatmul.mubr.bf16.gmra.mrb[0].mxu0 %v179
    %v4572 = vpop.f32.mrb[0].mxu0
    %v4573 = vadd.f32 %v839, %v4572
    %v4574 = vpop.f32.mrb[0].mxu0
    %v4575 = vadd.f32 %v843, %v4574
    %v4576 = vpop.f32.mrb[0].mxu0
    %v4577 = vadd.f32 %v839, %v4576
    %v4578 = vpop.f32.mrb[0].mxu0
    %v4579 = vadd.f32 %v843, %v4578
    %4580 = vdwg.mxu0
    %4581 = vmatprep.subr.bf16.mxu0 %v3015
    %4582 = vmatpush1.bf16.msra.mxu0 %v3014
    %4583 = vmatprep.subr.bf16.mxu0 %v3039
    %4584 = vmatpush1.bf16.msra.mxu0 %v3038
    %4585 = vmatprep.subr.bf16.mxu0 %v3063
    %4586 = vmatpush1.bf16.msra.mxu0 %v3062
    %4587 = vmatprep.subr.bf16.mxu0 %v3087
    %4588 = vmatpush1.bf16.msra.mxu0 %v3086
    %4589 = vmatprep.subr.bf16.mxu0 %v3111
    %4590 = vmatpush1.bf16.msra.mxu0 %v3110
    %4591 = vmatprep.subr.bf16.mxu0 %v3135
    %4592 = vmatpush1.bf16.msra.mxu0 %v3134
    %4593 = vmatprep.subr.bf16.mxu0 %v3159
    %4594 = vmatpush1.bf16.msra.mxu0 %v3158
    %4595 = vmatprep.subr.bf16.mxu0 %v3183
    %4596 = vmatpush1.bf16.msra.mxu0 %v3182
    %4597 = vmatprep.subr.bf16.mxu0 0
    %4598 = vmatpush1.bf16.msra.mxu0 0
    %4599 = vmatprep.subr.bf16.mxu0 0
    %4600 = vmatpush1.bf16.msra.mxu0 0
    %4601 = vmatprep.subr.bf16.mxu0 0
    %4602 = vmatpush1.bf16.msra.mxu0 0
    %4603 = vmatprep.subr.bf16.mxu0 0
    %4604 = vmatpush1.bf16.msra.mxu0 0
    %4605 = vmatprep.subr.bf16.mxu0 0
    %4606 = vmatpush1.bf16.msra.mxu0 0
    %4607 = vmatprep.subr.bf16.mxu0 0
    %4608 = vmatpush1.bf16.msra.mxu0 0
    %4609 = vmatprep.subr.bf16.mxu0 0
    %4610 = vmatpush1.bf16.msra.mxu0 0
    %4611 = vmatprep.subr.bf16.mxu0 0
    %4612 = vmatpush1.bf16.msra.mxu0 0
    %4613 = vmatprep.mubr.bf16.mxu0 0
    %4614 = vmatmul.mubr.bf16.gmra.mrb[0].mxu0 %v181
    %v4615 = vpop.f32.mrb[0].mxu0
    %v4616 = vadd.f32 %v4573, %v4615
    %v4617 = vpop.f32.mrb[0].mxu0
    %v4618 = vadd.f32 %v4575, %v4617
    %v4619 = vpop.f32.mrb[0].mxu0
    %v4620 = vadd.f32 %v4577, %v4619
    %v4621 = vpop.f32.mrb[0].mxu0
    %v4622 = vadd.f32 %v4579, %v4621
    %4623 = vdwg.mxu0
    %4624 = vmatprep.subr.bf16.mxu0 %v2633
    %4625 = vmatpush1.bf16.msra.mxu0 %v2632
    %4626 = vmatprep.subr.bf16.mxu0 %v2657
    %4627 = vmatpush1.bf16.msra.mxu0 %v2656
    %4628 = vmatprep.subr.bf16.mxu0 %v2681
    %4629 = vmatpush1.bf16.msra.mxu0 %v2680
    %4630 = vmatprep.subr.bf16.mxu0 %v2705
    %4631 = vmatpush1.bf16.msra.mxu0 %v2704
    %4632 = vmatprep.subr.bf16.mxu0 %v2729
    %4633 = vmatpush1.bf16.msra.mxu0 %v2728
    %4634 = vmatprep.subr.bf16.mxu0 %v2753
    %4635 = vmatpush1.bf16.msra.mxu0 %v2752
    %4636 = vmatprep.subr.bf16.mxu0 %v2777
    %4637 = vmatpush1.bf16.msra.mxu0 %v2776
    %4638 = vmatprep.subr.bf16.mxu0 %v2801
    %4639 = vmatpush1.bf16.msra.mxu0 %v2800
    %4640 = vmatprep.subr.bf16.mxu0 %v2825
    %4641 = vmatpush1.bf16.msra.mxu0 %v2824
    %4642 = vmatprep.subr.bf16.mxu0 %v2849
    %4643 = vmatpush1.bf16.msra.mxu0 %v2848
    %4644 = vmatprep.subr.bf16.mxu0 %v2873
    %4645 = vmatpush1.bf16.msra.mxu0 %v2872
    %4646 = vmatprep.subr.bf16.mxu0 %v2897
    %4647 = vmatpush1.bf16.msra.mxu0 %v2896
    %4648 = vmatprep.subr.bf16.mxu0 %v2921
    %4649 = vmatpush1.bf16.msra.mxu0 %v2920
    %4650 = vmatprep.subr.bf16.mxu0 %v2945
    %4651 = vmatpush1.bf16.msra.mxu0 %v2944
    %4652 = vmatprep.subr.bf16.mxu0 %v2969
    %4653 = vmatpush1.bf16.msra.mxu0 %v2968
    %4654 = vmatprep.subr.bf16.mxu0 %v2993
    %4655 = vmatpush1.bf16.msra.mxu0 %v2992
    %4656 = vmatprep.mubr.bf16.mxu0 %v180
    %4657 = vmatmul.mubr.bf16.gmra.mrb[0].mxu0 %v179
    %v4658 = vpop.f32.mrb[0].mxu0
    %v4659 = vadd.f32 %v847, %v4658
    %v4660 = vpop.f32.mrb[0].mxu0
    %v4661 = vadd.f32 %v851, %v4660
    %v4662 = vpop.f32.mrb[0].mxu0
    %v4663 = vadd.f32 %v847, %v4662
    %v4664 = vpop.f32.mrb[0].mxu0
    %v4665 = vadd.f32 %v851, %v4664
    %4666 = vdwg.mxu0
    %4667 = vmatprep.subr.bf16.mxu0 %v3017
    %4668 = vmatpush1.bf16.msra.mxu0 %v3016
    %4669 = vmatprep.subr.bf16.mxu0 %v3041
    %4670 = vmatpush1.bf16.msra.mxu0 %v3040
    %4671 = vmatprep.subr.bf16.mxu0 %v3065
    %4672 = vmatpush1.bf16.msra.mxu0 %v3064
    %4673 = vmatprep.subr.bf16.mxu0 %v3089
    %4674 = vmatpush1.bf16.msra.mxu0 %v3088
    %4675 = vmatprep.subr.bf16.mxu0 %v3113
    %4676 = vmatpush1.bf16.msra.mxu0 %v3112
    %4677 = vmatprep.subr.bf16.mxu0 %v3137
    %4678 = vmatpush1.bf16.msra.mxu0 %v3136
    %4679 = vmatprep.subr.bf16.mxu0 %v3161
    %4680 = vmatpush1.bf16.msra.mxu0 %v3160
    %4681 = vmatprep.subr.bf16.mxu0 %v3185
    %4682 = vmatpush1.bf16.msra.mxu0 %v3184
    %4683 = vmatprep.subr.bf16.mxu0 0
    %4684 = vmatpush1.bf16.msra.mxu0 0
    %4685 = vmatprep.subr.bf16.mxu0 0
    %4686 = vmatpush1.bf16.msra.mxu0 0
    %4687 = vmatprep.subr.bf16.mxu0 0
    %4688 = vmatpush1.bf16.msra.mxu0 0
    %4689 = vmatprep.subr.bf16.mxu0 0
    %4690 = vmatpush1.bf16.msra.mxu0 0
    %4691 = vmatprep.subr.bf16.mxu0 0
    %4692 = vmatpush1.bf16.msra.mxu0 0
    %4693 = vmatprep.subr.bf16.mxu0 0
    %4694 = vmatpush1.bf16.msra.mxu0 0
    %4695 = vmatprep.subr.bf16.mxu0 0
    %4696 = vmatpush1.bf16.msra.mxu0 0
    %4697 = vmatprep.subr.bf16.mxu0 0
    %4698 = vmatpush1.bf16.msra.mxu0 0
    %4699 = vmatprep.mubr.bf16.mxu0 0
    %4700 = vmatmul.mubr.bf16.gmra.mrb[0].mxu0 %v181
    %v4701 = vpop.f32.mrb[0].mxu0
    %v4702 = vadd.f32 %v4659, %v4701
    %v4703 = vpop.f32.mrb[0].mxu0
    %v4704 = vadd.f32 %v4661, %v4703
    %v4705 = vpop.f32.mrb[0].mxu0
    %v4706 = vadd.f32 %v4663, %v4705
    %v4707 = vpop.f32.mrb[0].mxu0
    %v4708 = vadd.f32 %v4665, %v4707
    %4709 = vdwg.mxu0
    %4710 = vmatprep.subr.bf16.mxu0 %v2635
    %4711 = vmatpush1.bf16.msra.mxu0 %v2634
    %4712 = vmatprep.subr.bf16.mxu0 %v2659
    %4713 = vmatpush1.bf16.msra.mxu0 %v2658
    %4714 = vmatprep.subr.bf16.mxu0 %v2683
    %4715 = vmatpush1.bf16.msra.mxu0 %v2682
    %4716 = vmatprep.subr.bf16.mxu0 %v2707
    %4717 = vmatpush1.bf16.msra.mxu0 %v2706
    %4718 = vmatprep.subr.bf16.mxu0 %v2731
    %4719 = vmatpush1.bf16.msra.mxu0 %v2730
    %4720 = vmatprep.subr.bf16.mxu0 %v2755
    %4721 = vmatpush1.bf16.msra.mxu0 %v2754
    %4722 = vmatprep.subr.bf16.mxu0 %v2779
    %4723 = vmatpush1.bf16.msra.mxu0 %v2778
    %4724 = vmatprep.subr.bf16.mxu0 %v2803
    %4725 = vmatpush1.bf16.msra.mxu0 %v2802
    %4726 = vmatprep.subr.bf16.mxu0 %v2827
    %4727 = vmatpush1.bf16.msra.mxu0 %v2826
    %4728 = vmatprep.subr.bf16.mxu0 %v2851
    %4729 = vmatpush1.bf16.msra.mxu0 %v2850
    %4730 = vmatprep.subr.bf16.mxu0 %v2875
    %4731 = vmatpush1.bf16.msra.mxu0 %v2874
    %4732 = vmatprep.subr.bf16.mxu0 %v2899
    %4733 = vmatpush1.bf16.msra.mxu0 %v2898
    %4734 = vmatprep.subr.bf16.mxu0 %v2923
    %4735 = vmatpush1.bf16.msra.mxu0 %v2922
    %4736 = vmatprep.subr.bf16.mxu0 %v2947
    %4737 = vmatpush1.bf16.msra.mxu0 %v2946
    %4738 = vmatprep.subr.bf16.mxu0 %v2971
    %4739 = vmatpush1.bf16.msra.mxu0 %v2970
    %4740 = vmatprep.subr.bf16.mxu0 %v2995
    %4741 = vmatpush1.bf16.msra.mxu0 %v2994
    %4742 = vmatprep.mubr.bf16.mxu0 %v180
    %4743 = vmatmul.mubr.bf16.gmra.mrb[0].mxu0 %v179
    %v4744 = vpop.f32.mrb[0].mxu0
    %v4745 = vadd.f32 %v855, %v4744
    %v4746 = vpop.f32.mrb[0].mxu0
    %v4747 = vadd.f32 %v859, %v4746
    %v4748 = vpop.f32.mrb[0].mxu0
    %v4749 = vadd.f32 %v855, %v4748
    %v4750 = vpop.f32.mrb[0].mxu0
    %v4751 = vadd.f32 %v859, %v4750
    %4752 = vdwg.mxu0
    %4753 = vmatprep.subr.bf16.mxu0 %v3019
    %4754 = vmatpush1.bf16.msra.mxu0 %v3018
    %4755 = vmatprep.subr.bf16.mxu0 %v3043
    %4756 = vmatpush1.bf16.msra.mxu0 %v3042
    %4757 = vmatprep.subr.bf16.mxu0 %v3067
    %4758 = vmatpush1.bf16.msra.mxu0 %v3066
    %4759 = vmatprep.subr.bf16.mxu0 %v3091
    %4760 = vmatpush1.bf16.msra.mxu0 %v3090
    %4761 = vmatprep.subr.bf16.mxu0 %v3115
    %4762 = vmatpush1.bf16.msra.mxu0 %v3114
    %4763 = vmatprep.subr.bf16.mxu0 %v3139
    %4764 = vmatpush1.bf16.msra.mxu0 %v3138
    %4765 = vmatprep.subr.bf16.mxu0 %v3163
    %4766 = vmatpush1.bf16.msra.mxu0 %v3162
    %4767 = vmatprep.subr.bf16.mxu0 %v3187
    %4768 = vmatpush1.bf16.msra.mxu0 %v3186
    %4769 = vmatprep.subr.bf16.mxu0 0
    %4770 = vmatpush1.bf16.msra.mxu0 0
    %4771 = vmatprep.subr.bf16.mxu0 0
    %4772 = vmatpush1.bf16.msra.mxu0 0
    %4773 = vmatprep.subr.bf16.mxu0 0
    %4774 = vmatpush1.bf16.msra.mxu0 0
    %4775 = vmatprep.subr.bf16.mxu0 0
    %4776 = vmatpush1.bf16.msra.mxu0 0
    %4777 = vmatprep.subr.bf16.mxu0 0
    %4778 = vmatpush1.bf16.msra.mxu0 0
    %4779 = vmatprep.subr.bf16.mxu0 0
    %4780 = vmatpush1.bf16.msra.mxu0 0
    %4781 = vmatprep.subr.bf16.mxu0 0
    %4782 = vmatpush1.bf16.msra.mxu0 0
    %4783 = vmatprep.subr.bf16.mxu0 0
    %4784 = vmatpush1.bf16.msra.mxu0 0
    %4785 = vmatprep.mubr.bf16.mxu0 0
    %4786 = vmatmul.mubr.bf16.gmra.mrb[0].mxu0 %v181
    %v4787 = vpop.f32.mrb[0].mxu0
    %v4788 = vadd.f32 %v4745, %v4787
    %v4789 = vpop.f32.mrb[0].mxu0
    %v4790 = vadd.f32 %v4747, %v4789
    %v4791 = vpop.f32.mrb[0].mxu0
    %v4792 = vadd.f32 %v4749, %v4791
    %v4793 = vpop.f32.mrb[0].mxu0
    %v4794 = vadd.f32 %v4751, %v4793
    %4795 = vdwg.mxu0
    %v4796 = vpack.c.bf16 %v3846, %v3842
    %v4797 = vpack.c.bf16 %v3848, %v3844
    %v4798 = vpack.c.bf16 %v3932, %v3928
    %v4799 = vpack.c.bf16 %v3934, %v3930
    %v4800 = vpack.c.bf16 %v4018, %v4014
    %v4801 = vpack.c.bf16 %v4020, %v4016
    %v4802 = vpack.c.bf16 %v4104, %v4100
    %v4803 = vpack.c.bf16 %v4106, %v4102
    %v4804 = vpack.c.bf16 %v4190, %v4186
    %v4805 = vpack.c.bf16 %v4192, %v4188
    %v4806 = vpack.c.bf16 %v4276, %v4272
    %v4807 = vpack.c.bf16 %v4278, %v4274
    %v4808 = vpack.c.bf16 %v4362, %v4358
    %v4809 = vpack.c.bf16 %v4364, %v4360
    %v4810 = vpack.c.bf16 %v4448, %v4444
    %v4811 = vpack.c.bf16 %v4450, %v4446
    %v4812 = vpack.c.bf16 %v4534, %v4530
    %v4813 = vpack.c.bf16 %v4536, %v4532
    %v4814 = vpack.c.bf16 %v4620, %v4616
    %v4815 = vpack.c.bf16 %v4622, %v4618
    %v4816 = vpack.c.bf16 %v4706, %v4702
    %v4817 = vpack.c.bf16 %v4708, %v4704
    %v4818 = vpack.c.bf16 %v4792, %v4788
    %v4819 = vpack.c.bf16 %v4794, %v4790
    %v4844 = vunpack.c.l.b16 %v4796
    %v4845 = vunpack.c.l.b16 %v4797
    %v4846 = vunpack.c.l.b16 %v4798
    %v4847 = vunpack.c.l.b16 %v4799
    %v4848 = vunpack.c.l.b16 %v4800
    %v4849 = vunpack.c.l.b16 %v4801
    %v4850 = vunpack.c.l.b16 %v4802
    %v4851 = vunpack.c.l.b16 %v4803
    %v4852 = vunpack.c.l.b16 %v4804
    %v4853 = vunpack.c.l.b16 %v4805
    %v4854 = vunpack.c.l.b16 %v4806
    %v4855 = vunpack.c.l.b16 %v4807
    %v4856 = vunpack.c.l.b16 %v4808
    %v4857 = vunpack.c.l.b16 %v4809
    %v4858 = vunpack.c.l.b16 %v4810
    %v4859 = vunpack.c.l.b16 %v4811
    %v4860 = vunpack.c.l.b16 %v4812
    %v4861 = vunpack.c.l.b16 %v4813
    %v4862 = vunpack.c.l.b16 %v4814
    %v4863 = vunpack.c.l.b16 %v4815
    %v4864 = vunpack.c.l.b16 %v4816
    %v4865 = vunpack.c.l.b16 %v4817
    %v4866 = vunpack.c.l.b16 %v4818
    %v4867 = vunpack.c.l.b16 %v4819
    %v4868 = vunpack.c.h.b16 %v4796
    %v4869 = vunpack.c.h.b16 %v4797
    %v4870 = vunpack.c.h.b16 %v4798
    %v4871 = vunpack.c.h.b16 %v4799
    %v4872 = vunpack.c.h.b16 %v4800
    %v4873 = vunpack.c.h.b16 %v4801
    %v4874 = vunpack.c.h.b16 %v4802
    %v4875 = vunpack.c.h.b16 %v4803
    %v4876 = vunpack.c.h.b16 %v4804
    %v4877 = vunpack.c.h.b16 %v4805
    %v4878 = vunpack.c.h.b16 %v4806
    %v4879 = vunpack.c.h.b16 %v4807
    %v4880 = vunpack.c.h.b16 %v4808
    %v4881 = vunpack.c.h.b16 %v4809
    %v4882 = vunpack.c.h.b16 %v4810
    %v4883 = vunpack.c.h.b16 %v4811
    %v4884 = vunpack.c.h.b16 %v4812
    %v4885 = vunpack.c.h.b16 %v4813
    %v4886 = vunpack.c.h.b16 %v4814
    %v4887 = vunpack.c.h.b16 %v4815
    %v4888 = vunpack.c.h.b16 %v4816
    %v4889 = vunpack.c.h.b16 %v4817
    %v4890 = vunpack.c.h.b16 %v4818
    %v4891 = vunpack.c.h.b16 %v4819
    %v4892 = vpack.c.b16 %v4845, %v4844
    %v4893 = vpack.c.b16 %v4847, %v4846
    %v4894 = vpack.c.b16 %v4849, %v4848
    %v4895 = vpack.c.b16 %v4851, %v4850
    %v4896 = vpack.c.b16 %v4853, %v4852
    %v4897 = vpack.c.b16 %v4855, %v4854
    %v4898 = vpack.c.b16 %v4857, %v4856
    %v4899 = vpack.c.b16 %v4859, %v4858
    %v4900 = vpack.c.b16 %v4861, %v4860
    %v4901 = vpack.c.b16 %v4863, %v4862
    %v4902 = vpack.c.b16 %v4865, %v4864
    %v4903 = vpack.c.b16 %v4867, %v4866
    %v4904 = vpack.c.b16 %v4869, %v4868
    %v4905 = vpack.c.b16 %v4871, %v4870
    %v4906 = vpack.c.b16 %v4873, %v4872
    %v4907 = vpack.c.b16 %v4875, %v4874
    %v4908 = vpack.c.b16 %v4877, %v4876
    %v4909 = vpack.c.b16 %v4879, %v4878
    %v4910 = vpack.c.b16 %v4881, %v4880
    %v4911 = vpack.c.b16 %v4883, %v4882
    %v4912 = vpack.c.b16 %v4885, %v4884
    %v4913 = vpack.c.b16 %v4887, %v4886
    %v4914 = vpack.c.b16 %v4889, %v4888
    %v4915 = vpack.c.b16 %v4891, %v4890
    %4940 = vst [vmem:[#allocation11] sm:$0xff] %v4892
    %4941 = vst [vmem:[#allocation11 + $0x8] sm:$0xff] %v4893
    %4942 = vst [vmem:[#allocation11 + $0x10] sm:$0xff] %v4894
    %4943 = vst [vmem:[#allocation11 + $0x18] sm:$0xff] %v4895
    %4944 = vst [vmem:[#allocation11 + $0x20] sm:$0xff] %v4896
    %4945 = vst [vmem:[#allocation11 + $0x28] sm:$0xff] %v4897
    %4946 = vst [vmem:[#allocation11 + $0x30] sm:$0xff] %v4898
    %4947 = vst [vmem:[#allocation11 + $0x38] sm:$0xff] %v4899
    %4948 = vst [vmem:[#allocation11 + $0x40] sm:$0xff] %v4900
    %4949 = vst [vmem:[#allocation11 + $0x48] sm:$0xff] %v4901
    %4950 = vst [vmem:[#allocation11 + $0x50] sm:$0xff] %v4902
    %4951 = vst [vmem:[#allocation11 + $0x58] sm:$0xff] %v4903
    %4952 = vst [vmem:[#allocation11 + $0x60] sm:$0xff] %v4904
    %4953 = vst [vmem:[#allocation11 + $0x68] sm:$0xff] %v4905
    %4954 = vst [vmem:[#allocation11 + $0x70] sm:$0xff] %v4906
    %4955 = vst [vmem:[#allocation11 + $0x78] sm:$0xff] %v4907
    %4956 = vst [vmem:[#allocation11 + $0x80] sm:$0xff] %v4908
    %4957 = vst [vmem:[#allocation11 + $0x88] sm:$0xff] %v4909
    %4958 = vst [vmem:[#allocation11 + $0x90] sm:$0xff] %v4910
    %4959 = vst [vmem:[#allocation11 + $0x98] sm:$0xff] %v4911
    %4960 = vst [vmem:[#allocation11 + $0xa0] sm:$0xff] %v4912
    %4961 = vst [vmem:[#allocation11 + $0xa8] sm:$0xff] %v4913
    %4962 = vst [vmem:[#allocation11 + $0xb0] sm:$0xff] %v4914
    %4963 = vst [vmem:[#allocation11 + $0xb8] sm:$0xff] %v4915
    // Predicated region
    $region42: #{tpu_custom_call.1} parent=1 // pred_check
      _
    $region43: #{tpu_custom_call.1} parent=1 // pred_check_branch
      %4965 = sbr.rel (0) target = $region45
    $region44: #{tpu_custom_call.1} parent=1 // pred_region
      %s4967 = ssub.s32 3072, 3072
      %4968 = vsyncadd [#allocation4], %s4967
      %s4969 = sshll.u32 [#allocation11], 4
      %s4970 = int_to_ptr.vmem [resolvable:$true] %s4969
      %4975 = dma.vmem_to_hbm [thread:$0]  %s4970, 3072, %s5, [#allocation4], 1536, 1536, 96
    $region45: #{tpu_custom_call.1} parent=1 // pred_fallthru
      _
    // Predicated region
    $region46: #{tpu_custom_call.1} parent=1 // pred_check
      _
    $region47: #{tpu_custom_call.1} parent=1 // pred_check_branch
      %4977 = sbr.rel (0) target = $region49
    $region48: #{tpu_custom_call.1} parent=1 // pred_region
      %4978 = dma.done [#allocation4], 3072
    $region49: #{tpu_custom_call.1} parent=1 // pred_fallthru
      _
    %4979 = vsyncpa [#allocation3], 1
    %4980 = vsyncpa [#allocation6], 1
    %4981 = vsyncpa [#allocation9], 1
    %4982 = vsyncpa [#allocation4], 1

</llo_original>
